<compile_context>
chip_gen: v7x
topology: tpu7x:2x2x1
jax: 0.10.0
libtpu: 0.0.40
codegen_flags: <defaults>
</compile_context>

<pallas_src>
import jax
import jax.numpy as jnp
from jax import lax
from jax.experimental import pallas as pl
from jax.experimental.pallas import tpu as pltpu

LOG2 = 0.6931471805599453  # ln(2)


def _softplus(x):
    # numerically stable softplus; the -ln(2) shift of shifted_softplus is
    # handled outside (folded into biases / the final store).
    return jnp.maximum(x, 0.0) + jnp.log(1.0 + jnp.exp(-jnp.abs(x)))


def _shifted_softplus(x):
    return _softplus(x) - LOG2


def dipole_interaction_kernel(mu_ref, fij_ref, dij_ref, vij_ref, rcut_ref,
                              idxi_ref, idxj_ref,
                              w1_ref, b1_ref, w2_ref, b2_ref,
                              wt_ref, bt_ref, out_ref):
    N, F = out_ref.shape
    P = fij_ref.shape[0]

    # --- one-hot neighbor maps built on-chip: MXU gather / scatter-add -------
    gather_j = (idxj_ref[...] ==
                lax.broadcasted_iota(jnp.int32, (P, N), 1)).astype(jnp.float32)
    scatter_i = (idxi_ref[...] ==
                 lax.broadcasted_iota(jnp.int32, (N, P), 0)).astype(jnp.float32)

    # --- per-pair scalar columns (P, 1) ---------------------------------------
    d = dij_ref[...]
    d2 = d * d
    d5 = d2 * d2 * d
    inv_d5 = pl.reciprocal(d5, approx=True)          # EUP slot, not VALU divide
    inv_d5 = inv_d5 * (2.0 - d5 * inv_d5)            # one Newton step -> ~f32
    inv_d3 = d2 * inv_d5                             # 1 / d^3
    inv_d5_3 = 3.0 * inv_d5
    rcut = rcut_ref[...]

    # hoisted (P,1) -> (P,F) lane-broadcasts, reused below (no implicit CSE)
    vb0 = jnp.broadcast_to(vij_ref[0], (P, F))
    vb1 = jnp.broadcast_to(vij_ref[1], (P, F))
    vb2 = jnp.broadcast_to(vij_ref[2], (P, F))

    # --- filter network: Dense(R->F, ssp) ; Dense(F->F) -----------------------
    # (-ln2 of the hidden activation is folded into b2 in the wrapper)
    h = _softplus(jnp.dot(fij_ref[...], w1_ref[...],
                          preferred_element_type=jnp.float32) + b1_ref[...])
    wij = (jnp.dot(h, w2_ref[...],
                   preferred_element_type=jnp.float32) + b2_ref[...]) * rcut

    s2 = wij * inv_d3            # Wij * d^2 / d^5
    s5 = wij * inv_d5_3          # 3 * Wij / d^5

    # --- gather mu[idx_j] for all 3 spatial dims in ONE wide MXU call ---------
    mu = mu_ref[...]                                                  # (N, 3F)
    muj = jnp.dot(gather_j, mu, preferred_element_type=jnp.float32)   # (P, 3F)
    muj0 = muj[:, 0 * F:1 * F]
    muj1 = muj[:, 1 * F:2 * F]
    muj2 = muj[:, 2 * F:3 * F]

    # --- dipole-dipole interaction tensor (factored elementwise chain) --------
    vdotmu = vb0 * muj0 + vb1 * muj1 + vb2 * muj2
    vdm = vdotmu * s5
    t_wide = jnp.concatenate([muj0 * s2 - vb0 * vdm,
                              muj1 * s2 - vb1 * vdm,
                              muj2 * s2 - vb2 * vdm], axis=-1)        # (P, 3F)

    # --- scatter_add over atom i in ONE wide MXU call --------------------------
    ti = jnp.dot(scatter_i, t_wide, preferred_element_type=jnp.float32)  # (N,3F)

    # --- mu . tensor_i contraction: unrolled 3-term VPU MAC -------------------
    dq_pre = (mu[:, 0 * F:1 * F] * ti[:, 0 * F:1 * F]
              + mu[:, 1 * F:2 * F] * ti[:, 1 * F:2 * F]
              + mu[:, 2 * F:3 * F] * ti[:, 2 * F:3 * F])              # (N, F)

    # --- per-field transform Dense + shifted softplus -------------------------
    z = jnp.dot(dq_pre, wt_ref[...],
                preferred_element_type=jnp.float32) + bt_ref[...]
    out_ref[...] = _softplus(z) - LOG2       # single dense (N, F) store


@jax.jit
def dipole_interaction(mu_stack, f_ij, d_ij, v_ij, rcut_ij, idx_i, idx_j,
                       w1, b1, w2, b2, wt, bt):
    """mu_stack: (K, N, 3, F)  ->  dq: (N, 1, F). Weights are (in x out)."""
    K, N, _, F = mu_stack.shape
    P, R = f_ij.shape

    # Layout plumbing: lane-wide mu (K, N, 3F); sublane-dense per-pair scalar
    # columns; lane/sublane-dense index rows; -ln2 folded into layer-2 bias.
    mu_wide = mu_stack.reshape(K, N, 3 * F).astype(jnp.float32)
    d_col = d_ij.reshape(P, 1).astype(jnp.float32)
    rc_col = rcut_ij.reshape(P, 1).astype(jnp.float32)
    v_cols = jnp.transpose(v_ij, (1, 0)).reshape(3, P, 1).astype(jnp.float32)
    idx_i_row = idx_i.reshape(1, P).astype(jnp.int32)
    idx_j_col = idx_j.reshape(P, 1).astype(jnp.int32)
    b2_eff = b2 - LOG2 * jnp.sum(w2, axis=1, keepdims=True)         # (K, 1, F)

    def k_spec(*dims):                      # per-field operand: squeeze leading K
        n = len(dims)
        def imap(k):
            return (k,) + (0,) * n
        return pl.BlockSpec((None,) + tuple(dims), imap)

    def shared_spec(*dims):                 # field-invariant operand
        n = len(dims)
        def imap(k):
            return (0,) * n
        return pl.BlockSpec(tuple(dims), imap)

    flops = (2 * K * (P * R * F + P * F * F + 2 * P * N * 3 * F + N * F * F)
             + K * (25 * P * F + 10 * N * F))
    transcendentals = 2 * K * (P * F + N * F)
    bytes_accessed = 4 * (mu_wide.size + f_ij.size + d_col.size + v_cols.size
                          + rc_col.size + idx_i_row.size + idx_j_col.size
                          + w1.size + b1.size + w2.size + b2_eff.size
                          + wt.size + bt.size + K * N * F)

    out_knf = pl.pallas_call(
        dipole_interaction_kernel,
        out_shape=jax.ShapeDtypeStruct((K, N, F), jnp.float32),
        grid=(K,),
        in_specs=[
            k_spec(N, 3 * F),            # mu (per field)
            shared_spec(P, R),           # f_ij
            shared_spec(P, 1),           # d_ij
            shared_spec(3, P, 1),        # v_ij components
            shared_spec(P, 1),           # rcut_ij
            shared_spec(1, P),           # idx_i
            shared_spec(P, 1),           # idx_j
            k_spec(R, F),                # w1
            k_spec(1, F),                # b1
            k_spec(F, F),                # w2
            k_spec(1, F),                # b2 (with -ln2 fold)
            k_spec(F, F),                # wt
            k_spec(1, F),                # bt
        ],
        out_specs=k_spec(N, F),
        compiler_params=pltpu.CompilerParams(
            dimension_semantics=("parallel",)),
        cost_estimate=pl.CostEstimate(flops=flops,
                                      transcendentals=transcendentals,
                                      bytes_accessed=bytes_accessed),
    )(mu_wide, f_ij.astype(jnp.float32), d_col, v_cols, rc_col,
      idx_i_row, idx_j_col, w1, b1, w2, b2_eff, wt, bt)

    # tiny cross-field reduction + keepdim axis restored outside the kernel
    return jnp.sum(out_knf, axis=0).reshape(N, 1, F)


def reference(mu_stack, f_ij, d_ij, v_ij, rcut_ij, idx_i, idx_j,
              w1, b1, w2, b2, wt, bt):
    """Pure-JAX reference mirroring the PyTorch forward exactly."""
    K, N, _, F = mu_stack.shape
    hi = jax.lax.Precision.HIGHEST
    dq = jnp.zeros((N, 1, F), jnp.float32)
    for k in range(K):
        h = _shifted_softplus(jnp.einsum("pr,rf->pf", f_ij, w1[k], precision=hi)
                              + b1[k])
        wij = (jnp.einsum("pf,fo->po", h, w2[k], precision=hi) + b2[k]) \
            * rcut_ij[:, None]
        wij = wij[:, None, :]                                   # (P, 1, F)
        mu_k = mu_stack[k]                                      # (N, 3, F)
        mu_ij = mu_k[idx_j]                                     # (P, 3, F)
        t_ij = (mu_ij * (d_ij[:, None, None] ** 2)
                - 3.0 * v_ij[:, :, None]
                * jnp.sum(v_ij[:, :, None] * mu_ij, axis=1, keepdims=True))
        t_ij = t_ij * wij / (d_ij[:, None, None] ** 5)
        t_i = jax.ops.segment_sum(t_ij, idx_i, num_segments=N)  # (N, 3, F)
        dq_i = jnp.sum(mu_k * t_i, axis=1, keepdims=True)       # (N, 1, F)
        dq_i = _shifted_softplus(
            jnp.einsum("nif,fo->nio", dq_i, wt[k], precision=hi) + bt[k])
        dq = dq + dq_i
    return dq


if __name__ == "__main__":
    K = 2        # external fields, e.g. ["electric", "magnetic"]
    N = 64       # n_atoms (only q.shape[0] is used by the module -> static here)
    F = 128      # n_atom_basis
    R = 32       # n_rbf
    NBR = 4      # neighbors per atom
    P = N * NBR  # neighbor pairs

    key = jax.random.PRNGKey(0)
    keys = jax.random.split(key, 10)

    mu_stack = jax.random.normal(keys[0], (K, N, 3, F), jnp.float32)
    f_ij = jax.random.normal(keys[1], (P, R), jnp.float32)

    # deterministic neighbor list: atom i paired with the next NBR atoms (mod N)
    idx_i = jnp.repeat(jnp.arange(N, dtype=jnp.int32), NBR)
    idx_j = (idx_i + jnp.tile(jnp.arange(1, NBR + 1, dtype=jnp.int32), N)) % N

    # direction vectors with controlled norms so d_ij = |v_ij| in [1, 2)
    v_dir = jax.random.normal(keys[2], (P, 3), jnp.float32)
    v_dir = v_dir / jnp.linalg.norm(v_dir, axis=1, keepdims=True)
    d_ij = 1.0 + jax.random.uniform(keys[3], (P,), jnp.float32)
    v_ij = v_dir * d_ij[:, None]
    rcut_ij = jax.random.uniform(keys[4], (P,), jnp.float32)

    # per-field parameters (in x out layout): filter network + transform Dense.
    # NOTE: schnetpack initializes the filter's 2nd Dense weight with zeros_;
    # small random weights are used here so that code path is actually exercised.
    w1 = jax.random.normal(keys[5], (K, R, F), jnp.float32) / jnp.sqrt(R)
    b1 = 0.1 * jax.random.normal(keys[6], (K, 1, F), jnp.float32)
    w2 = jax.random.normal(keys[7], (K, F, F), jnp.float32) / jnp.sqrt(F)
    b2 = 0.1 * jax.random.normal(keys[8], (K, 1, F), jnp.float32)
    wt = 0.5 * jax.random.normal(keys[9], (K, F, F), jnp.float32) / jnp.sqrt(F)
    bt = jnp.zeros((K, 1, F), jnp.float32)

    out = dipole_interaction(mu_stack, f_ij, d_ij, v_ij, rcut_ij, idx_i, idx_j,
                             w1, b1, w2, b2, wt, bt)
    out = jax.block_until_ready(out)

    ref = reference(mu_stack, f_ij, d_ij, v_ij, rcut_ij, idx_i, idx_j,
                    w1, b1, w2, b2, wt, bt)
    assert out.shape == (N, 1, F)
    assert jnp.allclose(out, ref, atol=1e-3, rtol=1e-3), \
        float(jnp.max(jnp.abs(out - ref)))

    print("KERNEL_OK")
</pallas_src>

<mosaic_0001>
module attributes {stable_mosaic.version = 11 : i64} {
  func.func @dipole_interaction_kernel(%arg0: i32, %arg1: memref<1x64x384xf32, #tpu.memory_space<vmem>>, %arg2: memref<256x32xf32, #tpu.memory_space<vmem>>, %arg3: memref<256x1xf32, #tpu.memory_space<vmem>>, %arg4: memref<3x256x1xf32, #tpu.memory_space<vmem>>, %arg5: memref<256x1xf32, #tpu.memory_space<vmem>>, %arg6: memref<1x256xi32, #tpu.memory_space<vmem>>, %arg7: memref<256x1xi32, #tpu.memory_space<vmem>>, %arg8: memref<1x32x128xf32, #tpu.memory_space<vmem>>, %arg9: memref<1x1x128xf32, #tpu.memory_space<vmem>>, %arg10: memref<1x128x128xf32, #tpu.memory_space<vmem>>, %arg11: memref<1x1x128xf32, #tpu.memory_space<vmem>>, %arg12: memref<1x128x128xf32, #tpu.memory_space<vmem>>, %arg13: memref<1x1x128xf32, #tpu.memory_space<vmem>>, %arg14: memref<1x64x128xf32, #tpu.memory_space<vmem>>) attributes {dimension_semantics = [#tpu.dimension_semantics<parallel>], iteration_bounds = array<i64: 2>, scalar_prefetch = 0 : i64, scratch_operands = 0 : i64, tpu.core_type = #tpu.core_type<tc>, window_params = [{transform_indices = @transform_0, window_bounds = array<i64: 1, 64, 384>}, {pipeline_mode = #tpu.pipeline_mode<synchronous>, transform_indices = @transform_1, window_bounds = array<i64: 256, 32>}, {pipeline_mode = #tpu.pipeline_mode<synchronous>, transform_indices = @transform_2, window_bounds = array<i64: 256, 1>}, {pipeline_mode = #tpu.pipeline_mode<synchronous>, transform_indices = @transform_3, window_bounds = array<i64: 3, 256, 1>}, {pipeline_mode = #tpu.pipeline_mode<synchronous>, transform_indices = @transform_4, window_bounds = array<i64: 256, 1>}, {pipeline_mode = #tpu.pipeline_mode<synchronous>, transform_indices = @transform_5, window_bounds = array<i64: 1, 256>}, {pipeline_mode = #tpu.pipeline_mode<synchronous>, transform_indices = @transform_6, window_bounds = array<i64: 256, 1>}, {transform_indices = @transform_7, window_bounds = array<i64: 1, 32, 128>}, {transform_indices = @transform_8, window_bounds = array<i64: 1, 1, 128>}, {transform_indices = @transform_9, window_bounds = array<i64: 1, 128, 128>}, {transform_indices = @transform_10, window_bounds = array<i64: 1, 1, 128>}, {transform_indices = @transform_11, window_bounds = array<i64: 1, 128, 128>}, {transform_indices = @transform_12, window_bounds = array<i64: 1, 1, 128>}, {transform_indices = @transform_13, window_bounds = array<i64: 1, 64, 128>}]} {
    %c0 = arith.constant 0 : index
    %c0_0 = arith.constant 0 : index
    %0 = vector.load %arg7[%c0, %c0_0] : memref<256x1xi32, #tpu.memory_space<vmem>>, vector<256x1xi32>
    %1 = tpu.iota {dimensions = array<i32: 1>} : vector<256x64xi32>
    %2 = vector.broadcast %0 : vector<256x1xi32> to vector<256x64xi32>
    %3 = arith.cmpi eq, %2, %1 : vector<256x64xi32>
    %4 = arith.extui %3 : vector<256x64xi1> to vector<256x64xi32>
    %5 = arith.sitofp %4 : vector<256x64xi32> to vector<256x64xf32>
    %c0_1 = arith.constant 0 : index
    %c0_2 = arith.constant 0 : index
    %6 = vector.load %arg6[%c0_1, %c0_2] : memref<1x256xi32, #tpu.memory_space<vmem>>, vector<1x256xi32>
    %7 = tpu.iota {dimensions = array<i32: 0>} : vector<64x256xi32>
    %8 = vector.broadcast %6 : vector<1x256xi32> to vector<64x256xi32>
    %9 = arith.cmpi eq, %8, %7 : vector<64x256xi32>
    %10 = arith.extui %9 : vector<64x256xi1> to vector<64x256xi32>
    %11 = arith.sitofp %10 : vector<64x256xi32> to vector<64x256xf32>
    %c0_3 = arith.constant 0 : index
    %c0_4 = arith.constant 0 : index
    %12 = vector.load %arg3[%c0_3, %c0_4] : memref<256x1xf32, #tpu.memory_space<vmem>>, vector<256x1xf32>
    %13 = arith.mulf %12, %12 : vector<256x1xf32>
    %14 = arith.mulf %13, %13 : vector<256x1xf32>
    %15 = arith.mulf %14, %12 : vector<256x1xf32>
    %16 = tpu.reciprocal %15 {approx = true} : vector<256x1xf32> -> vector<256x1xf32>
    %17 = arith.mulf %15, %16 : vector<256x1xf32>
    %cst = arith.constant 2.000000e+00 : f32
    %18 = vector.broadcast %cst : f32 to vector<256x1xf32>
    %19 = arith.subf %18, %17 : vector<256x1xf32>
    %20 = arith.mulf %16, %19 : vector<256x1xf32>
    %21 = arith.mulf %13, %20 : vector<256x1xf32>
    %cst_5 = arith.constant 3.000000e+00 : f32
    %22 = vector.broadcast %cst_5 : f32 to vector<256x1xf32>
    %23 = arith.mulf %22, %20 : vector<256x1xf32>
    %c0_6 = arith.constant 0 : index
    %c0_7 = arith.constant 0 : index
    %24 = vector.load %arg5[%c0_6, %c0_7] : memref<256x1xf32, #tpu.memory_space<vmem>>, vector<256x1xf32>
    %c0_8 = arith.constant 0 : index
    %c0_9 = arith.constant 0 : index
    %c0_10 = arith.constant 0 : index
    %25 = vector.load %arg4[%c0_8, %c0_9, %c0_10] : memref<3x256x1xf32, #tpu.memory_space<vmem>>, vector<1x256x1xf32>
    %26 = vector.shape_cast %25 : vector<1x256x1xf32> to vector<256x1xf32>
    %27 = vector.shape_cast %26 : vector<256x1xf32> to vector<256x1xf32>
    %28 = vector.broadcast %27 : vector<256x1xf32> to vector<256x128xf32>
    %c1 = arith.constant 1 : index
    %c0_11 = arith.constant 0 : index
    %c0_12 = arith.constant 0 : index
    %29 = vector.load %arg4[%c1, %c0_11, %c0_12] : memref<3x256x1xf32, #tpu.memory_space<vmem>>, vector<1x256x1xf32>
    %30 = vector.shape_cast %29 : vector<1x256x1xf32> to vector<256x1xf32>
    %31 = vector.shape_cast %30 : vector<256x1xf32> to vector<256x1xf32>
    %32 = vector.broadcast %31 : vector<256x1xf32> to vector<256x128xf32>
    %c2 = arith.constant 2 : index
    %c0_13 = arith.constant 0 : index
    %c0_14 = arith.constant 0 : index
    %33 = vector.load %arg4[%c2, %c0_13, %c0_14] : memref<3x256x1xf32, #tpu.memory_space<vmem>>, vector<1x256x1xf32>
    %34 = vector.shape_cast %33 : vector<1x256x1xf32> to vector<256x1xf32>
    %35 = vector.shape_cast %34 : vector<256x1xf32> to vector<256x1xf32>
    %36 = vector.broadcast %35 : vector<256x1xf32> to vector<256x128xf32>
    %c0_15 = arith.constant 0 : index
    %c0_16 = arith.constant 0 : index
    %37 = vector.load %arg2[%c0_15, %c0_16] : memref<256x32xf32, #tpu.memory_space<vmem>>, vector<256x32xf32>
    %c0_17 = arith.constant 0 : index
    %c0_18 = arith.constant 0 : index
    %c0_19 = arith.constant 0 : index
    %38 = vector.load %arg8[%c0_17, %c0_18, %c0_19] : memref<1x32x128xf32, #tpu.memory_space<vmem>>, vector<1x32x128xf32>
    %39 = vector.shape_cast %38 : vector<1x32x128xf32> to vector<32x128xf32>
    %cst_20 = arith.constant dense<0.000000e+00> : vector<256x128xf32>
    %40 = tpu.matmul %37, %39, %cst_20 {dimension_numbers = #tpu.dot_dimension_numbers<[1], [0], [0], [1], [0, 0, 1, 1], [], []>} : vector<256x32xf32>, vector<32x128xf32>, vector<256x128xf32> -> vector<256x128xf32>
    %c0_21 = arith.constant 0 : index
    %c0_22 = arith.constant 0 : index
    %c0_23 = arith.constant 0 : index
    %41 = vector.load %arg9[%c0_21, %c0_22, %c0_23] : memref<1x1x128xf32, #tpu.memory_space<vmem>>, vector<1x1x128xf32>
    %42 = vector.shape_cast %41 : vector<1x1x128xf32> to vector<1x128xf32>
    %43 = vector.broadcast %42 : vector<1x128xf32> to vector<256x128xf32>
    %44 = arith.addf %40, %43 : vector<256x128xf32>
    %cst_24 = arith.constant 0.000000e+00 : f32
    %45 = vector.broadcast %cst_24 : f32 to vector<256x128xf32>
    %46 = arith.maximumf %44, %45 : vector<256x128xf32>
    %47 = math.absf %44 : vector<256x128xf32>
    %cst_25 = arith.constant 0.000000e+00 : f32
    %48 = vector.broadcast %cst_25 : f32 to vector<256x128xf32>
    %49 = arith.subf %48, %47 : vector<256x128xf32>
    %50 = math.exp %49 : vector<256x128xf32>
    %cst_26 = arith.constant 1.000000e+00 : f32
    %51 = vector.broadcast %cst_26 : f32 to vector<256x128xf32>
    %52 = arith.addf %51, %50 : vector<256x128xf32>
    %53 = math.log %52 : vector<256x128xf32>
    %54 = arith.addf %46, %53 : vector<256x128xf32>
    %c0_27 = arith.constant 0 : index
    %c0_28 = arith.constant 0 : index
    %c0_29 = arith.constant 0 : index
    %55 = vector.load %arg10[%c0_27, %c0_28, %c0_29] : memref<1x128x128xf32, #tpu.memory_space<vmem>>, vector<1x128x128xf32>
    %56 = vector.shape_cast %55 : vector<1x128x128xf32> to vector<128x128xf32>
    %cst_30 = arith.constant dense<0.000000e+00> : vector<256x128xf32>
    %57 = tpu.matmul %54, %56, %cst_30 {dimension_numbers = #tpu.dot_dimension_numbers<[1], [0], [0], [1], [0, 0, 1, 1], [], []>} : vector<256x128xf32>, vector<128x128xf32>, vector<256x128xf32> -> vector<256x128xf32>
    %c0_31 = arith.constant 0 : index
    %c0_32 = arith.constant 0 : index
    %c0_33 = arith.constant 0 : index
    %58 = vector.load %arg11[%c0_31, %c0_32, %c0_33] : memref<1x1x128xf32, #tpu.memory_space<vmem>>, vector<1x1x128xf32>
    %59 = vector.shape_cast %58 : vector<1x1x128xf32> to vector<1x128xf32>
    %60 = vector.broadcast %59 : vector<1x128xf32> to vector<256x128xf32>
    %61 = arith.addf %57, %60 : vector<256x128xf32>
    %62 = vector.broadcast %24 : vector<256x1xf32> to vector<256x128xf32>
    %63 = arith.mulf %61, %62 : vector<256x128xf32>
    %64 = vector.broadcast %21 : vector<256x1xf32> to vector<256x128xf32>
    %65 = arith.mulf %63, %64 : vector<256x128xf32>
    %66 = vector.broadcast %23 : vector<256x1xf32> to vector<256x128xf32>
    %67 = arith.mulf %63, %66 : vector<256x128xf32>
    %c0_34 = arith.constant 0 : index
    %c0_35 = arith.constant 0 : index
    %c0_36 = arith.constant 0 : index
    %68 = vector.load %arg1[%c0_34, %c0_35, %c0_36] : memref<1x64x384xf32, #tpu.memory_space<vmem>>, vector<1x64x384xf32>
    %69 = vector.shape_cast %68 : vector<1x64x384xf32> to vector<64x384xf32>
    %cst_37 = arith.constant dense<0.000000e+00> : vector<256x384xf32>
    %70 = tpu.matmul %5, %69, %cst_37 {dimension_numbers = #tpu.dot_dimension_numbers<[1], [0], [0], [1], [0, 0, 1, 1], [], []>} : vector<256x64xf32>, vector<64x384xf32>, vector<256x384xf32> -> vector<256x384xf32>
    %71 = vector.extract_strided_slice %70 {offsets = [0, 0], sizes = [256, 128], strides = [1, 1]} : vector<256x384xf32> to vector<256x128xf32>
    %72 = vector.extract_strided_slice %70 {offsets = [0, 128], sizes = [256, 128], strides = [1, 1]} : vector<256x384xf32> to vector<256x128xf32>
    %73 = vector.extract_strided_slice %70 {offsets = [0, 256], sizes = [256, 128], strides = [1, 1]} : vector<256x384xf32> to vector<256x128xf32>
    %74 = arith.mulf %28, %71 : vector<256x128xf32>
    %75 = arith.mulf %32, %72 : vector<256x128xf32>
    %76 = arith.addf %74, %75 : vector<256x128xf32>
    %77 = arith.mulf %36, %73 : vector<256x128xf32>
    %78 = arith.addf %76, %77 : vector<256x128xf32>
    %79 = arith.mulf %78, %67 : vector<256x128xf32>
    %80 = arith.mulf %71, %65 : vector<256x128xf32>
    %81 = arith.mulf %28, %79 : vector<256x128xf32>
    %82 = arith.subf %80, %81 : vector<256x128xf32>
    %83 = arith.mulf %72, %65 : vector<256x128xf32>
    %84 = arith.mulf %32, %79 : vector<256x128xf32>
    %85 = arith.subf %83, %84 : vector<256x128xf32>
    %86 = arith.mulf %73, %65 : vector<256x128xf32>
    %87 = arith.mulf %36, %79 : vector<256x128xf32>
    %88 = arith.subf %86, %87 : vector<256x128xf32>
    %89 = tpu.concatenate %82, %85, %88 in 1 : vector<256x128xf32>, vector<256x128xf32>, vector<256x128xf32> -> vector<256x384xf32>
    %cst_38 = arith.constant dense<0.000000e+00> : vector<64x384xf32>
    %90 = tpu.matmul %11, %89, %cst_38 {dimension_numbers = #tpu.dot_dimension_numbers<[1], [0], [0], [1], [0, 0, 1, 1], [], []>} : vector<64x256xf32>, vector<256x384xf32>, vector<64x384xf32> -> vector<64x384xf32>
    %91 = vector.extract_strided_slice %69 {offsets = [0, 0], sizes = [64, 128], strides = [1, 1]} : vector<64x384xf32> to vector<64x128xf32>
    %92 = vector.extract_strided_slice %90 {offsets = [0, 0], sizes = [64, 128], strides = [1, 1]} : vector<64x384xf32> to vector<64x128xf32>
    %93 = arith.mulf %91, %92 : vector<64x128xf32>
    %94 = vector.extract_strided_slice %69 {offsets = [0, 128], sizes = [64, 128], strides = [1, 1]} : vector<64x384xf32> to vector<64x128xf32>
    %95 = vector.extract_strided_slice %90 {offsets = [0, 128], sizes = [64, 128], strides = [1, 1]} : vector<64x384xf32> to vector<64x128xf32>
    %96 = arith.mulf %94, %95 : vector<64x128xf32>
    %97 = arith.addf %93, %96 : vector<64x128xf32>
    %98 = vector.extract_strided_slice %69 {offsets = [0, 256], sizes = [64, 128], strides = [1, 1]} : vector<64x384xf32> to vector<64x128xf32>
    %99 = vector.extract_strided_slice %90 {offsets = [0, 256], sizes = [64, 128], strides = [1, 1]} : vector<64x384xf32> to vector<64x128xf32>
    %100 = arith.mulf %98, %99 : vector<64x128xf32>
    %101 = arith.addf %97, %100 : vector<64x128xf32>
    %c0_39 = arith.constant 0 : index
    %c0_40 = arith.constant 0 : index
    %c0_41 = arith.constant 0 : index
    %102 = vector.load %arg12[%c0_39, %c0_40, %c0_41] : memref<1x128x128xf32, #tpu.memory_space<vmem>>, vector<1x128x128xf32>
    %103 = vector.shape_cast %102 : vector<1x128x128xf32> to vector<128x128xf32>
    %cst_42 = arith.constant dense<0.000000e+00> : vector<64x128xf32>
    %104 = tpu.matmul %101, %103, %cst_42 {dimension_numbers = #tpu.dot_dimension_numbers<[1], [0], [0], [1], [0, 0, 1, 1], [], []>} : vector<64x128xf32>, vector<128x128xf32>, vector<64x128xf32> -> vector<64x128xf32>
    %c0_43 = arith.constant 0 : index
    %c0_44 = arith.constant 0 : index
    %c0_45 = arith.constant 0 : index
    %105 = vector.load %arg13[%c0_43, %c0_44, %c0_45] : memref<1x1x128xf32, #tpu.memory_space<vmem>>, vector<1x1x128xf32>
    %106 = vector.shape_cast %105 : vector<1x1x128xf32> to vector<1x128xf32>
    %107 = vector.broadcast %106 : vector<1x128xf32> to vector<64x128xf32>
    %108 = arith.addf %104, %107 : vector<64x128xf32>
    %cst_46 = arith.constant 0.000000e+00 : f32
    %109 = vector.broadcast %cst_46 : f32 to vector<64x128xf32>
    %110 = arith.maximumf %108, %109 : vector<64x128xf32>
    %111 = math.absf %108 : vector<64x128xf32>
    %cst_47 = arith.constant 0.000000e+00 : f32
    %112 = vector.broadcast %cst_47 : f32 to vector<64x128xf32>
    %113 = arith.subf %112, %111 : vector<64x128xf32>
    %114 = math.exp %113 : vector<64x128xf32>
    %cst_48 = arith.constant 1.000000e+00 : f32
    %115 = vector.broadcast %cst_48 : f32 to vector<64x128xf32>
    %116 = arith.addf %115, %114 : vector<64x128xf32>
    %117 = math.log %116 : vector<64x128xf32>
    %118 = arith.addf %110, %117 : vector<64x128xf32>
    %cst_49 = arith.constant 0.693147182 : f32
    %119 = vector.broadcast %cst_49 : f32 to vector<64x128xf32>
    %120 = arith.subf %118, %119 : vector<64x128xf32>
    %c0_50 = arith.constant 0 : index
    %c0_51 = arith.constant 0 : index
    %c0_52 = arith.constant 0 : index
    %121 = vector.load %arg14[%c0_50, %c0_51, %c0_52] : memref<1x64x128xf32, #tpu.memory_space<vmem>>, vector<1x64x128xf32>
    %122 = vector.shape_cast %121 : vector<1x64x128xf32> to vector<64x128xf32>
    %123 = vector.shape_cast %120 : vector<64x128xf32> to vector<1x64x128xf32>
    tpu.vector_store %arg14[%c0_50, %c0_51, %c0_52], %123 {strides = array<i32>} : memref<1x64x128xf32, #tpu.memory_space<vmem>>, vector<1x64x128xf32>,
    return
  }
  func.func @transform_0(%arg0: i32) -> (i32, i32, i32) {
    %c0_i32 = arith.constant 0 : i32
    %c0_i32_0 = arith.constant 0 : i32
    %c0_i32_1 = arith.constant 0 : i32
    return %arg0, %c0_i32, %c0_i32_0 : i32, i32, i32
  }
  func.func @transform_1(%arg0: i32) -> (i32, i32) {
    %c0_i32 = arith.constant 0 : i32
    %c0_i32_0 = arith.constant 0 : i32
    %c0_i32_1 = arith.constant 0 : i32
    return %c0_i32, %c0_i32_0 : i32, i32
  }
  func.func @transform_2(%arg0: i32) -> (i32, i32) {
    %c0_i32 = arith.constant 0 : i32
    %c0_i32_0 = arith.constant 0 : i32
    %c0_i32_1 = arith.constant 0 : i32
    return %c0_i32, %c0_i32_0 : i32, i32
  }
  func.func @transform_3(%arg0: i32) -> (i32, i32, i32) {
    %c0_i32 = arith.constant 0 : i32
    %c0_i32_0 = arith.constant 0 : i32
    %c0_i32_1 = arith.constant 0 : i32
    %c0_i32_2 = arith.constant 0 : i32
    return %c0_i32, %c0_i32_0, %c0_i32_1 : i32, i32, i32
  }
  func.func @transform_4(%arg0: i32) -> (i32, i32) {
    %c0_i32 = arith.constant 0 : i32
    %c0_i32_0 = arith.constant 0 : i32
    %c0_i32_1 = arith.constant 0 : i32
    return %c0_i32, %c0_i32_0 : i32, i32
  }
  func.func @transform_5(%arg0: i32) -> (i32, i32) {
    %c0_i32 = arith.constant 0 : i32
    %c0_i32_0 = arith.constant 0 : i32
    %c0_i32_1 = arith.constant 0 : i32
    return %c0_i32, %c0_i32_0 : i32, i32
  }
  func.func @transform_6(%arg0: i32) -> (i32, i32) {
    %c0_i32 = arith.constant 0 : i32
    %c0_i32_0 = arith.constant 0 : i32
    %c0_i32_1 = arith.constant 0 : i32
    return %c0_i32, %c0_i32_0 : i32, i32
  }
  func.func @transform_7(%arg0: i32) -> (i32, i32, i32) {
    %c0_i32 = arith.constant 0 : i32
    %c0_i32_0 = arith.constant 0 : i32
    %c0_i32_1 = arith.constant 0 : i32
    return %arg0, %c0_i32, %c0_i32_0 : i32, i32, i32
  }
  func.func @transform_8(%arg0: i32) -> (i32, i32, i32) {
    %c0_i32 = arith.constant 0 : i32
    %c0_i32_0 = arith.constant 0 : i32
    %c0_i32_1 = arith.constant 0 : i32
    return %arg0, %c0_i32, %c0_i32_0 : i32, i32, i32
  }
  func.func @transform_9(%arg0: i32) -> (i32, i32, i32) {
    %c0_i32 = arith.constant 0 : i32
    %c0_i32_0 = arith.constant 0 : i32
    %c0_i32_1 = arith.constant 0 : i32
    return %arg0, %c0_i32, %c0_i32_0 : i32, i32, i32
  }
  func.func @transform_10(%arg0: i32) -> (i32, i32, i32) {
    %c0_i32 = arith.constant 0 : i32
    %c0_i32_0 = arith.constant 0 : i32
    %c0_i32_1 = arith.constant 0 : i32
    return %arg0, %c0_i32, %c0_i32_0 : i32, i32, i32
  }
  func.func @transform_11(%arg0: i32) -> (i32, i32, i32) {
    %c0_i32 = arith.constant 0 : i32
    %c0_i32_0 = arith.constant 0 : i32
    %c0_i32_1 = arith.constant 0 : i32
    return %arg0, %c0_i32, %c0_i32_0 : i32, i32, i32
  }
  func.func @transform_12(%arg0: i32) -> (i32, i32, i32) {
    %c0_i32 = arith.constant 0 : i32
    %c0_i32_0 = arith.constant 0 : i32
    %c0_i32_1 = arith.constant 0 : i32
    return %arg0, %c0_i32, %c0_i32_0 : i32, i32, i32
  }
  func.func @transform_13(%arg0: i32) -> (i32, i32, i32) {
    %c0_i32 = arith.constant 0 : i32
    %c0_i32_0 = arith.constant 0 : i32
    %c0_i32_1 = arith.constant 0 : i32
    return %arg0, %c0_i32, %c0_i32_0 : i32, i32, i32
  }
}

</mosaic_0001>

<llo_original>
// kernel: sub.1
$region0: #{sub.1}
  #allocation0 [shape = 's32[1]{0}', space=sflag, size = 0x4, scoped, tag = 'scoped memory for sub.1']
  %s0 = inlined_call_operand.vmem [shape: f32[2,1,128], index: 0, kind: input, shape index: {}]
  %s1 = inlined_call_operand.vmem [shape: f32[2,1,128], index: 1, kind: input, shape index: {}]
  %s2 = inlined_call_operand.vmem [shape: f32[2,1,128], index: 2, kind: output, shape index: {}]
  %v3 = vld [vmem:[%s0] sm:$0x1]
  %v4 = vld [vmem:[%s1] sm:$0x1]
  %5 = xla_tuple %v3, %v4
  %6 = xla_tuple %5
  %v7 = vsub.f32 %v3, %v4
  %8 = xla_tuple %v7
  %9 = vst [vmem:[%s2] sm:$0x1] %v7
  %s10 = scalar_lea.vmem %s0, 1
  %v11 = vld [vmem:[%s10] sm:$0x1]
  %s12 = scalar_lea.vmem %s1, 1
  %v13 = vld [vmem:[%s12] sm:$0x1]
  %14 = xla_tuple %v11, %v13
  %15 = xla_tuple %14
  %v16 = vsub.f32 %v11, %v13
  %17 = xla_tuple %v16
  %s18 = scalar_lea.vmem %s2, 1
  %19 = vst [vmem:[%s18] sm:$0x1] %v16

// kernel: dipole_interaction.1
$region0: #{dipole_interaction.1}
  #allocation0 [shape = 'u32[]', space=smem, size = 0x4, offset = 0x4, fixed_abs, tag = 'smem constant byte address 0x4 - core index']
  #allocation1 [shape = 'u32[144,128]{1,0:T(1,128)}', space=vmem, size = 0x12000, scoped, tag = 'internal scratch']
  %s0 = inlined_call_operand.vmem [shape: f32[2,64,384], index: 0, kind: input, shape index: {}]
  %s1 = inlined_call_operand.vmem [shape: f32[256,32], index: 1, kind: input, shape index: {}]
  %s2 = inlined_call_operand.vmem [shape: f32[256,1], index: 2, kind: input, shape index: {}]
  %s3 = inlined_call_operand.vmem [shape: f32[3,256,1], index: 3, kind: input, shape index: {}]
  %s4 = inlined_call_operand.vmem [shape: f32[256,1], index: 4, kind: input, shape index: {}]
  %s5 = inlined_call_operand.vmem [shape: s32[1,256], index: 5, kind: input, shape index: {}]
  %s6 = inlined_call_operand.vmem [shape: s32[256,1], index: 6, kind: input, shape index: {}]
  %s7 = inlined_call_operand.vmem [shape: f32[2,32,128], index: 7, kind: input, shape index: {}]
  %s8 = inlined_call_operand.vmem [shape: f32[2,1,128], index: 8, kind: input, shape index: {}]
  %s9 = inlined_call_operand.vmem [shape: f32[2,128,128], index: 9, kind: input, shape index: {}]
  %s10 = inlined_call_operand.vmem [shape: f32[2,1,128], index: 10, kind: input, shape index: {}]
  %s11 = inlined_call_operand.vmem [shape: f32[2,128,128], index: 11, kind: input, shape index: {}]
  %s12 = inlined_call_operand.vmem [shape: f32[2,1,128], index: 12, kind: input, shape index: {}]
  %s13 = inlined_call_operand.vmem [shape: f32[2,64,128], index: 13, kind: output, shape index: {}]
  %s14 = sld [smem:[#allocation0]]
  $region85: #{dipole_interaction.1} parent=0
    _
  %s16 = ssub.s32 1, %s14
  %s17 = scalar_select 0, %s16, %s14
  loop: start=0, step=1, limit=4
  $region2: #{dipole_interaction.1} parent=0 // loop_pre_header
    _
  $region3: #{dipole_interaction.1} parent=0 // loop_header
    %s19 = sphi 0, %s23
    %p20 = scmp.ge.s32.totalorder %s19, 4
    %s29 = sphi 0, %s31
    %s32 = sphi 0, %s29
    %s33 = sphi 0, %s32
    %s49 = sphi 0, %s33
    %s53 = sphi 0, %s53
    %s55 = sphi 0, %s53
    %s56 = sphi 0, %s55
    %s70 = sphi 0, %s56
    %s74 = sphi 0, %s74
    %s76 = sphi 0, %s74
    %s77 = sphi 0, %s76
    %s91 = sphi 0, %s77
    %s95 = sphi 0, %s95
    %s97 = sphi 0, %s95
    %s98 = sphi 0, %s97
    %s112 = sphi 0, %s98
    %s116 = sphi 0, %s116
    %s118 = sphi 0, %s116
    %s119 = sphi 0, %s118
    %s133 = sphi 0, %s119
    %s137 = sphi 0, %s137
    %s139 = sphi 0, %s137
    %s140 = sphi 0, %s139
    %s154 = sphi 0, %s140
    %s158 = sphi 0, %s158
    %s160 = sphi 0, %s158
    %s161 = sphi 0, %s160
    %s175 = sphi 0, %s161
    %s181 = sphi 0, %s183
    %s184 = sphi 0, %s181
    %s185 = sphi 0, %s184
    %s201 = sphi 0, %s185
    %s207 = sphi 0, %s209
    %s210 = sphi 0, %s207
    %s211 = sphi 0, %s210
    %s227 = sphi 0, %s211
    %s233 = sphi 0, %s235
    %s236 = sphi 0, %s233
    %s237 = sphi 0, %s236
    %s253 = sphi 0, %s237
    %s259 = sphi 0, %s261
    %s262 = sphi 0, %s259
    %s263 = sphi 0, %s262
    %s279 = sphi 0, %s263
    %s285 = sphi 0, %s287
    %s288 = sphi 0, %s285
    %s289 = sphi 0, %s288
    %s305 = sphi 0, %s289
    %s311 = sphi 0, %s313
    %s314 = sphi 0, %s311
    %s315 = sphi 0, %s314
    %s331 = sphi 0, %s315
    %s337 = sphi 0, %s339
    %s340 = sphi 0, %s337
    %s341 = sphi 0, %s340
    %s357 = sphi 0, %s341
  $region4: #{dipole_interaction.1} parent=0 // loop_header_branch
    %22 = sbr.rel (%p20) target = $region8
  $region5: #{dipole_interaction.1} parent=0 // loop_body
    %s24 = ssub.s32 %s19, 1
    %s25 = ssub.s32 %s19, 2
    %s26 = sadd.s32 %s19, 1
    %s27 = ssub.s32 %s19, %s26
    %p28 = scmp.eq.s32.totalorder %s27, 0
    %s30 = sadd.s32 %s29, 1
    %s31 = scalar_select %p28, %s29, %s30
    %p34 = pneg %p28
    %p35 = scmp.eq.s32.totalorder %s19, 1
    %p36 = por %p34, %p35
    %p37 = scmp.ne.s32.totalorder %s29, %s32
    %p38 = scmp.eq.s32.totalorder %s19, 0
    %p39 = por %p37, %p38
    %p40 = scmp.ne.s32.totalorder %s29, %s32
    %p41 = scmp.eq.s32.totalorder %s24, 1
    %p42 = por %p40, %p41
    %p43 = scmp.ne.s32.totalorder %s32, %s33
    %p44 = scmp.eq.s32.totalorder %s24, 0
    %p45 = por %p43, %p44
    %p46 = scmp.ne.s32.totalorder %s32, %s33
    %p47 = scmp.eq.s32.totalorder %s25, 1
    %p48 = por %p46, %p47
    %p50 = scmp.ne.s32.totalorder %s33, %s49
    %p51 = scmp.eq.s32.totalorder %s25, 0
    %p52 = por %p50, %p51
    %s54 = sadd.s32 %s53, 1
    %p57 = scmp.eq.s32.totalorder %s19, 1
    %p58 = scmp.ne.s32.totalorder %s53, %s55
    %p59 = scmp.eq.s32.totalorder %s19, 0
    %p60 = por %p58, %p59
    %p61 = scmp.ne.s32.totalorder %s53, %s55
    %p62 = scmp.eq.s32.totalorder %s24, 1
    %p63 = por %p61, %p62
    %p64 = scmp.ne.s32.totalorder %s55, %s56
    %p65 = scmp.eq.s32.totalorder %s24, 0
    %p66 = por %p64, %p65
    %p67 = scmp.ne.s32.totalorder %s55, %s56
    %p68 = scmp.eq.s32.totalorder %s25, 1
    %p69 = por %p67, %p68
    %p71 = scmp.ne.s32.totalorder %s56, %s70
    %p72 = scmp.eq.s32.totalorder %s25, 0
    %p73 = por %p71, %p72
    %s75 = sadd.s32 %s74, 1
    %p78 = scmp.eq.s32.totalorder %s19, 1
    %p79 = scmp.ne.s32.totalorder %s74, %s76
    %p80 = scmp.eq.s32.totalorder %s19, 0
    %p81 = por %p79, %p80
    %p82 = scmp.ne.s32.totalorder %s74, %s76
    %p83 = scmp.eq.s32.totalorder %s24, 1
    %p84 = por %p82, %p83
    %p85 = scmp.ne.s32.totalorder %s76, %s77
    %p86 = scmp.eq.s32.totalorder %s24, 0
    %p87 = por %p85, %p86
    %p88 = scmp.ne.s32.totalorder %s76, %s77
    %p89 = scmp.eq.s32.totalorder %s25, 1
    %p90 = por %p88, %p89
    %p92 = scmp.ne.s32.totalorder %s77, %s91
    %p93 = scmp.eq.s32.totalorder %s25, 0
    %p94 = por %p92, %p93
    %s96 = sadd.s32 %s95, 1
    %p99 = scmp.eq.s32.totalorder %s19, 1
    %p100 = scmp.ne.s32.totalorder %s95, %s97
    %p101 = scmp.eq.s32.totalorder %s19, 0
    %p102 = por %p100, %p101
    %p103 = scmp.ne.s32.totalorder %s95, %s97
    %p104 = scmp.eq.s32.totalorder %s24, 1
    %p105 = por %p103, %p104
    %p106 = scmp.ne.s32.totalorder %s97, %s98
    %p107 = scmp.eq.s32.totalorder %s24, 0
    %p108 = por %p106, %p107
    %p109 = scmp.ne.s32.totalorder %s97, %s98
    %p110 = scmp.eq.s32.totalorder %s25, 1
    %p111 = por %p109, %p110
    %p113 = scmp.ne.s32.totalorder %s98, %s112
    %p114 = scmp.eq.s32.totalorder %s25, 0
    %p115 = por %p113, %p114
    %s117 = sadd.s32 %s116, 1
    %p120 = scmp.eq.s32.totalorder %s19, 1
    %p121 = scmp.ne.s32.totalorder %s116, %s118
    %p122 = scmp.eq.s32.totalorder %s19, 0
    %p123 = por %p121, %p122
    %p124 = scmp.ne.s32.totalorder %s116, %s118
    %p125 = scmp.eq.s32.totalorder %s24, 1
    %p126 = por %p124, %p125
    %p127 = scmp.ne.s32.totalorder %s118, %s119
    %p128 = scmp.eq.s32.totalorder %s24, 0
    %p129 = por %p127, %p128
    %p130 = scmp.ne.s32.totalorder %s118, %s119
    %p131 = scmp.eq.s32.totalorder %s25, 1
    %p132 = por %p130, %p131
    %p134 = scmp.ne.s32.totalorder %s119, %s133
    %p135 = scmp.eq.s32.totalorder %s25, 0
    %p136 = por %p134, %p135
    %s138 = sadd.s32 %s137, 1
    %p141 = scmp.eq.s32.totalorder %s19, 1
    %p142 = scmp.ne.s32.totalorder %s137, %s139
    %p143 = scmp.eq.s32.totalorder %s19, 0
    %p144 = por %p142, %p143
    %p145 = scmp.ne.s32.totalorder %s137, %s139
    %p146 = scmp.eq.s32.totalorder %s24, 1
    %p147 = por %p145, %p146
    %p148 = scmp.ne.s32.totalorder %s139, %s140
    %p149 = scmp.eq.s32.totalorder %s24, 0
    %p150 = por %p148, %p149
    %p151 = scmp.ne.s32.totalorder %s139, %s140
    %p152 = scmp.eq.s32.totalorder %s25, 1
    %p153 = por %p151, %p152
    %p155 = scmp.ne.s32.totalorder %s140, %s154
    %p156 = scmp.eq.s32.totalorder %s25, 0
    %p157 = por %p155, %p156
    %s159 = sadd.s32 %s158, 1
    %p162 = scmp.eq.s32.totalorder %s19, 1
    %p163 = scmp.ne.s32.totalorder %s158, %s160
    %p164 = scmp.eq.s32.totalorder %s19, 0
    %p165 = por %p163, %p164
    %p166 = scmp.ne.s32.totalorder %s158, %s160
    %p167 = scmp.eq.s32.totalorder %s24, 1
    %p168 = por %p166, %p167
    %p169 = scmp.ne.s32.totalorder %s160, %s161
    %p170 = scmp.eq.s32.totalorder %s24, 0
    %p171 = por %p169, %p170
    %p172 = scmp.ne.s32.totalorder %s160, %s161
    %p173 = scmp.eq.s32.totalorder %s25, 1
    %p174 = por %p172, %p173
    %p176 = scmp.ne.s32.totalorder %s161, %s175
    %p177 = scmp.eq.s32.totalorder %s25, 0
    %p178 = por %p176, %p177
    %s179 = ssub.s32 %s19, %s26
    %p180 = scmp.eq.s32.totalorder %s179, 0
    %s182 = sadd.s32 %s181, 1
    %s183 = scalar_select %p180, %s181, %s182
    %p186 = pneg %p180
    %p187 = scmp.eq.s32.totalorder %s19, 1
    %p188 = por %p186, %p187
    %p189 = scmp.ne.s32.totalorder %s181, %s184
    %p190 = scmp.eq.s32.totalorder %s19, 0
    %p191 = por %p189, %p190
    %p192 = scmp.ne.s32.totalorder %s181, %s184
    %p193 = scmp.eq.s32.totalorder %s24, 1
    %p194 = por %p192, %p193
    %p195 = scmp.ne.s32.totalorder %s184, %s185
    %p196 = scmp.eq.s32.totalorder %s24, 0
    %p197 = por %p195, %p196
    %p198 = scmp.ne.s32.totalorder %s184, %s185
    %p199 = scmp.eq.s32.totalorder %s25, 1
    %p200 = por %p198, %p199
    %p202 = scmp.ne.s32.totalorder %s185, %s201
    %p203 = scmp.eq.s32.totalorder %s25, 0
    %p204 = por %p202, %p203
    %s205 = ssub.s32 %s19, %s26
    %p206 = scmp.eq.s32.totalorder %s205, 0
    %s208 = sadd.s32 %s207, 1
    %s209 = scalar_select %p206, %s207, %s208
    %p212 = pneg %p206
    %p213 = scmp.eq.s32.totalorder %s19, 1
    %p214 = por %p212, %p213
    %p215 = scmp.ne.s32.totalorder %s207, %s210
    %p216 = scmp.eq.s32.totalorder %s19, 0
    %p217 = por %p215, %p216
    %p218 = scmp.ne.s32.totalorder %s207, %s210
    %p219 = scmp.eq.s32.totalorder %s24, 1
    %p220 = por %p218, %p219
    %p221 = scmp.ne.s32.totalorder %s210, %s211
    %p222 = scmp.eq.s32.totalorder %s24, 0
    %p223 = por %p221, %p222
    %p224 = scmp.ne.s32.totalorder %s210, %s211
    %p225 = scmp.eq.s32.totalorder %s25, 1
    %p226 = por %p224, %p225
    %p228 = scmp.ne.s32.totalorder %s211, %s227
    %p229 = scmp.eq.s32.totalorder %s25, 0
    %p230 = por %p228, %p229
    %s231 = ssub.s32 %s19, %s26
    %p232 = scmp.eq.s32.totalorder %s231, 0
    %s234 = sadd.s32 %s233, 1
    %s235 = scalar_select %p232, %s233, %s234
    %p238 = pneg %p232
    %p239 = scmp.eq.s32.totalorder %s19, 1
    %p240 = por %p238, %p239
    %p241 = scmp.ne.s32.totalorder %s233, %s236
    %p242 = scmp.eq.s32.totalorder %s19, 0
    %p243 = por %p241, %p242
    %p244 = scmp.ne.s32.totalorder %s233, %s236
    %p245 = scmp.eq.s32.totalorder %s24, 1
    %p246 = por %p244, %p245
    %p247 = scmp.ne.s32.totalorder %s236, %s237
    %p248 = scmp.eq.s32.totalorder %s24, 0
    %p249 = por %p247, %p248
    %p250 = scmp.ne.s32.totalorder %s236, %s237
    %p251 = scmp.eq.s32.totalorder %s25, 1
    %p252 = por %p250, %p251
    %p254 = scmp.ne.s32.totalorder %s237, %s253
    %p255 = scmp.eq.s32.totalorder %s25, 0
    %p256 = por %p254, %p255
    %s257 = ssub.s32 %s19, %s26
    %p258 = scmp.eq.s32.totalorder %s257, 0
    %s260 = sadd.s32 %s259, 1
    %s261 = scalar_select %p258, %s259, %s260
    %p264 = pneg %p258
    %p265 = scmp.eq.s32.totalorder %s19, 1
    %p266 = por %p264, %p265
    %p267 = scmp.ne.s32.totalorder %s259, %s262
    %p268 = scmp.eq.s32.totalorder %s19, 0
    %p269 = por %p267, %p268
    %p270 = scmp.ne.s32.totalorder %s259, %s262
    %p271 = scmp.eq.s32.totalorder %s24, 1
    %p272 = por %p270, %p271
    %p273 = scmp.ne.s32.totalorder %s262, %s263
    %p274 = scmp.eq.s32.totalorder %s24, 0
    %p275 = por %p273, %p274
    %p276 = scmp.ne.s32.totalorder %s262, %s263
    %p277 = scmp.eq.s32.totalorder %s25, 1
    %p278 = por %p276, %p277
    %p280 = scmp.ne.s32.totalorder %s263, %s279
    %p281 = scmp.eq.s32.totalorder %s25, 0
    %p282 = por %p280, %p281
    %s283 = ssub.s32 %s19, %s26
    %p284 = scmp.eq.s32.totalorder %s283, 0
    %s286 = sadd.s32 %s285, 1
    %s287 = scalar_select %p284, %s285, %s286
    %p290 = pneg %p284
    %p291 = scmp.eq.s32.totalorder %s19, 1
    %p292 = por %p290, %p291
    %p293 = scmp.ne.s32.totalorder %s285, %s288
    %p294 = scmp.eq.s32.totalorder %s19, 0
    %p295 = por %p293, %p294
    %p296 = scmp.ne.s32.totalorder %s285, %s288
    %p297 = scmp.eq.s32.totalorder %s24, 1
    %p298 = por %p296, %p297
    %p299 = scmp.ne.s32.totalorder %s288, %s289
    %p300 = scmp.eq.s32.totalorder %s24, 0
    %p301 = por %p299, %p300
    %p302 = scmp.ne.s32.totalorder %s288, %s289
    %p303 = scmp.eq.s32.totalorder %s25, 1
    %p304 = por %p302, %p303
    %p306 = scmp.ne.s32.totalorder %s289, %s305
    %p307 = scmp.eq.s32.totalorder %s25, 0
    %p308 = por %p306, %p307
    %s309 = ssub.s32 %s19, %s26
    %p310 = scmp.eq.s32.totalorder %s309, 0
    %s312 = sadd.s32 %s311, 1
    %s313 = scalar_select %p310, %s311, %s312
    %p316 = pneg %p310
    %p317 = scmp.eq.s32.totalorder %s19, 1
    %p318 = por %p316, %p317
    %p319 = scmp.ne.s32.totalorder %s311, %s314
    %p320 = scmp.eq.s32.totalorder %s19, 0
    %p321 = por %p319, %p320
    %p322 = scmp.ne.s32.totalorder %s311, %s314
    %p323 = scmp.eq.s32.totalorder %s24, 1
    %p324 = por %p322, %p323
    %p325 = scmp.ne.s32.totalorder %s314, %s315
    %p326 = scmp.eq.s32.totalorder %s24, 0
    %p327 = por %p325, %p326
    %p328 = scmp.ne.s32.totalorder %s314, %s315
    %p329 = scmp.eq.s32.totalorder %s25, 1
    %p330 = por %p328, %p329
    %p332 = scmp.ne.s32.totalorder %s315, %s331
    %p333 = scmp.eq.s32.totalorder %s25, 0
    %p334 = por %p332, %p333
    %s335 = ssub.s32 %s19, %s26
    %p336 = scmp.eq.s32.totalorder %s335, 0
    %s338 = sadd.s32 %s337, 1
    %s339 = scalar_select %p336, %s337, %s338
    %p342 = pneg %p336
    %p343 = scmp.eq.s32.totalorder %s19, 1
    %p344 = por %p342, %p343
    %p345 = scmp.ne.s32.totalorder %s337, %s340
    %p346 = scmp.eq.s32.totalorder %s19, 0
    %p347 = por %p345, %p346
    %p348 = scmp.ne.s32.totalorder %s337, %s340
    %p349 = scmp.eq.s32.totalorder %s24, 1
    %p350 = por %p348, %p349
    %p351 = scmp.ne.s32.totalorder %s340, %s341
    %p352 = scmp.eq.s32.totalorder %s24, 0
    %p353 = por %p351, %p352
    %p354 = scmp.ne.s32.totalorder %s340, %s341
    %p355 = scmp.eq.s32.totalorder %s25, 1
    %p356 = por %p354, %p355
    %p358 = scmp.ne.s32.totalorder %s341, %s357
    %p359 = scmp.eq.s32.totalorder %s25, 0
    %p360 = por %p358, %p359
    %p361 = scmp.le.s32.totalorder 1, %s19
    %p362 = scmp.lt.s32.totalorder %s19, 3
    %p363 = pnand %p361, %p362
    %p364 = pneg %p363
    // Predicated region
    $region9: #{dipole_interaction.1} parent=5 // pred_check
      _
    $region10: #{dipole_interaction.1} parent=5 // pred_check_branch
      %366 = sbr.rel (%p363) target = $region12
    $region11: #{dipole_interaction.1} parent=5 // pred_region
      %s367 = ssub.s32 %s19, 1
      // Predicated region
      $region13: #{dipole_interaction.1} parent=11 // pred_check
        %p368 = pneg %p66
      $region14: #{dipole_interaction.1} parent=11 // pred_check_branch
        %370 = sbr.rel (%p368) target = $region16
      $region15: #{dipole_interaction.1} parent=11 // pred_region
        _
      $region16: #{dipole_interaction.1} parent=11 // pred_fallthru
        _
      // Predicated region
      $region17: #{dipole_interaction.1} parent=11 // pred_check
        %p371 = pneg %p87
      $region18: #{dipole_interaction.1} parent=11 // pred_check_branch
        %373 = sbr.rel (%p371) target = $region20
      $region19: #{dipole_interaction.1} parent=11 // pred_region
        _
      $region20: #{dipole_interaction.1} parent=11 // pred_fallthru
        _
      // Predicated region
      $region21: #{dipole_interaction.1} parent=11 // pred_check
        %p374 = pneg %p108
      $region22: #{dipole_interaction.1} parent=11 // pred_check_branch
        %376 = sbr.rel (%p374) target = $region24
      $region23: #{dipole_interaction.1} parent=11 // pred_region
        _
      $region24: #{dipole_interaction.1} parent=11 // pred_fallthru
        _
      // Predicated region
      $region25: #{dipole_interaction.1} parent=11 // pred_check
        %p377 = pneg %p129
      $region26: #{dipole_interaction.1} parent=11 // pred_check_branch
        %379 = sbr.rel (%p377) target = $region28
      $region27: #{dipole_interaction.1} parent=11 // pred_region
        _
      $region28: #{dipole_interaction.1} parent=11 // pred_fallthru
        _
      // Predicated region
      $region29: #{dipole_interaction.1} parent=11 // pred_check
        %p380 = pneg %p150
      $region30: #{dipole_interaction.1} parent=11 // pred_check_branch
        %382 = sbr.rel (%p380) target = $region32
      $region31: #{dipole_interaction.1} parent=11 // pred_region
        _
      $region32: #{dipole_interaction.1} parent=11 // pred_fallthru
        _
      // Predicated region
      $region33: #{dipole_interaction.1} parent=11 // pred_check
        %p383 = pneg %p171
      $region34: #{dipole_interaction.1} parent=11 // pred_check_branch
        %385 = sbr.rel (%p383) target = $region36
      $region35: #{dipole_interaction.1} parent=11 // pred_region
        _
      $region36: #{dipole_interaction.1} parent=11 // pred_fallthru
        _
    $region12: #{dipole_interaction.1} parent=5 // pred_fallthru
      _
    %p386 = scmp.lt.s32.totalorder %s19, 2
    // Predicated region
    $region37: #{dipole_interaction.1} parent=5 // pred_check
      %p387 = pneg %p386
    $region38: #{dipole_interaction.1} parent=5 // pred_check_branch
      %389 = sbr.rel (%p387) target = $region40
    $region39: #{dipole_interaction.1} parent=5 // pred_region
      // Predicated region
      $region41: #{dipole_interaction.1} parent=39 // pred_check
        %p390 = pneg %p39
      $region42: #{dipole_interaction.1} parent=39 // pred_check_branch
        %392 = sbr.rel (%p390) target = $region44
      $region43: #{dipole_interaction.1} parent=39 // pred_region
        %p393 = scmp.lt.s32.totalorder %s19, 1
        %s394 = scalar_select %p393, %s19, 1
        %s395 = smul.addr %s394, 24
        %s396 = smul.addr %s395, 8
        %s397 = scalar_lea.vmem %s0, %s396
      $region44: #{dipole_interaction.1} parent=39 // pred_fallthru
        _
      // Predicated region
      $region45: #{dipole_interaction.1} parent=39 // pred_check
        %p398 = pneg %p191
      $region46: #{dipole_interaction.1} parent=39 // pred_check_branch
        %400 = sbr.rel (%p398) target = $region48
      $region47: #{dipole_interaction.1} parent=39 // pred_region
        %p401 = scmp.lt.s32.totalorder %s19, 1
        %s402 = scalar_select %p401, %s19, 1
        %s403 = smul.addr %s402, 4
        %s404 = smul.addr %s403, 8
        %s405 = scalar_lea.vmem %s7, %s404
      $region48: #{dipole_interaction.1} parent=39 // pred_fallthru
        _
      // Predicated region
      $region49: #{dipole_interaction.1} parent=39 // pred_check
        %p406 = pneg %p217
      $region50: #{dipole_interaction.1} parent=39 // pred_check_branch
        %408 = sbr.rel (%p406) target = $region52
      $region51: #{dipole_interaction.1} parent=39 // pred_region
        %p409 = scmp.lt.s32.totalorder %s19, 1
        %s410 = scalar_select %p409, %s19, 1
        %s411 = scalar_lea.vmem %s8, %s410
      $region52: #{dipole_interaction.1} parent=39 // pred_fallthru
        _
      // Predicated region
      $region53: #{dipole_interaction.1} parent=39 // pred_check
        %p412 = pneg %p243
      $region54: #{dipole_interaction.1} parent=39 // pred_check_branch
        %414 = sbr.rel (%p412) target = $region56
      $region55: #{dipole_interaction.1} parent=39 // pred_region
        %p415 = scmp.lt.s32.totalorder %s19, 1
        %s416 = scalar_select %p415, %s19, 1
        %s417 = smul.addr %s416, 16
        %s418 = smul.addr %s417, 8
        %s419 = scalar_lea.vmem %s9, %s418
      $region56: #{dipole_interaction.1} parent=39 // pred_fallthru
        _
      // Predicated region
      $region57: #{dipole_interaction.1} parent=39 // pred_check
        %p420 = pneg %p269
      $region58: #{dipole_interaction.1} parent=39 // pred_check_branch
        %422 = sbr.rel (%p420) target = $region60
      $region59: #{dipole_interaction.1} parent=39 // pred_region
        %p423 = scmp.lt.s32.totalorder %s19, 1
        %s424 = scalar_select %p423, %s19, 1
        %s425 = scalar_lea.vmem %s10, %s424
      $region60: #{dipole_interaction.1} parent=39 // pred_fallthru
        _
      // Predicated region
      $region61: #{dipole_interaction.1} parent=39 // pred_check
        %p426 = pneg %p295
      $region62: #{dipole_interaction.1} parent=39 // pred_check_branch
        %428 = sbr.rel (%p426) target = $region64
      $region63: #{dipole_interaction.1} parent=39 // pred_region
        %p429 = scmp.lt.s32.totalorder %s19, 1
        %s430 = scalar_select %p429, %s19, 1
        %s431 = smul.addr %s430, 16
        %s432 = smul.addr %s431, 8
        %s433 = scalar_lea.vmem %s11, %s432
      $region64: #{dipole_interaction.1} parent=39 // pred_fallthru
        _
      // Predicated region
      $region65: #{dipole_interaction.1} parent=39 // pred_check
        %p434 = pneg %p321
      $region66: #{dipole_interaction.1} parent=39 // pred_check_branch
        %436 = sbr.rel (%p434) target = $region68
      $region67: #{dipole_interaction.1} parent=39 // pred_region
        %p437 = scmp.lt.s32.totalorder %s19, 1
        %s438 = scalar_select %p437, %s19, 1
        %s439 = scalar_lea.vmem %s12, %s438
      $region68: #{dipole_interaction.1} parent=39 // pred_fallthru
        _
    $region40: #{dipole_interaction.1} parent=5 // pred_fallthru
      _
    %p440 = scmp.le.s32.totalorder 1, %s19
    %p441 = scmp.lt.s32.totalorder %s19, 3
    %p442 = pnand %p440, %p441
    %p443 = pneg %p442
    // Predicated region
    $region69: #{dipole_interaction.1} parent=5 // pred_check
      _
    $region70: #{dipole_interaction.1} parent=5 // pred_check_branch
      %445 = sbr.rel (%p442) target = $region72
    $region71: #{dipole_interaction.1} parent=5 // pred_region
      %s446 = ssub.s32 %s19, 1
      %p447 = scmp.lt.s32.totalorder %s24, 1
      %s448 = scalar_select %p447, %s24, 1
      %s449 = smul.addr %s448, 24
      %s450 = smul.addr %s449, 8
      %s451 = scalar_lea.vmem %s0, %s450
      %p452 = pneg %p45
      %p453 = pneg %p42
      %p454 = pneg %p66
      %p455 = pneg %p63
      %p456 = pneg %p87
      %p457 = pneg %p84
      %p458 = pneg %p108
      %p459 = pneg %p105
      %p460 = pneg %p129
      %p461 = pneg %p126
      %p462 = pneg %p150
      %p463 = pneg %p147
      %p464 = pneg %p171
      %p465 = pneg %p168
      %p466 = scmp.lt.s32.totalorder %s24, 1
      %s467 = scalar_select %p466, %s24, 1
      %s468 = smul.addr %s467, 4
      %s469 = smul.addr %s468, 8
      %s470 = scalar_lea.vmem %s7, %s469
      %p471 = pneg %p197
      %p472 = pneg %p194
      %p473 = scmp.lt.s32.totalorder %s24, 1
      %s474 = scalar_select %p473, %s24, 1
      %s475 = scalar_lea.vmem %s8, %s474
      %p476 = pneg %p223
      %p477 = pneg %p220
      %p478 = scmp.lt.s32.totalorder %s24, 1
      %s479 = scalar_select %p478, %s24, 1
      %s480 = smul.addr %s479, 16
      %s481 = smul.addr %s480, 8
      %s482 = scalar_lea.vmem %s9, %s481
      %p483 = pneg %p249
      %p484 = pneg %p246
      %p485 = scmp.lt.s32.totalorder %s24, 1
      %s486 = scalar_select %p485, %s24, 1
      %s487 = scalar_lea.vmem %s10, %s486
      %p488 = pneg %p275
      %p489 = pneg %p272
      %p490 = scmp.lt.s32.totalorder %s24, 1
      %s491 = scalar_select %p490, %s24, 1
      %s492 = smul.addr %s491, 16
      %s493 = smul.addr %s492, 8
      %s494 = scalar_lea.vmem %s11, %s493
      %p495 = pneg %p301
      %p496 = pneg %p298
      %p497 = scmp.lt.s32.totalorder %s24, 1
      %s498 = scalar_select %p497, %s24, 1
      %s499 = scalar_lea.vmem %s12, %s498
      %p500 = pneg %p327
      %p501 = pneg %p324
      %p502 = pneg %p353
      %p503 = pneg %p350
      %p504 = scmp.lt.s32.totalorder %s24, 1
      %s505 = scalar_select %p504, %s24, 1
      %s506 = smul.addr %s505, 8
      %s507 = smul.addr %s506, 8
      %s508 = scalar_lea.vmem %s13, %s507
      %p509 = scmp.lt.s32.totalorder %s24, 1
      %s510 = scalar_select %p509, %s24, 1
      %s511 = smul.addr %s510, 24
      %s512 = smul.addr %s511, 8
      %s513 = scalar_lea.vmem %s0, %s512
      %p514 = scmp.lt.s32.totalorder %s24, 1
      %s515 = scalar_select %p514, %s24, 1
      %s516 = smul.addr %s515, 4
      %s517 = smul.addr %s516, 8
      %s518 = scalar_lea.vmem %s7, %s517
      %p519 = scmp.lt.s32.totalorder %s24, 1
      %s520 = scalar_select %p519, %s24, 1
      %s521 = scalar_lea.vmem %s8, %s520
      %p522 = scmp.lt.s32.totalorder %s24, 1
      %s523 = scalar_select %p522, %s24, 1
      %s524 = smul.addr %s523, 16
      %s525 = smul.addr %s524, 8
      %s526 = scalar_lea.vmem %s9, %s525
      %p527 = scmp.lt.s32.totalorder %s24, 1
      %s528 = scalar_select %p527, %s24, 1
      %s529 = scalar_lea.vmem %s10, %s528
      %p530 = scmp.lt.s32.totalorder %s24, 1
      %s531 = scalar_select %p530, %s24, 1
      %s532 = smul.addr %s531, 16
      %s533 = smul.addr %s532, 8
      %s534 = scalar_lea.vmem %s11, %s533
      %p535 = scmp.lt.s32.totalorder %s24, 1
      %s536 = scalar_select %p535, %s24, 1
      %s537 = scalar_lea.vmem %s12, %s536
      %p538 = scmp.lt.s32.totalorder %s24, 1
      %s539 = scalar_select %p538, %s24, 1
      %s540 = smul.addr %s539, 8
      %s541 = smul.addr %s540, 8
      %s542 = scalar_lea.vmem %s13, %s541
      %v543 = vld [vmem:[%s6] sm:$0xff]
      %v544 = vld [vmem:[%s6 + $0x8] sm:$0xff]
      %v545 = vld [vmem:[%s6 + $0x10] sm:$0xff]
      %v546 = vld [vmem:[%s6 + $0x18] sm:$0xff]
      %v547 = vld [vmem:[%s6 + $0x20] sm:$0xff]
      %v548 = vld [vmem:[%s6 + $0x28] sm:$0xff]
      %v549 = vld [vmem:[%s6 + $0x30] sm:$0xff]
      %v550 = vld [vmem:[%s6 + $0x38] sm:$0xff]
      %v551 = vld [vmem:[%s6 + $0x40] sm:$0xff]
      %v552 = vld [vmem:[%s6 + $0x48] sm:$0xff]
      %v553 = vld [vmem:[%s6 + $0x50] sm:$0xff]
      %v554 = vld [vmem:[%s6 + $0x58] sm:$0xff]
      %v555 = vld [vmem:[%s6 + $0x60] sm:$0xff]
      %v556 = vld [vmem:[%s6 + $0x68] sm:$0xff]
      %v557 = vld [vmem:[%s6 + $0x70] sm:$0xff]
      %v558 = vld [vmem:[%s6 + $0x78] sm:$0xff]
      %v559 = vld [vmem:[%s6 + $0x80] sm:$0xff]
      %v560 = vld [vmem:[%s6 + $0x88] sm:$0xff]
      %v561 = vld [vmem:[%s6 + $0x90] sm:$0xff]
      %v562 = vld [vmem:[%s6 + $0x98] sm:$0xff]
      %v563 = vld [vmem:[%s6 + $0xa0] sm:$0xff]
      %v564 = vld [vmem:[%s6 + $0xa8] sm:$0xff]
      %v565 = vld [vmem:[%s6 + $0xb0] sm:$0xff]
      %v566 = vld [vmem:[%s6 + $0xb8] sm:$0xff]
      %v567 = vld [vmem:[%s6 + $0xc0] sm:$0xff]
      %v568 = vld [vmem:[%s6 + $0xc8] sm:$0xff]
      %v569 = vld [vmem:[%s6 + $0xd0] sm:$0xff]
      %v570 = vld [vmem:[%s6 + $0xd8] sm:$0xff]
      %v571 = vld [vmem:[%s6 + $0xe0] sm:$0xff]
      %v572 = vld [vmem:[%s6 + $0xe8] sm:$0xff]
      %v573 = vld [vmem:[%s6 + $0xf0] sm:$0xff]
      %v574 = vld [vmem:[%s6 + $0xf8] sm:$0xff]
      %v575 = vlaneseq
      %v576 = vand.u32 %v575, 127
      %577 = vset.pattern.permute.xlu0 0
      %578 = vperm.xlu0 %577, %v543
      %v579 = vpop.permute.xlu0 %578
      %580 = vset.pattern.permute.xlu0 0
      %581 = vperm.xlu0 %580, %v544
      %v582 = vpop.permute.xlu0 %581
      %583 = vset.pattern.permute.xlu0 0
      %584 = vperm.xlu0 %583, %v545
      %v585 = vpop.permute.xlu0 %584
      %586 = vset.pattern.permute.xlu0 0
      %587 = vperm.xlu0 %586, %v546
      %v588 = vpop.permute.xlu0 %587
      %589 = vset.pattern.permute.xlu0 0
      %590 = vperm.xlu0 %589, %v547
      %v591 = vpop.permute.xlu0 %590
      %592 = vset.pattern.permute.xlu0 0
      %593 = vperm.xlu0 %592, %v548
      %v594 = vpop.permute.xlu0 %593
      %595 = vset.pattern.permute.xlu0 0
      %596 = vperm.xlu0 %595, %v549
      %v597 = vpop.permute.xlu0 %596
      %598 = vset.pattern.permute.xlu0 0
      %599 = vperm.xlu0 %598, %v550
      %v600 = vpop.permute.xlu0 %599
      %601 = vset.pattern.permute.xlu0 0
      %602 = vperm.xlu0 %601, %v551
      %v603 = vpop.permute.xlu0 %602
      %604 = vset.pattern.permute.xlu0 0
      %605 = vperm.xlu0 %604, %v552
      %v606 = vpop.permute.xlu0 %605
      %607 = vset.pattern.permute.xlu0 0
      %608 = vperm.xlu0 %607, %v553
      %v609 = vpop.permute.xlu0 %608
      %610 = vset.pattern.permute.xlu0 0
      %611 = vperm.xlu0 %610, %v554
      %v612 = vpop.permute.xlu0 %611
      %613 = vset.pattern.permute.xlu0 0
      %614 = vperm.xlu0 %613, %v555
      %v615 = vpop.permute.xlu0 %614
      %616 = vset.pattern.permute.xlu0 0
      %617 = vperm.xlu0 %616, %v556
      %v618 = vpop.permute.xlu0 %617
      %619 = vset.pattern.permute.xlu0 0
      %620 = vperm.xlu0 %619, %v557
      %v621 = vpop.permute.xlu0 %620
      %622 = vset.pattern.permute.xlu0 0
      %623 = vperm.xlu0 %622, %v558
      %v624 = vpop.permute.xlu0 %623
      %625 = vset.pattern.permute.xlu0 0
      %626 = vperm.xlu0 %625, %v559
      %v627 = vpop.permute.xlu0 %626
      %628 = vset.pattern.permute.xlu0 0
      %629 = vperm.xlu0 %628, %v560
      %v630 = vpop.permute.xlu0 %629
      %631 = vset.pattern.permute.xlu0 0
      %632 = vperm.xlu0 %631, %v561
      %v633 = vpop.permute.xlu0 %632
      %634 = vset.pattern.permute.xlu0 0
      %635 = vperm.xlu0 %634, %v562
      %v636 = vpop.permute.xlu0 %635
      %637 = vset.pattern.permute.xlu0 0
      %638 = vperm.xlu0 %637, %v563
      %v639 = vpop.permute.xlu0 %638
      %640 = vset.pattern.permute.xlu0 0
      %641 = vperm.xlu0 %640, %v564
      %v642 = vpop.permute.xlu0 %641
      %643 = vset.pattern.permute.xlu0 0
      %644 = vperm.xlu0 %643, %v565
      %v645 = vpop.permute.xlu0 %644
      %646 = vset.pattern.permute.xlu0 0
      %647 = vperm.xlu0 %646, %v566
      %v648 = vpop.permute.xlu0 %647
      %649 = vset.pattern.permute.xlu0 0
      %650 = vperm.xlu0 %649, %v567
      %v651 = vpop.permute.xlu0 %650
      %652 = vset.pattern.permute.xlu0 0
      %653 = vperm.xlu0 %652, %v568
      %v654 = vpop.permute.xlu0 %653
      %655 = vset.pattern.permute.xlu0 0
      %656 = vperm.xlu0 %655, %v569
      %v657 = vpop.permute.xlu0 %656
      %658 = vset.pattern.permute.xlu0 0
      %659 = vperm.xlu0 %658, %v570
      %v660 = vpop.permute.xlu0 %659
      %661 = vset.pattern.permute.xlu0 0
      %662 = vperm.xlu0 %661, %v571
      %v663 = vpop.permute.xlu0 %662
      %664 = vset.pattern.permute.xlu0 0
      %665 = vperm.xlu0 %664, %v572
      %v666 = vpop.permute.xlu0 %665
      %667 = vset.pattern.permute.xlu0 0
      %668 = vperm.xlu0 %667, %v573
      %v669 = vpop.permute.xlu0 %668
      %670 = vset.pattern.permute.xlu0 0
      %671 = vperm.xlu0 %670, %v574
      %v672 = vpop.permute.xlu0 %671
      %vm673 = vcmp.eq.s32.totalorder %v579, %v576
      %vm674 = vcmp.eq.s32.totalorder %v582, %v576
      %vm675 = vcmp.eq.s32.totalorder %v585, %v576
      %vm676 = vcmp.eq.s32.totalorder %v588, %v576
      %vm677 = vcmp.eq.s32.totalorder %v591, %v576
      %vm678 = vcmp.eq.s32.totalorder %v594, %v576
      %vm679 = vcmp.eq.s32.totalorder %v597, %v576
      %vm680 = vcmp.eq.s32.totalorder %v600, %v576
      %vm681 = vcmp.eq.s32.totalorder %v603, %v576
      %vm682 = vcmp.eq.s32.totalorder %v606, %v576
      %vm683 = vcmp.eq.s32.totalorder %v609, %v576
      %vm684 = vcmp.eq.s32.totalorder %v612, %v576
      %vm685 = vcmp.eq.s32.totalorder %v615, %v576
      %vm686 = vcmp.eq.s32.totalorder %v618, %v576
      %vm687 = vcmp.eq.s32.totalorder %v621, %v576
      %vm688 = vcmp.eq.s32.totalorder %v624, %v576
      %vm689 = vcmp.eq.s32.totalorder %v627, %v576
      %vm690 = vcmp.eq.s32.totalorder %v630, %v576
      %vm691 = vcmp.eq.s32.totalorder %v633, %v576
      %vm692 = vcmp.eq.s32.totalorder %v636, %v576
      %vm693 = vcmp.eq.s32.totalorder %v639, %v576
      %vm694 = vcmp.eq.s32.totalorder %v642, %v576
      %vm695 = vcmp.eq.s32.totalorder %v645, %v576
      %vm696 = vcmp.eq.s32.totalorder %v648, %v576
      %vm697 = vcmp.eq.s32.totalorder %v651, %v576
      %vm698 = vcmp.eq.s32.totalorder %v654, %v576
      %vm699 = vcmp.eq.s32.totalorder %v657, %v576
      %vm700 = vcmp.eq.s32.totalorder %v660, %v576
      %vm701 = vcmp.eq.s32.totalorder %v663, %v576
      %vm702 = vcmp.eq.s32.totalorder %v666, %v576
      %vm703 = vcmp.eq.s32.totalorder %v669, %v576
      %vm704 = vcmp.eq.s32.totalorder %v672, %v576
      %v705 = vsel %vm673, 1, 0
      %v706 = vsel %vm674, 1, 0
      %v707 = vsel %vm675, 1, 0
      %v708 = vsel %vm676, 1, 0
      %v709 = vsel %vm677, 1, 0
      %v710 = vsel %vm678, 1, 0
      %v711 = vsel %vm679, 1, 0
      %v712 = vsel %vm680, 1, 0
      %v713 = vsel %vm681, 1, 0
      %v714 = vsel %vm682, 1, 0
      %v715 = vsel %vm683, 1, 0
      %v716 = vsel %vm684, 1, 0
      %v717 = vsel %vm685, 1, 0
      %v718 = vsel %vm686, 1, 0
      %v719 = vsel %vm687, 1, 0
      %v720 = vsel %vm688, 1, 0
      %v721 = vsel %vm689, 1, 0
      %v722 = vsel %vm690, 1, 0
      %v723 = vsel %vm691, 1, 0
      %v724 = vsel %vm692, 1, 0
      %v725 = vsel %vm693, 1, 0
      %v726 = vsel %vm694, 1, 0
      %v727 = vsel %vm695, 1, 0
      %v728 = vsel %vm696, 1, 0
      %v729 = vsel %vm697, 1, 0
      %v730 = vsel %vm698, 1, 0
      %v731 = vsel %vm699, 1, 0
      %v732 = vsel %vm700, 1, 0
      %v733 = vsel %vm701, 1, 0
      %v734 = vsel %vm702, 1, 0
      %v735 = vsel %vm703, 1, 0
      %v736 = vsel %vm704, 1, 0
      %v737 = vcvt.s32.f32 %v705
      %v738 = vcvt.s32.f32 %v706
      %v739 = vcvt.s32.f32 %v707
      %v740 = vcvt.s32.f32 %v708
      %v741 = vcvt.s32.f32 %v709
      %v742 = vcvt.s32.f32 %v710
      %v743 = vcvt.s32.f32 %v711
      %v744 = vcvt.s32.f32 %v712
      %v745 = vcvt.s32.f32 %v713
      %v746 = vcvt.s32.f32 %v714
      %v747 = vcvt.s32.f32 %v715
      %v748 = vcvt.s32.f32 %v716
      %v749 = vcvt.s32.f32 %v717
      %v750 = vcvt.s32.f32 %v718
      %v751 = vcvt.s32.f32 %v719
      %v752 = vcvt.s32.f32 %v720
      %v753 = vcvt.s32.f32 %v721
      %v754 = vcvt.s32.f32 %v722
      %v755 = vcvt.s32.f32 %v723
      %v756 = vcvt.s32.f32 %v724
      %v757 = vcvt.s32.f32 %v725
      %v758 = vcvt.s32.f32 %v726
      %v759 = vcvt.s32.f32 %v727
      %v760 = vcvt.s32.f32 %v728
      %v761 = vcvt.s32.f32 %v729
      %v762 = vcvt.s32.f32 %v730
      %v763 = vcvt.s32.f32 %v731
      %v764 = vcvt.s32.f32 %v732
      %v765 = vcvt.s32.f32 %v733
      %v766 = vcvt.s32.f32 %v734
      %v767 = vcvt.s32.f32 %v735
      %v768 = vcvt.s32.f32 %v736
      %v769 = vld [vmem:[%s5] sm:$0x3]
      %v770 = vlaneseq
      %v771 = vshrl.u32 %v770, 7
      %v772 = vadd.s32 %v771, 8
      %v773 = vadd.s32 %v771, 16
      %v774 = vadd.s32 %v771, 24
      %v775 = vadd.s32 %v771, 32
      %v776 = vadd.s32 %v771, 40
      %v777 = vadd.s32 %v771, 48
      %v778 = vadd.s32 %v771, 56
      %v779 = vlaneseq
      %v780 = vshrl.u32 %v779, 7
      %v781 = vsub.s32 0, %v780
      %v782 = vrot.slane %v769, %v781
      %v783 = vlaneseq
      %v784 = vshrl.u32 %v783, 7
      %v785 = vsub.s32 1, %v784
      %v786 = vrot.slane %v769, %v785
      %vm787 = vcmp.eq.s32.totalorder %v782, %v771
      %vm788 = vcmp.eq.s32.totalorder %v786, %v771
      %vm789 = vcmp.eq.s32.totalorder %v782, %v772
      %vm790 = vcmp.eq.s32.totalorder %v786, %v772
      %vm791 = vcmp.eq.s32.totalorder %v782, %v773
      %vm792 = vcmp.eq.s32.totalorder %v786, %v773
      %vm793 = vcmp.eq.s32.totalorder %v782, %v774
      %vm794 = vcmp.eq.s32.totalorder %v786, %v774
      %vm795 = vcmp.eq.s32.totalorder %v782, %v775
      %vm796 = vcmp.eq.s32.totalorder %v786, %v775
      %vm797 = vcmp.eq.s32.totalorder %v782, %v776
      %vm798 = vcmp.eq.s32.totalorder %v786, %v776
      %vm799 = vcmp.eq.s32.totalorder %v782, %v777
      %vm800 = vcmp.eq.s32.totalorder %v786, %v777
      %vm801 = vcmp.eq.s32.totalorder %v782, %v778
      %vm802 = vcmp.eq.s32.totalorder %v786, %v778
      %v803 = vsel %vm787, 1, 0
      %v804 = vsel %vm788, 1, 0
      %v805 = vsel %vm789, 1, 0
      %v806 = vsel %vm790, 1, 0
      %v807 = vsel %vm791, 1, 0
      %v808 = vsel %vm792, 1, 0
      %v809 = vsel %vm793, 1, 0
      %v810 = vsel %vm794, 1, 0
      %v811 = vsel %vm795, 1, 0
      %v812 = vsel %vm796, 1, 0
      %v813 = vsel %vm797, 1, 0
      %v814 = vsel %vm798, 1, 0
      %v815 = vsel %vm799, 1, 0
      %v816 = vsel %vm800, 1, 0
      %v817 = vsel %vm801, 1, 0
      %v818 = vsel %vm802, 1, 0
      %v819 = vcvt.s32.f32 %v803
      %v820 = vcvt.s32.f32 %v804
      %v821 = vcvt.s32.f32 %v805
      %v822 = vcvt.s32.f32 %v806
      %v823 = vcvt.s32.f32 %v807
      %v824 = vcvt.s32.f32 %v808
      %v825 = vcvt.s32.f32 %v809
      %v826 = vcvt.s32.f32 %v810
      %v827 = vcvt.s32.f32 %v811
      %v828 = vcvt.s32.f32 %v812
      %v829 = vcvt.s32.f32 %v813
      %v830 = vcvt.s32.f32 %v814
      %v831 = vcvt.s32.f32 %v815
      %v832 = vcvt.s32.f32 %v816
      %v833 = vcvt.s32.f32 %v817
      %v834 = vcvt.s32.f32 %v818
      %v835 = vld [vmem:[%s2] sm:$0xff]
      %v836 = vld [vmem:[%s2 + $0x8] sm:$0xff]
      %v837 = vld [vmem:[%s2 + $0x10] sm:$0xff]
      %v838 = vld [vmem:[%s2 + $0x18] sm:$0xff]
      %v839 = vld [vmem:[%s2 + $0x20] sm:$0xff]
      %v840 = vld [vmem:[%s2 + $0x28] sm:$0xff]
      %v841 = vld [vmem:[%s2 + $0x30] sm:$0xff]
      %v842 = vld [vmem:[%s2 + $0x38] sm:$0xff]
      %v843 = vld [vmem:[%s2 + $0x40] sm:$0xff]
      %v844 = vld [vmem:[%s2 + $0x48] sm:$0xff]
      %v845 = vld [vmem:[%s2 + $0x50] sm:$0xff]
      %v846 = vld [vmem:[%s2 + $0x58] sm:$0xff]
      %v847 = vld [vmem:[%s2 + $0x60] sm:$0xff]
      %v848 = vld [vmem:[%s2 + $0x68] sm:$0xff]
      %v849 = vld [vmem:[%s2 + $0x70] sm:$0xff]
      %v850 = vld [vmem:[%s2 + $0x78] sm:$0xff]
      %v851 = vld [vmem:[%s2 + $0x80] sm:$0xff]
      %v852 = vld [vmem:[%s2 + $0x88] sm:$0xff]
      %v853 = vld [vmem:[%s2 + $0x90] sm:$0xff]
      %v854 = vld [vmem:[%s2 + $0x98] sm:$0xff]
      %v855 = vld [vmem:[%s2 + $0xa0] sm:$0xff]
      %v856 = vld [vmem:[%s2 + $0xa8] sm:$0xff]
      %v857 = vld [vmem:[%s2 + $0xb0] sm:$0xff]
      %v858 = vld [vmem:[%s2 + $0xb8] sm:$0xff]
      %v859 = vld [vmem:[%s2 + $0xc0] sm:$0xff]
      %v860 = vld [vmem:[%s2 + $0xc8] sm:$0xff]
      %v861 = vld [vmem:[%s2 + $0xd0] sm:$0xff]
      %v862 = vld [vmem:[%s2 + $0xd8] sm:$0xff]
      %v863 = vld [vmem:[%s2 + $0xe0] sm:$0xff]
      %v864 = vld [vmem:[%s2 + $0xe8] sm:$0xff]
      %v865 = vld [vmem:[%s2 + $0xf0] sm:$0xff]
      %v866 = vld [vmem:[%s2 + $0xf8] sm:$0xff]
      %v867 = vmul.f32 %v835, %v835
      %v868 = vmul.f32 %v836, %v836
      %v869 = vmul.f32 %v837, %v837
      %v870 = vmul.f32 %v838, %v838
      %v871 = vmul.f32 %v839, %v839
      %v872 = vmul.f32 %v840, %v840
      %v873 = vmul.f32 %v841, %v841
      %v874 = vmul.f32 %v842, %v842
      %v875 = vmul.f32 %v843, %v843
      %v876 = vmul.f32 %v844, %v844
      %v877 = vmul.f32 %v845, %v845
      %v878 = vmul.f32 %v846, %v846
      %v879 = vmul.f32 %v847, %v847
      %v880 = vmul.f32 %v848, %v848
      %v881 = vmul.f32 %v849, %v849
      %v882 = vmul.f32 %v850, %v850
      %v883 = vmul.f32 %v851, %v851
      %v884 = vmul.f32 %v852, %v852
      %v885 = vmul.f32 %v853, %v853
      %v886 = vmul.f32 %v854, %v854
      %v887 = vmul.f32 %v855, %v855
      %v888 = vmul.f32 %v856, %v856
      %v889 = vmul.f32 %v857, %v857
      %v890 = vmul.f32 %v858, %v858
      %v891 = vmul.f32 %v859, %v859
      %v892 = vmul.f32 %v860, %v860
      %v893 = vmul.f32 %v861, %v861
      %v894 = vmul.f32 %v862, %v862
      %v895 = vmul.f32 %v863, %v863
      %v896 = vmul.f32 %v864, %v864
      %v897 = vmul.f32 %v865, %v865
      %v898 = vmul.f32 %v866, %v866
      %v899 = vmul.f32 %v867, %v867
      %v900 = vmul.f32 %v868, %v868
      %v901 = vmul.f32 %v869, %v869
      %v902 = vmul.f32 %v870, %v870
      %v903 = vmul.f32 %v871, %v871
      %v904 = vmul.f32 %v872, %v872
      %v905 = vmul.f32 %v873, %v873
      %v906 = vmul.f32 %v874, %v874
      %v907 = vmul.f32 %v875, %v875
      %v908 = vmul.f32 %v876, %v876
      %v909 = vmul.f32 %v877, %v877
      %v910 = vmul.f32 %v878, %v878
      %v911 = vmul.f32 %v879, %v879
      %v912 = vmul.f32 %v880, %v880
      %v913 = vmul.f32 %v881, %v881
      %v914 = vmul.f32 %v882, %v882
      %v915 = vmul.f32 %v883, %v883
      %v916 = vmul.f32 %v884, %v884
      %v917 = vmul.f32 %v885, %v885
      %v918 = vmul.f32 %v886, %v886
      %v919 = vmul.f32 %v887, %v887
      %v920 = vmul.f32 %v888, %v888
      %v921 = vmul.f32 %v889, %v889
      %v922 = vmul.f32 %v890, %v890
      %v923 = vmul.f32 %v891, %v891
      %v924 = vmul.f32 %v892, %v892
      %v925 = vmul.f32 %v893, %v893
      %v926 = vmul.f32 %v894, %v894
      %v927 = vmul.f32 %v895, %v895
      %v928 = vmul.f32 %v896, %v896
      %v929 = vmul.f32 %v897, %v897
      %v930 = vmul.f32 %v898, %v898
      %v931 = vmul.f32 %v899, %v835
      %v932 = vmul.f32 %v900, %v836
      %v933 = vmul.f32 %v901, %v837
      %v934 = vmul.f32 %v902, %v838
      %v935 = vmul.f32 %v903, %v839
      %v936 = vmul.f32 %v904, %v840
      %v937 = vmul.f32 %v905, %v841
      %v938 = vmul.f32 %v906, %v842
      %v939 = vmul.f32 %v907, %v843
      %v940 = vmul.f32 %v908, %v844
      %v941 = vmul.f32 %v909, %v845
      %v942 = vmul.f32 %v910, %v846
      %v943 = vmul.f32 %v911, %v847
      %v944 = vmul.f32 %v912, %v848
      %v945 = vmul.f32 %v913, %v849
      %v946 = vmul.f32 %v914, %v850
      %v947 = vmul.f32 %v915, %v851
      %v948 = vmul.f32 %v916, %v852
      %v949 = vmul.f32 %v917, %v853
      %v950 = vmul.f32 %v918, %v854
      %v951 = vmul.f32 %v919, %v855
      %v952 = vmul.f32 %v920, %v856
      %v953 = vmul.f32 %v921, %v857
      %v954 = vmul.f32 %v922, %v858
      %v955 = vmul.f32 %v923, %v859
      %v956 = vmul.f32 %v924, %v860
      %v957 = vmul.f32 %v925, %v861
      %v958 = vmul.f32 %v926, %v862
      %v959 = vmul.f32 %v927, %v863
      %v960 = vmul.f32 %v928, %v864
      %v961 = vmul.f32 %v929, %v865
      %v962 = vmul.f32 %v930, %v866
      %v963 = vrcp.pop %v931
      %v964 = vrcp.pop %v932
      %v965 = vrcp.pop %v933
      %v966 = vrcp.pop %v934
      %v967 = vrcp.pop %v935
      %v968 = vrcp.pop %v936
      %v969 = vrcp.pop %v937
      %v970 = vrcp.pop %v938
      %v971 = vrcp.pop %v939
      %v972 = vrcp.pop %v940
      %v973 = vrcp.pop %v941
      %v974 = vrcp.pop %v942
      %v975 = vrcp.pop %v943
      %v976 = vrcp.pop %v944
      %v977 = vrcp.pop %v945
      %v978 = vrcp.pop %v946
      %v979 = vrcp.pop %v947
      %v980 = vrcp.pop %v948
      %v981 = vrcp.pop %v949
      %v982 = vrcp.pop %v950
      %v983 = vrcp.pop %v951
      %v984 = vrcp.pop %v952
      %v985 = vrcp.pop %v953
      %v986 = vrcp.pop %v954
      %v987 = vrcp.pop %v955
      %v988 = vrcp.pop %v956
      %v989 = vrcp.pop %v957
      %v990 = vrcp.pop %v958
      %v991 = vrcp.pop %v959
      %v992 = vrcp.pop %v960
      %v993 = vrcp.pop %v961
      %v994 = vrcp.pop %v962
      %v995 = vmul.f32 %v931, %v963
      %v996 = vmul.f32 %v932, %v964
      %v997 = vmul.f32 %v933, %v965
      %v998 = vmul.f32 %v934, %v966
      %v999 = vmul.f32 %v935, %v967
      %v1000 = vmul.f32 %v936, %v968
      %v1001 = vmul.f32 %v937, %v969
      %v1002 = vmul.f32 %v938, %v970
      %v1003 = vmul.f32 %v939, %v971
      %v1004 = vmul.f32 %v940, %v972
      %v1005 = vmul.f32 %v941, %v973
      %v1006 = vmul.f32 %v942, %v974
      %v1007 = vmul.f32 %v943, %v975
      %v1008 = vmul.f32 %v944, %v976
      %v1009 = vmul.f32 %v945, %v977
      %v1010 = vmul.f32 %v946, %v978
      %v1011 = vmul.f32 %v947, %v979
      %v1012 = vmul.f32 %v948, %v980
      %v1013 = vmul.f32 %v949, %v981
      %v1014 = vmul.f32 %v950, %v982
      %v1015 = vmul.f32 %v951, %v983
      %v1016 = vmul.f32 %v952, %v984
      %v1017 = vmul.f32 %v953, %v985
      %v1018 = vmul.f32 %v954, %v986
      %v1019 = vmul.f32 %v955, %v987
      %v1020 = vmul.f32 %v956, %v988
      %v1021 = vmul.f32 %v957, %v989
      %v1022 = vmul.f32 %v958, %v990
      %v1023 = vmul.f32 %v959, %v991
      %v1024 = vmul.f32 %v960, %v992
      %v1025 = vmul.f32 %v961, %v993
      %v1026 = vmul.f32 %v962, %v994
      %v1027 = vsub.f32 2.0, %v995
      %v1028 = vsub.f32 2.0, %v996
      %v1029 = vsub.f32 2.0, %v997
      %v1030 = vsub.f32 2.0, %v998
      %v1031 = vsub.f32 2.0, %v999
      %v1032 = vsub.f32 2.0, %v1000
      %v1033 = vsub.f32 2.0, %v1001
      %v1034 = vsub.f32 2.0, %v1002
      %v1035 = vsub.f32 2.0, %v1003
      %v1036 = vsub.f32 2.0, %v1004
      %v1037 = vsub.f32 2.0, %v1005
      %v1038 = vsub.f32 2.0, %v1006
      %v1039 = vsub.f32 2.0, %v1007
      %v1040 = vsub.f32 2.0, %v1008
      %v1041 = vsub.f32 2.0, %v1009
      %v1042 = vsub.f32 2.0, %v1010
      %v1043 = vsub.f32 2.0, %v1011
      %v1044 = vsub.f32 2.0, %v1012
      %v1045 = vsub.f32 2.0, %v1013
      %v1046 = vsub.f32 2.0, %v1014
      %v1047 = vsub.f32 2.0, %v1015
      %v1048 = vsub.f32 2.0, %v1016
      %v1049 = vsub.f32 2.0, %v1017
      %v1050 = vsub.f32 2.0, %v1018
      %v1051 = vsub.f32 2.0, %v1019
      %v1052 = vsub.f32 2.0, %v1020
      %v1053 = vsub.f32 2.0, %v1021
      %v1054 = vsub.f32 2.0, %v1022
      %v1055 = vsub.f32 2.0, %v1023
      %v1056 = vsub.f32 2.0, %v1024
      %v1057 = vsub.f32 2.0, %v1025
      %v1058 = vsub.f32 2.0, %v1026
      %v1059 = vmul.f32 %v963, %v1027
      %v1060 = vmul.f32 %v964, %v1028
      %v1061 = vmul.f32 %v965, %v1029
      %v1062 = vmul.f32 %v966, %v1030
      %v1063 = vmul.f32 %v967, %v1031
      %v1064 = vmul.f32 %v968, %v1032
      %v1065 = vmul.f32 %v969, %v1033
      %v1066 = vmul.f32 %v970, %v1034
      %v1067 = vmul.f32 %v971, %v1035
      %v1068 = vmul.f32 %v972, %v1036
      %v1069 = vmul.f32 %v973, %v1037
      %v1070 = vmul.f32 %v974, %v1038
      %v1071 = vmul.f32 %v975, %v1039
      %v1072 = vmul.f32 %v976, %v1040
      %v1073 = vmul.f32 %v977, %v1041
      %v1074 = vmul.f32 %v978, %v1042
      %v1075 = vmul.f32 %v979, %v1043
      %v1076 = vmul.f32 %v980, %v1044
      %v1077 = vmul.f32 %v981, %v1045
      %v1078 = vmul.f32 %v982, %v1046
      %v1079 = vmul.f32 %v983, %v1047
      %v1080 = vmul.f32 %v984, %v1048
      %v1081 = vmul.f32 %v985, %v1049
      %v1082 = vmul.f32 %v986, %v1050
      %v1083 = vmul.f32 %v987, %v1051
      %v1084 = vmul.f32 %v988, %v1052
      %v1085 = vmul.f32 %v989, %v1053
      %v1086 = vmul.f32 %v990, %v1054
      %v1087 = vmul.f32 %v991, %v1055
      %v1088 = vmul.f32 %v992, %v1056
      %v1089 = vmul.f32 %v993, %v1057
      %v1090 = vmul.f32 %v994, %v1058
      %v1091 = vmul.f32 %v867, %v1059
      %v1092 = vmul.f32 %v868, %v1060
      %v1093 = vmul.f32 %v869, %v1061
      %v1094 = vmul.f32 %v870, %v1062
      %v1095 = vmul.f32 %v871, %v1063
      %v1096 = vmul.f32 %v872, %v1064
      %v1097 = vmul.f32 %v873, %v1065
      %v1098 = vmul.f32 %v874, %v1066
      %v1099 = vmul.f32 %v875, %v1067
      %v1100 = vmul.f32 %v876, %v1068
      %v1101 = vmul.f32 %v877, %v1069
      %v1102 = vmul.f32 %v878, %v1070
      %v1103 = vmul.f32 %v879, %v1071
      %v1104 = vmul.f32 %v880, %v1072
      %v1105 = vmul.f32 %v881, %v1073
      %v1106 = vmul.f32 %v882, %v1074
      %v1107 = vmul.f32 %v883, %v1075
      %v1108 = vmul.f32 %v884, %v1076
      %v1109 = vmul.f32 %v885, %v1077
      %v1110 = vmul.f32 %v886, %v1078
      %v1111 = vmul.f32 %v887, %v1079
      %v1112 = vmul.f32 %v888, %v1080
      %v1113 = vmul.f32 %v889, %v1081
      %v1114 = vmul.f32 %v890, %v1082
      %v1115 = vmul.f32 %v891, %v1083
      %v1116 = vmul.f32 %v892, %v1084
      %v1117 = vmul.f32 %v893, %v1085
      %v1118 = vmul.f32 %v894, %v1086
      %v1119 = vmul.f32 %v895, %v1087
      %v1120 = vmul.f32 %v896, %v1088
      %v1121 = vmul.f32 %v897, %v1089
      %v1122 = vmul.f32 %v898, %v1090
      %v1123 = vmul.f32 %v1059, 3.0
      %v1124 = vmul.f32 %v1060, 3.0
      %v1125 = vmul.f32 %v1061, 3.0
      %v1126 = vmul.f32 %v1062, 3.0
      %v1127 = vmul.f32 %v1063, 3.0
      %v1128 = vmul.f32 %v1064, 3.0
      %v1129 = vmul.f32 %v1065, 3.0
      %v1130 = vmul.f32 %v1066, 3.0
      %v1131 = vmul.f32 %v1067, 3.0
      %v1132 = vmul.f32 %v1068, 3.0
      %v1133 = vmul.f32 %v1069, 3.0
      %v1134 = vmul.f32 %v1070, 3.0
      %v1135 = vmul.f32 %v1071, 3.0
      %v1136 = vmul.f32 %v1072, 3.0
      %v1137 = vmul.f32 %v1073, 3.0
      %v1138 = vmul.f32 %v1074, 3.0
      %v1139 = vmul.f32 %v1075, 3.0
      %v1140 = vmul.f32 %v1076, 3.0
      %v1141 = vmul.f32 %v1077, 3.0
      %v1142 = vmul.f32 %v1078, 3.0
      %v1143 = vmul.f32 %v1079, 3.0
      %v1144 = vmul.f32 %v1080, 3.0
      %v1145 = vmul.f32 %v1081, 3.0
      %v1146 = vmul.f32 %v1082, 3.0
      %v1147 = vmul.f32 %v1083, 3.0
      %v1148 = vmul.f32 %v1084, 3.0
      %v1149 = vmul.f32 %v1085, 3.0
      %v1150 = vmul.f32 %v1086, 3.0
      %v1151 = vmul.f32 %v1087, 3.0
      %v1152 = vmul.f32 %v1088, 3.0
      %v1153 = vmul.f32 %v1089, 3.0
      %v1154 = vmul.f32 %v1090, 3.0
      %v1155 = vld [vmem:[%s4] sm:$0xff]
      %v1156 = vld [vmem:[%s4 + $0x8] sm:$0xff]
      %v1157 = vld [vmem:[%s4 + $0x10] sm:$0xff]
      %v1158 = vld [vmem:[%s4 + $0x18] sm:$0xff]
      %v1159 = vld [vmem:[%s4 + $0x20] sm:$0xff]
      %v1160 = vld [vmem:[%s4 + $0x28] sm:$0xff]
      %v1161 = vld [vmem:[%s4 + $0x30] sm:$0xff]
      %v1162 = vld [vmem:[%s4 + $0x38] sm:$0xff]
      %v1163 = vld [vmem:[%s4 + $0x40] sm:$0xff]
      %v1164 = vld [vmem:[%s4 + $0x48] sm:$0xff]
      %v1165 = vld [vmem:[%s4 + $0x50] sm:$0xff]
      %v1166 = vld [vmem:[%s4 + $0x58] sm:$0xff]
      %v1167 = vld [vmem:[%s4 + $0x60] sm:$0xff]
      %v1168 = vld [vmem:[%s4 + $0x68] sm:$0xff]
      %v1169 = vld [vmem:[%s4 + $0x70] sm:$0xff]
      %v1170 = vld [vmem:[%s4 + $0x78] sm:$0xff]
      %v1171 = vld [vmem:[%s4 + $0x80] sm:$0xff]
      %v1172 = vld [vmem:[%s4 + $0x88] sm:$0xff]
      %v1173 = vld [vmem:[%s4 + $0x90] sm:$0xff]
      %v1174 = vld [vmem:[%s4 + $0x98] sm:$0xff]
      %v1175 = vld [vmem:[%s4 + $0xa0] sm:$0xff]
      %v1176 = vld [vmem:[%s4 + $0xa8] sm:$0xff]
      %v1177 = vld [vmem:[%s4 + $0xb0] sm:$0xff]
      %v1178 = vld [vmem:[%s4 + $0xb8] sm:$0xff]
      %v1179 = vld [vmem:[%s4 + $0xc0] sm:$0xff]
      %v1180 = vld [vmem:[%s4 + $0xc8] sm:$0xff]
      %v1181 = vld [vmem:[%s4 + $0xd0] sm:$0xff]
      %v1182 = vld [vmem:[%s4 + $0xd8] sm:$0xff]
      %v1183 = vld [vmem:[%s4 + $0xe0] sm:$0xff]
      %v1184 = vld [vmem:[%s4 + $0xe8] sm:$0xff]
      %v1185 = vld [vmem:[%s4 + $0xf0] sm:$0xff]
      %v1186 = vld [vmem:[%s4 + $0xf8] sm:$0xff]
      %v1187 = vld [vmem:[%s3] sm:$0xff]
      %v1188 = vld [vmem:[%s3 + $0x8] sm:$0xff]
      %v1189 = vld [vmem:[%s3 + $0x10] sm:$0xff]
      %v1190 = vld [vmem:[%s3 + $0x18] sm:$0xff]
      %v1191 = vld [vmem:[%s3 + $0x20] sm:$0xff]
      %v1192 = vld [vmem:[%s3 + $0x28] sm:$0xff]
      %v1193 = vld [vmem:[%s3 + $0x30] sm:$0xff]
      %v1194 = vld [vmem:[%s3 + $0x38] sm:$0xff]
      %v1195 = vld [vmem:[%s3 + $0x40] sm:$0xff]
      %v1196 = vld [vmem:[%s3 + $0x48] sm:$0xff]
      %v1197 = vld [vmem:[%s3 + $0x50] sm:$0xff]
      %v1198 = vld [vmem:[%s3 + $0x58] sm:$0xff]
      %v1199 = vld [vmem:[%s3 + $0x60] sm:$0xff]
      %v1200 = vld [vmem:[%s3 + $0x68] sm:$0xff]
      %v1201 = vld [vmem:[%s3 + $0x70] sm:$0xff]
      %v1202 = vld [vmem:[%s3 + $0x78] sm:$0xff]
      %v1203 = vld [vmem:[%s3 + $0x80] sm:$0xff]
      %v1204 = vld [vmem:[%s3 + $0x88] sm:$0xff]
      %v1205 = vld [vmem:[%s3 + $0x90] sm:$0xff]
      %v1206 = vld [vmem:[%s3 + $0x98] sm:$0xff]
      %v1207 = vld [vmem:[%s3 + $0xa0] sm:$0xff]
      %v1208 = vld [vmem:[%s3 + $0xa8] sm:$0xff]
      %v1209 = vld [vmem:[%s3 + $0xb0] sm:$0xff]
      %v1210 = vld [vmem:[%s3 + $0xb8] sm:$0xff]
      %v1211 = vld [vmem:[%s3 + $0xc0] sm:$0xff]
      %v1212 = vld [vmem:[%s3 + $0xc8] sm:$0xff]
      %v1213 = vld [vmem:[%s3 + $0xd0] sm:$0xff]
      %v1214 = vld [vmem:[%s3 + $0xd8] sm:$0xff]
      %v1215 = vld [vmem:[%s3 + $0xe0] sm:$0xff]
      %v1216 = vld [vmem:[%s3 + $0xe8] sm:$0xff]
      %v1217 = vld [vmem:[%s3 + $0xf0] sm:$0xff]
      %v1218 = vld [vmem:[%s3 + $0xf8] sm:$0xff]
      %1220 = vset.pattern.permute.xlu0 0
      %1221 = vperm.xlu0 %1220, %v1187
      %v1222 = vpop.permute.xlu0 %1221
      %1225 = vset.pattern.permute.xlu0 0
      %1226 = vperm.xlu0 %1225, %v1188
      %v1227 = vpop.permute.xlu0 %1226
      %1230 = vset.pattern.permute.xlu0 0
      %1231 = vperm.xlu0 %1230, %v1189
      %v1232 = vpop.permute.xlu0 %1231
      %1235 = vset.pattern.permute.xlu0 0
      %1236 = vperm.xlu0 %1235, %v1190
      %v1237 = vpop.permute.xlu0 %1236
      %1240 = vset.pattern.permute.xlu0 0
      %1241 = vperm.xlu0 %1240, %v1191
      %v1242 = vpop.permute.xlu0 %1241
      %1245 = vset.pattern.permute.xlu0 0
      %1246 = vperm.xlu0 %1245, %v1192
      %v1247 = vpop.permute.xlu0 %1246
      %1250 = vset.pattern.permute.xlu0 0
      %1251 = vperm.xlu0 %1250, %v1193
      %v1252 = vpop.permute.xlu0 %1251
      %1255 = vset.pattern.permute.xlu0 0
      %1256 = vperm.xlu0 %1255, %v1194
      %v1257 = vpop.permute.xlu0 %1256
      %1260 = vset.pattern.permute.xlu0 0
      %1261 = vperm.xlu0 %1260, %v1195
      %v1262 = vpop.permute.xlu0 %1261
      %1265 = vset.pattern.permute.xlu0 0
      %1266 = vperm.xlu0 %1265, %v1196
      %v1267 = vpop.permute.xlu0 %1266
      %1270 = vset.pattern.permute.xlu0 0
      %1271 = vperm.xlu0 %1270, %v1197
      %v1272 = vpop.permute.xlu0 %1271
      %1275 = vset.pattern.permute.xlu0 0
      %1276 = vperm.xlu0 %1275, %v1198
      %v1277 = vpop.permute.xlu0 %1276
      %1280 = vset.pattern.permute.xlu0 0
      %1281 = vperm.xlu0 %1280, %v1199
      %v1282 = vpop.permute.xlu0 %1281
      %1285 = vset.pattern.permute.xlu0 0
      %1286 = vperm.xlu0 %1285, %v1200
      %v1287 = vpop.permute.xlu0 %1286
      %1290 = vset.pattern.permute.xlu0 0
      %1291 = vperm.xlu0 %1290, %v1201
      %v1292 = vpop.permute.xlu0 %1291
      %1295 = vset.pattern.permute.xlu0 0
      %1296 = vperm.xlu0 %1295, %v1202
      %v1297 = vpop.permute.xlu0 %1296
      %1300 = vset.pattern.permute.xlu0 0
      %1301 = vperm.xlu0 %1300, %v1203
      %v1302 = vpop.permute.xlu0 %1301
      %1305 = vset.pattern.permute.xlu0 0
      %1306 = vperm.xlu0 %1305, %v1204
      %v1307 = vpop.permute.xlu0 %1306
      %1310 = vset.pattern.permute.xlu0 0
      %1311 = vperm.xlu0 %1310, %v1205
      %v1312 = vpop.permute.xlu0 %1311
      %1315 = vset.pattern.permute.xlu0 0
      %1316 = vperm.xlu0 %1315, %v1206
      %v1317 = vpop.permute.xlu0 %1316
      %1320 = vset.pattern.permute.xlu0 0
      %1321 = vperm.xlu0 %1320, %v1207
      %v1322 = vpop.permute.xlu0 %1321
      %1325 = vset.pattern.permute.xlu0 0
      %1326 = vperm.xlu0 %1325, %v1208
      %v1327 = vpop.permute.xlu0 %1326
      %1330 = vset.pattern.permute.xlu0 0
      %1331 = vperm.xlu0 %1330, %v1209
      %v1332 = vpop.permute.xlu0 %1331
      %1335 = vset.pattern.permute.xlu0 0
      %1336 = vperm.xlu0 %1335, %v1210
      %v1337 = vpop.permute.xlu0 %1336
      %1340 = vset.pattern.permute.xlu0 0
      %1341 = vperm.xlu0 %1340, %v1211
      %v1342 = vpop.permute.xlu0 %1341
      %1345 = vset.pattern.permute.xlu0 0
      %1346 = vperm.xlu0 %1345, %v1212
      %v1347 = vpop.permute.xlu0 %1346
      %1350 = vset.pattern.permute.xlu0 0
      %1351 = vperm.xlu0 %1350, %v1213
      %v1352 = vpop.permute.xlu0 %1351
      %1355 = vset.pattern.permute.xlu0 0
      %1356 = vperm.xlu0 %1355, %v1214
      %v1357 = vpop.permute.xlu0 %1356
      %1360 = vset.pattern.permute.xlu0 0
      %1361 = vperm.xlu0 %1360, %v1215
      %v1362 = vpop.permute.xlu0 %1361
      %1365 = vset.pattern.permute.xlu0 0
      %1366 = vperm.xlu0 %1365, %v1216
      %v1367 = vpop.permute.xlu0 %1366
      %1370 = vset.pattern.permute.xlu0 0
      %1371 = vperm.xlu0 %1370, %v1217
      %v1372 = vpop.permute.xlu0 %1371
      %1375 = vset.pattern.permute.xlu0 0
      %1376 = vperm.xlu0 %1375, %v1218
      %v1377 = vpop.permute.xlu0 %1376
      %s1379 = scalar_lea.vmem %s3, 256
      %v1380 = vld [vmem:[%s1379] sm:$0xff]
      %v1381 = vld [vmem:[%s1379 + $0x8] sm:$0xff]
      %v1382 = vld [vmem:[%s1379 + $0x10] sm:$0xff]
      %v1383 = vld [vmem:[%s1379 + $0x18] sm:$0xff]
      %v1384 = vld [vmem:[%s1379 + $0x20] sm:$0xff]
      %v1385 = vld [vmem:[%s1379 + $0x28] sm:$0xff]
      %v1386 = vld [vmem:[%s1379 + $0x30] sm:$0xff]
      %v1387 = vld [vmem:[%s1379 + $0x38] sm:$0xff]
      %v1388 = vld [vmem:[%s1379 + $0x40] sm:$0xff]
      %v1389 = vld [vmem:[%s1379 + $0x48] sm:$0xff]
      %v1390 = vld [vmem:[%s1379 + $0x50] sm:$0xff]
      %v1391 = vld [vmem:[%s1379 + $0x58] sm:$0xff]
      %v1392 = vld [vmem:[%s1379 + $0x60] sm:$0xff]
      %v1393 = vld [vmem:[%s1379 + $0x68] sm:$0xff]
      %v1394 = vld [vmem:[%s1379 + $0x70] sm:$0xff]
      %v1395 = vld [vmem:[%s1379 + $0x78] sm:$0xff]
      %v1396 = vld [vmem:[%s1379 + $0x80] sm:$0xff]
      %v1397 = vld [vmem:[%s1379 + $0x88] sm:$0xff]
      %v1398 = vld [vmem:[%s1379 + $0x90] sm:$0xff]
      %v1399 = vld [vmem:[%s1379 + $0x98] sm:$0xff]
      %v1400 = vld [vmem:[%s1379 + $0xa0] sm:$0xff]
      %v1401 = vld [vmem:[%s1379 + $0xa8] sm:$0xff]
      %v1402 = vld [vmem:[%s1379 + $0xb0] sm:$0xff]
      %v1403 = vld [vmem:[%s1379 + $0xb8] sm:$0xff]
      %v1404 = vld [vmem:[%s1379 + $0xc0] sm:$0xff]
      %v1405 = vld [vmem:[%s1379 + $0xc8] sm:$0xff]
      %v1406 = vld [vmem:[%s1379 + $0xd0] sm:$0xff]
      %v1407 = vld [vmem:[%s1379 + $0xd8] sm:$0xff]
      %v1408 = vld [vmem:[%s1379 + $0xe0] sm:$0xff]
      %v1409 = vld [vmem:[%s1379 + $0xe8] sm:$0xff]
      %v1410 = vld [vmem:[%s1379 + $0xf0] sm:$0xff]
      %v1411 = vld [vmem:[%s1379 + $0xf8] sm:$0xff]
      %1413 = vset.pattern.permute.xlu0 0
      %1414 = vperm.xlu0 %1413, %v1380
      %v1415 = vpop.permute.xlu0 %1414
      %1418 = vset.pattern.permute.xlu0 0
      %1419 = vperm.xlu0 %1418, %v1381
      %v1420 = vpop.permute.xlu0 %1419
      %1423 = vset.pattern.permute.xlu0 0
      %1424 = vperm.xlu0 %1423, %v1382
      %v1425 = vpop.permute.xlu0 %1424
      %1428 = vset.pattern.permute.xlu0 0
      %1429 = vperm.xlu0 %1428, %v1383
      %v1430 = vpop.permute.xlu0 %1429
      %1433 = vset.pattern.permute.xlu0 0
      %1434 = vperm.xlu0 %1433, %v1384
      %v1435 = vpop.permute.xlu0 %1434
      %1438 = vset.pattern.permute.xlu0 0
      %1439 = vperm.xlu0 %1438, %v1385
      %v1440 = vpop.permute.xlu0 %1439
      %1443 = vset.pattern.permute.xlu0 0
      %1444 = vperm.xlu0 %1443, %v1386
      %v1445 = vpop.permute.xlu0 %1444
      %1448 = vset.pattern.permute.xlu0 0
      %1449 = vperm.xlu0 %1448, %v1387
      %v1450 = vpop.permute.xlu0 %1449
      %1453 = vset.pattern.permute.xlu0 0
      %1454 = vperm.xlu0 %1453, %v1388
      %v1455 = vpop.permute.xlu0 %1454
      %1458 = vset.pattern.permute.xlu0 0
      %1459 = vperm.xlu0 %1458, %v1389
      %v1460 = vpop.permute.xlu0 %1459
      %1463 = vset.pattern.permute.xlu0 0
      %1464 = vperm.xlu0 %1463, %v1390
      %v1465 = vpop.permute.xlu0 %1464
      %1468 = vset.pattern.permute.xlu0 0
      %1469 = vperm.xlu0 %1468, %v1391
      %v1470 = vpop.permute.xlu0 %1469
      %1473 = vset.pattern.permute.xlu0 0
      %1474 = vperm.xlu0 %1473, %v1392
      %v1475 = vpop.permute.xlu0 %1474
      %1478 = vset.pattern.permute.xlu0 0
      %1479 = vperm.xlu0 %1478, %v1393
      %v1480 = vpop.permute.xlu0 %1479
      %1483 = vset.pattern.permute.xlu0 0
      %1484 = vperm.xlu0 %1483, %v1394
      %v1485 = vpop.permute.xlu0 %1484
      %1488 = vset.pattern.permute.xlu0 0
      %1489 = vperm.xlu0 %1488, %v1395
      %v1490 = vpop.permute.xlu0 %1489
      %1493 = vset.pattern.permute.xlu0 0
      %1494 = vperm.xlu0 %1493, %v1396
      %v1495 = vpop.permute.xlu0 %1494
      %1498 = vset.pattern.permute.xlu0 0
      %1499 = vperm.xlu0 %1498, %v1397
      %v1500 = vpop.permute.xlu0 %1499
      %1503 = vset.pattern.permute.xlu0 0
      %1504 = vperm.xlu0 %1503, %v1398
      %v1505 = vpop.permute.xlu0 %1504
      %1508 = vset.pattern.permute.xlu0 0
      %1509 = vperm.xlu0 %1508, %v1399
      %v1510 = vpop.permute.xlu0 %1509
      %1513 = vset.pattern.permute.xlu0 0
      %1514 = vperm.xlu0 %1513, %v1400
      %v1515 = vpop.permute.xlu0 %1514
      %1518 = vset.pattern.permute.xlu0 0
      %1519 = vperm.xlu0 %1518, %v1401
      %v1520 = vpop.permute.xlu0 %1519
      %1523 = vset.pattern.permute.xlu0 0
      %1524 = vperm.xlu0 %1523, %v1402
      %v1525 = vpop.permute.xlu0 %1524
      %1528 = vset.pattern.permute.xlu0 0
      %1529 = vperm.xlu0 %1528, %v1403
      %v1530 = vpop.permute.xlu0 %1529
      %1533 = vset.pattern.permute.xlu0 0
      %1534 = vperm.xlu0 %1533, %v1404
      %v1535 = vpop.permute.xlu0 %1534
      %1538 = vset.pattern.permute.xlu0 0
      %1539 = vperm.xlu0 %1538, %v1405
      %v1540 = vpop.permute.xlu0 %1539
      %1543 = vset.pattern.permute.xlu0 0
      %1544 = vperm.xlu0 %1543, %v1406
      %v1545 = vpop.permute.xlu0 %1544
      %1548 = vset.pattern.permute.xlu0 0
      %1549 = vperm.xlu0 %1548, %v1407
      %v1550 = vpop.permute.xlu0 %1549
      %1553 = vset.pattern.permute.xlu0 0
      %1554 = vperm.xlu0 %1553, %v1408
      %v1555 = vpop.permute.xlu0 %1554
      %1558 = vset.pattern.permute.xlu0 0
      %1559 = vperm.xlu0 %1558, %v1409
      %v1560 = vpop.permute.xlu0 %1559
      %1563 = vset.pattern.permute.xlu0 0
      %1564 = vperm.xlu0 %1563, %v1410
      %v1565 = vpop.permute.xlu0 %1564
      %1568 = vset.pattern.permute.xlu0 0
      %1569 = vperm.xlu0 %1568, %v1411
      %v1570 = vpop.permute.xlu0 %1569
      %s1572 = scalar_lea.vmem %s3, 512
      %v1573 = vld [vmem:[%s1572] sm:$0xff]
      %v1574 = vld [vmem:[%s1572 + $0x8] sm:$0xff]
      %v1575 = vld [vmem:[%s1572 + $0x10] sm:$0xff]
      %v1576 = vld [vmem:[%s1572 + $0x18] sm:$0xff]
      %v1577 = vld [vmem:[%s1572 + $0x20] sm:$0xff]
      %v1578 = vld [vmem:[%s1572 + $0x28] sm:$0xff]
      %v1579 = vld [vmem:[%s1572 + $0x30] sm:$0xff]
      %v1580 = vld [vmem:[%s1572 + $0x38] sm:$0xff]
      %v1581 = vld [vmem:[%s1572 + $0x40] sm:$0xff]
      %v1582 = vld [vmem:[%s1572 + $0x48] sm:$0xff]
      %v1583 = vld [vmem:[%s1572 + $0x50] sm:$0xff]
      %v1584 = vld [vmem:[%s1572 + $0x58] sm:$0xff]
      %v1585 = vld [vmem:[%s1572 + $0x60] sm:$0xff]
      %v1586 = vld [vmem:[%s1572 + $0x68] sm:$0xff]
      %v1587 = vld [vmem:[%s1572 + $0x70] sm:$0xff]
      %v1588 = vld [vmem:[%s1572 + $0x78] sm:$0xff]
      %v1589 = vld [vmem:[%s1572 + $0x80] sm:$0xff]
      %v1590 = vld [vmem:[%s1572 + $0x88] sm:$0xff]
      %v1591 = vld [vmem:[%s1572 + $0x90] sm:$0xff]
      %v1592 = vld [vmem:[%s1572 + $0x98] sm:$0xff]
      %v1593 = vld [vmem:[%s1572 + $0xa0] sm:$0xff]
      %v1594 = vld [vmem:[%s1572 + $0xa8] sm:$0xff]
      %v1595 = vld [vmem:[%s1572 + $0xb0] sm:$0xff]
      %v1596 = vld [vmem:[%s1572 + $0xb8] sm:$0xff]
      %v1597 = vld [vmem:[%s1572 + $0xc0] sm:$0xff]
      %v1598 = vld [vmem:[%s1572 + $0xc8] sm:$0xff]
      %v1599 = vld [vmem:[%s1572 + $0xd0] sm:$0xff]
      %v1600 = vld [vmem:[%s1572 + $0xd8] sm:$0xff]
      %v1601 = vld [vmem:[%s1572 + $0xe0] sm:$0xff]
      %v1602 = vld [vmem:[%s1572 + $0xe8] sm:$0xff]
      %v1603 = vld [vmem:[%s1572 + $0xf0] sm:$0xff]
      %v1604 = vld [vmem:[%s1572 + $0xf8] sm:$0xff]
      %1606 = vset.pattern.permute.xlu0 0
      %1607 = vperm.xlu0 %1606, %v1573
      %v1608 = vpop.permute.xlu0 %1607
      %1611 = vset.pattern.permute.xlu0 0
      %1612 = vperm.xlu0 %1611, %v1574
      %v1613 = vpop.permute.xlu0 %1612
      %1616 = vset.pattern.permute.xlu0 0
      %1617 = vperm.xlu0 %1616, %v1575
      %v1618 = vpop.permute.xlu0 %1617
      %1621 = vset.pattern.permute.xlu0 0
      %1622 = vperm.xlu0 %1621, %v1576
      %v1623 = vpop.permute.xlu0 %1622
      %1626 = vset.pattern.permute.xlu0 0
      %1627 = vperm.xlu0 %1626, %v1577
      %v1628 = vpop.permute.xlu0 %1627
      %1631 = vset.pattern.permute.xlu0 0
      %1632 = vperm.xlu0 %1631, %v1578
      %v1633 = vpop.permute.xlu0 %1632
      %1636 = vset.pattern.permute.xlu0 0
      %1637 = vperm.xlu0 %1636, %v1579
      %v1638 = vpop.permute.xlu0 %1637
      %1641 = vset.pattern.permute.xlu0 0
      %1642 = vperm.xlu0 %1641, %v1580
      %v1643 = vpop.permute.xlu0 %1642
      %1646 = vset.pattern.permute.xlu0 0
      %1647 = vperm.xlu0 %1646, %v1581
      %v1648 = vpop.permute.xlu0 %1647
      %1651 = vset.pattern.permute.xlu0 0
      %1652 = vperm.xlu0 %1651, %v1582
      %v1653 = vpop.permute.xlu0 %1652
      %1656 = vset.pattern.permute.xlu0 0
      %1657 = vperm.xlu0 %1656, %v1583
      %v1658 = vpop.permute.xlu0 %1657
      %1661 = vset.pattern.permute.xlu0 0
      %1662 = vperm.xlu0 %1661, %v1584
      %v1663 = vpop.permute.xlu0 %1662
      %1666 = vset.pattern.permute.xlu0 0
      %1667 = vperm.xlu0 %1666, %v1585
      %v1668 = vpop.permute.xlu0 %1667
      %1671 = vset.pattern.permute.xlu0 0
      %1672 = vperm.xlu0 %1671, %v1586
      %v1673 = vpop.permute.xlu0 %1672
      %1676 = vset.pattern.permute.xlu0 0
      %1677 = vperm.xlu0 %1676, %v1587
      %v1678 = vpop.permute.xlu0 %1677
      %1681 = vset.pattern.permute.xlu0 0
      %1682 = vperm.xlu0 %1681, %v1588
      %v1683 = vpop.permute.xlu0 %1682
      %1686 = vset.pattern.permute.xlu0 0
      %1687 = vperm.xlu0 %1686, %v1589
      %v1688 = vpop.permute.xlu0 %1687
      %1691 = vset.pattern.permute.xlu0 0
      %1692 = vperm.xlu0 %1691, %v1590
      %v1693 = vpop.permute.xlu0 %1692
      %1696 = vset.pattern.permute.xlu0 0
      %1697 = vperm.xlu0 %1696, %v1591
      %v1698 = vpop.permute.xlu0 %1697
      %1701 = vset.pattern.permute.xlu0 0
      %1702 = vperm.xlu0 %1701, %v1592
      %v1703 = vpop.permute.xlu0 %1702
      %1706 = vset.pattern.permute.xlu0 0
      %1707 = vperm.xlu0 %1706, %v1593
      %v1708 = vpop.permute.xlu0 %1707
      %1711 = vset.pattern.permute.xlu0 0
      %1712 = vperm.xlu0 %1711, %v1594
      %v1713 = vpop.permute.xlu0 %1712
      %1716 = vset.pattern.permute.xlu0 0
      %1717 = vperm.xlu0 %1716, %v1595
      %v1718 = vpop.permute.xlu0 %1717
      %1721 = vset.pattern.permute.xlu0 0
      %1722 = vperm.xlu0 %1721, %v1596
      %v1723 = vpop.permute.xlu0 %1722
      %1726 = vset.pattern.permute.xlu0 0
      %1727 = vperm.xlu0 %1726, %v1597
      %v1728 = vpop.permute.xlu0 %1727
      %1731 = vset.pattern.permute.xlu0 0
      %1732 = vperm.xlu0 %1731, %v1598
      %v1733 = vpop.permute.xlu0 %1732
      %1736 = vset.pattern.permute.xlu0 0
      %1737 = vperm.xlu0 %1736, %v1599
      %v1738 = vpop.permute.xlu0 %1737
      %1741 = vset.pattern.permute.xlu0 0
      %1742 = vperm.xlu0 %1741, %v1600
      %v1743 = vpop.permute.xlu0 %1742
      %1746 = vset.pattern.permute.xlu0 0
      %1747 = vperm.xlu0 %1746, %v1601
      %v1748 = vpop.permute.xlu0 %1747
      %1751 = vset.pattern.permute.xlu0 0
      %1752 = vperm.xlu0 %1751, %v1602
      %v1753 = vpop.permute.xlu0 %1752
      %1756 = vset.pattern.permute.xlu0 0
      %1757 = vperm.xlu0 %1756, %v1603
      %v1758 = vpop.permute.xlu0 %1757
      %1761 = vset.pattern.permute.xlu0 0
      %1762 = vperm.xlu0 %1761, %v1604
      %v1763 = vpop.permute.xlu0 %1762
      %v1765 = vld [vmem:[%s1] sm:$0xff]
      %v1766 = vld [vmem:[%s1 + $0x8] sm:$0xff]
      %v1767 = vld [vmem:[%s1 + $0x10] sm:$0xff]
      %v1768 = vld [vmem:[%s1 + $0x18] sm:$0xff]
      %v1769 = vld [vmem:[%s1 + $0x20] sm:$0xff]
      %v1770 = vld [vmem:[%s1 + $0x28] sm:$0xff]
      %v1771 = vld [vmem:[%s1 + $0x30] sm:$0xff]
      %v1772 = vld [vmem:[%s1 + $0x38] sm:$0xff]
      %v1773 = vld [vmem:[%s1 + $0x40] sm:$0xff]
      %v1774 = vld [vmem:[%s1 + $0x48] sm:$0xff]
      %v1775 = vld [vmem:[%s1 + $0x50] sm:$0xff]
      %v1776 = vld [vmem:[%s1 + $0x58] sm:$0xff]
      %v1777 = vld [vmem:[%s1 + $0x60] sm:$0xff]
      %v1778 = vld [vmem:[%s1 + $0x68] sm:$0xff]
      %v1779 = vld [vmem:[%s1 + $0x70] sm:$0xff]
      %v1780 = vld [vmem:[%s1 + $0x78] sm:$0xff]
      %v1781 = vld [vmem:[%s1 + $0x80] sm:$0xff]
      %v1782 = vld [vmem:[%s1 + $0x88] sm:$0xff]
      %v1783 = vld [vmem:[%s1 + $0x90] sm:$0xff]
      %v1784 = vld [vmem:[%s1 + $0x98] sm:$0xff]
      %v1785 = vld [vmem:[%s1 + $0xa0] sm:$0xff]
      %v1786 = vld [vmem:[%s1 + $0xa8] sm:$0xff]
      %v1787 = vld [vmem:[%s1 + $0xb0] sm:$0xff]
      %v1788 = vld [vmem:[%s1 + $0xb8] sm:$0xff]
      %v1789 = vld [vmem:[%s1 + $0xc0] sm:$0xff]
      %v1790 = vld [vmem:[%s1 + $0xc8] sm:$0xff]
      %v1791 = vld [vmem:[%s1 + $0xd0] sm:$0xff]
      %v1792 = vld [vmem:[%s1 + $0xd8] sm:$0xff]
      %v1793 = vld [vmem:[%s1 + $0xe0] sm:$0xff]
      %v1794 = vld [vmem:[%s1 + $0xe8] sm:$0xff]
      %v1795 = vld [vmem:[%s1 + $0xf0] sm:$0xff]
      %v1796 = vld [vmem:[%s1 + $0xf8] sm:$0xff]
      %v1797 = vld [vmem:[%s518] sm:$0xff]
      %v1798 = vld [vmem:[%s518 + $0x8] sm:$0xff]
      %v1799 = vld [vmem:[%s518 + $0x10] sm:$0xff]
      %v1800 = vld [vmem:[%s518 + $0x18] sm:$0xff]
      %v1801 = vld [vmem:[%s521] sm:$0x1]
      %v1803 = vlaneseq
      %v1804 = vshrl.u32 %v1803, 7
      %v1805 = vsub.s32 0, %v1804
      %v1806 = vrot.slane %v1801, %v1805
      %vm1808 = vcmask 261120
      %v1810 = vsel %vm1808, %v1765, 0
      %v1813 = vsel %vm1808, %v1766, 0
      %v1816 = vsel %vm1808, %v1767, 0
      %v1819 = vsel %vm1808, %v1768, 0
      %v1822 = vsel %vm1808, %v1769, 0
      %v1825 = vsel %vm1808, %v1770, 0
      %v1828 = vsel %vm1808, %v1771, 0
      %v1831 = vsel %vm1808, %v1772, 0
      %v1834 = vsel %vm1808, %v1773, 0
      %v1837 = vsel %vm1808, %v1774, 0
      %v1840 = vsel %vm1808, %v1775, 0
      %v1843 = vsel %vm1808, %v1776, 0
      %v1846 = vsel %vm1808, %v1777, 0
      %v1849 = vsel %vm1808, %v1778, 0
      %v1852 = vsel %vm1808, %v1779, 0
      %v1855 = vsel %vm1808, %v1780, 0
      %v1858 = vsel %vm1808, %v1781, 0
      %v1861 = vsel %vm1808, %v1782, 0
      %v1864 = vsel %vm1808, %v1783, 0
      %v1867 = vsel %vm1808, %v1784, 0
      %v1870 = vsel %vm1808, %v1785, 0
      %v1873 = vsel %vm1808, %v1786, 0
      %v1876 = vsel %vm1808, %v1787, 0
      %v1879 = vsel %vm1808, %v1788, 0
      %v1882 = vsel %vm1808, %v1789, 0
      %v1885 = vsel %vm1808, %v1790, 0
      %v1888 = vsel %vm1808, %v1791, 0
      %v1891 = vsel %vm1808, %v1792, 0
      %v1894 = vsel %vm1808, %v1793, 0
      %v1897 = vsel %vm1808, %v1794, 0
      %v1900 = vsel %vm1808, %v1795, 0
      %v1903 = vsel %vm1808, %v1796, 0
      %1905 = vmatprep.subr.mxu0 0.0
      %1906 = vmatpush1.msra.mxu0 %v1797
      %1907 = vmatprep.subr.mxu0 0.0
      %1908 = vmatpush1.msra.mxu0 %v1798
      %1909 = vmatprep.subr.mxu0 0.0
      %1910 = vmatpush1.msra.mxu0 %v1799
      %1911 = vmatprep.subr.mxu0 0.0
      %1912 = vmatpush1.msra.mxu0 %v1800
      %1913 = vmatprep.subr.mxu0 0.0
      %1914 = vmatpush1.msra.mxu0 0.0
      %1915 = vmatprep.subr.mxu0 0.0
      %1916 = vmatpush1.msra.mxu0 0.0
      %1917 = vmatprep.subr.mxu0 0.0
      %1918 = vmatpush1.msra.mxu0 0.0
      %1919 = vmatprep.subr.mxu0 0.0
      %1920 = vmatpush1.msra.mxu0 0.0
      %1921 = vmatprep.subr.mxu0 0.0
      %1922 = vmatpush1.msra.mxu0 0.0
      %1923 = vmatprep.subr.mxu0 0.0
      %1924 = vmatpush1.msra.mxu0 0.0
      %1925 = vmatprep.subr.mxu0 0.0
      %1926 = vmatpush1.msra.mxu0 0.0
      %1927 = vmatprep.subr.mxu0 0.0
      %1928 = vmatpush1.msra.mxu0 0.0
      %1929 = vmatprep.subr.mxu0 0.0
      %1930 = vmatpush1.msra.mxu0 0.0
      %1931 = vmatprep.subr.mxu0 0.0
      %1932 = vmatpush1.msra.mxu0 0.0
      %1933 = vmatprep.subr.mxu0 0.0
      %1934 = vmatpush1.msra.mxu0 0.0
      %1935 = vmatprep.subr.mxu0 0.0
      %1936 = vmatpush1.msra.mxu0 0.0
      %1937 = vmatprep.subr.mxu0 0.0
      %1938 = vmatpush1.msra.mxu0 0.0
      %1939 = vmatprep.subr.mxu0 0.0
      %1940 = vmatpush1.msra.mxu0 0.0
      %1941 = vmatprep.subr.mxu0 0.0
      %1942 = vmatpush1.msra.mxu0 0.0
      %1943 = vmatprep.subr.mxu0 0.0
      %1944 = vmatpush1.msra.mxu0 0.0
      %1945 = vmatprep.subr.mxu0 0.0
      %1946 = vmatpush1.msra.mxu0 0.0
      %1947 = vmatprep.subr.mxu0 0.0
      %1948 = vmatpush1.msra.mxu0 0.0
      %1949 = vmatprep.subr.mxu0 0.0
      %1950 = vmatpush1.msra.mxu0 0.0
      %1951 = vmatprep.subr.mxu0 0.0
      %1952 = vmatpush1.msra.mxu0 0.0
      %1953 = vmatprep.subr.mxu0 0.0
      %1954 = vmatpush1.msra.mxu0 0.0
      %1955 = vmatprep.subr.mxu0 0.0
      %1956 = vmatpush1.msra.mxu0 0.0
      %1957 = vmatprep.subr.mxu0 0.0
      %1958 = vmatpush1.msra.mxu0 0.0
      %1959 = vmatprep.subr.mxu0 0.0
      %1960 = vmatpush1.msra.mxu0 0.0
      %1961 = vmatprep.subr.mxu0 0.0
      %1962 = vmatpush1.msra.mxu0 0.0
      %1963 = vmatprep.subr.mxu0 0.0
      %1964 = vmatpush1.msra.mxu0 0.0
      %1965 = vmatprep.subr.mxu0 0.0
      %1966 = vmatpush1.msra.mxu0 0.0
      %1967 = vmatprep.subr.mxu0 0.0
      %1968 = vmatpush1.msra.mxu0 0.0
      %1969 = vmatprep.mubr.f32.mxu0 0.0
      %1970 = vmatmul.mubr.f32.gmra.mrb[0].mxu0 %v1810
      %v1971 = vpop.f32.mrb[0].mxu0
      %v1972 = vadd.f32 %v1806, %v1971
      %v1973 = vpop.f32.mrb[0].mxu0
      %1974 = vmatprep.mubr.f32.mxu0 0.0
      %1975 = vmatmul.mubr.f32.gmra.mrb[0].mxu0 %v1813
      %v1976 = vpop.f32.mrb[0].mxu0
      %v1977 = vadd.f32 %v1806, %v1976
      %v1978 = vpop.f32.mrb[0].mxu0
      %1979 = vmatprep.mubr.f32.mxu0 0.0
      %1980 = vmatmul.mubr.f32.gmra.mrb[0].mxu0 %v1816
      %v1981 = vpop.f32.mrb[0].mxu0
      %v1982 = vadd.f32 %v1806, %v1981
      %v1983 = vpop.f32.mrb[0].mxu0
      %1984 = vmatprep.mubr.f32.mxu0 0.0
      %1985 = vmatmul.mubr.f32.gmra.mrb[0].mxu0 %v1819
      %v1986 = vpop.f32.mrb[0].mxu0
      %v1987 = vadd.f32 %v1806, %v1986
      %v1988 = vpop.f32.mrb[0].mxu0
      %1989 = vmatprep.mubr.f32.mxu0 0.0
      %1990 = vmatmul.mubr.f32.gmra.mrb[0].mxu0 %v1822
      %v1991 = vpop.f32.mrb[0].mxu0
      %v1992 = vadd.f32 %v1806, %v1991
      %v1993 = vpop.f32.mrb[0].mxu0
      %1994 = vmatprep.mubr.f32.mxu0 0.0
      %1995 = vmatmul.mubr.f32.gmra.mrb[0].mxu0 %v1825
      %v1996 = vpop.f32.mrb[0].mxu0
      %v1997 = vadd.f32 %v1806, %v1996
      %v1998 = vpop.f32.mrb[0].mxu0
      %1999 = vmatprep.mubr.f32.mxu0 0.0
      %2000 = vmatmul.mubr.f32.gmra.mrb[0].mxu0 %v1828
      %v2001 = vpop.f32.mrb[0].mxu0
      %v2002 = vadd.f32 %v1806, %v2001
      %v2003 = vpop.f32.mrb[0].mxu0
      %2004 = vmatprep.mubr.f32.mxu0 0.0
      %2005 = vmatmul.mubr.f32.gmra.mrb[0].mxu0 %v1831
      %v2006 = vpop.f32.mrb[0].mxu0
      %v2007 = vadd.f32 %v1806, %v2006
      %v2008 = vpop.f32.mrb[0].mxu0
      %2009 = vmatprep.mubr.f32.mxu0 0.0
      %2010 = vmatmul.mubr.f32.gmra.mrb[0].mxu0 %v1834
      %v2011 = vpop.f32.mrb[0].mxu0
      %v2012 = vadd.f32 %v1806, %v2011
      %v2013 = vpop.f32.mrb[0].mxu0
      %2014 = vmatprep.mubr.f32.mxu0 0.0
      %2015 = vmatmul.mubr.f32.gmra.mrb[0].mxu0 %v1837
      %v2016 = vpop.f32.mrb[0].mxu0
      %v2017 = vadd.f32 %v1806, %v2016
      %v2018 = vpop.f32.mrb[0].mxu0
      %2019 = vmatprep.mubr.f32.mxu0 0.0
      %2020 = vmatmul.mubr.f32.gmra.mrb[0].mxu0 %v1840
      %v2021 = vpop.f32.mrb[0].mxu0
      %v2022 = vadd.f32 %v1806, %v2021
      %v2023 = vpop.f32.mrb[0].mxu0
      %2024 = vmatprep.mubr.f32.mxu0 0.0
      %2025 = vmatmul.mubr.f32.gmra.mrb[0].mxu0 %v1843
      %v2026 = vpop.f32.mrb[0].mxu0
      %v2027 = vadd.f32 %v1806, %v2026
      %v2028 = vpop.f32.mrb[0].mxu0
      %2029 = vmatprep.mubr.f32.mxu0 0.0
      %2030 = vmatmul.mubr.f32.gmra.mrb[0].mxu0 %v1846
      %v2031 = vpop.f32.mrb[0].mxu0
      %v2032 = vadd.f32 %v1806, %v2031
      %v2033 = vpop.f32.mrb[0].mxu0
      %2034 = vmatprep.mubr.f32.mxu0 0.0
      %2035 = vmatmul.mubr.f32.gmra.mrb[0].mxu0 %v1849
      %v2036 = vpop.f32.mrb[0].mxu0
      %v2037 = vadd.f32 %v1806, %v2036
      %v2038 = vpop.f32.mrb[0].mxu0
      %2039 = vmatprep.mubr.f32.mxu0 0.0
      %2040 = vmatmul.mubr.f32.gmra.mrb[0].mxu0 %v1852
      %v2041 = vpop.f32.mrb[0].mxu0
      %v2042 = vadd.f32 %v1806, %v2041
      %v2043 = vpop.f32.mrb[0].mxu0
      %2044 = vmatprep.mubr.f32.mxu0 0.0
      %2045 = vmatmul.mubr.f32.gmra.mrb[0].mxu0 %v1855
      %v2046 = vpop.f32.mrb[0].mxu0
      %v2047 = vadd.f32 %v1806, %v2046
      %v2048 = vpop.f32.mrb[0].mxu0
      %2049 = vmatprep.mubr.f32.mxu0 0.0
      %2050 = vmatmul.mubr.f32.gmra.mrb[0].mxu0 %v1858
      %v2051 = vpop.f32.mrb[0].mxu0
      %v2052 = vadd.f32 %v1806, %v2051
      %v2053 = vpop.f32.mrb[0].mxu0
      %2054 = vmatprep.mubr.f32.mxu0 0.0
      %2055 = vmatmul.mubr.f32.gmra.mrb[0].mxu0 %v1861
      %v2056 = vpop.f32.mrb[0].mxu0
      %v2057 = vadd.f32 %v1806, %v2056
      %v2058 = vpop.f32.mrb[0].mxu0
      %2059 = vmatprep.mubr.f32.mxu0 0.0
      %2060 = vmatmul.mubr.f32.gmra.mrb[0].mxu0 %v1864
      %v2061 = vpop.f32.mrb[0].mxu0
      %v2062 = vadd.f32 %v1806, %v2061
      %v2063 = vpop.f32.mrb[0].mxu0
      %2064 = vmatprep.mubr.f32.mxu0 0.0
      %2065 = vmatmul.mubr.f32.gmra.mrb[0].mxu0 %v1867
      %v2066 = vpop.f32.mrb[0].mxu0
      %v2067 = vadd.f32 %v1806, %v2066
      %v2068 = vpop.f32.mrb[0].mxu0
      %2069 = vmatprep.mubr.f32.mxu0 0.0
      %2070 = vmatmul.mubr.f32.gmra.mrb[0].mxu0 %v1870
      %v2071 = vpop.f32.mrb[0].mxu0
      %v2072 = vadd.f32 %v1806, %v2071
      %v2073 = vpop.f32.mrb[0].mxu0
      %2074 = vmatprep.mubr.f32.mxu0 0.0
      %2075 = vmatmul.mubr.f32.gmra.mrb[0].mxu0 %v1873
      %v2076 = vpop.f32.mrb[0].mxu0
      %v2077 = vadd.f32 %v1806, %v2076
      %v2078 = vpop.f32.mrb[0].mxu0
      %2079 = vmatprep.mubr.f32.mxu0 0.0
      %2080 = vmatmul.mubr.f32.gmra.mrb[0].mxu0 %v1876
      %v2081 = vpop.f32.mrb[0].mxu0
      %v2082 = vadd.f32 %v1806, %v2081
      %v2083 = vpop.f32.mrb[0].mxu0
      %2084 = vmatprep.mubr.f32.mxu0 0.0
      %2085 = vmatmul.mubr.f32.gmra.mrb[0].mxu0 %v1879
      %v2086 = vpop.f32.mrb[0].mxu0
      %v2087 = vadd.f32 %v1806, %v2086
      %v2088 = vpop.f32.mrb[0].mxu0
      %2089 = vmatprep.mubr.f32.mxu0 0.0
      %2090 = vmatmul.mubr.f32.gmra.mrb[0].mxu0 %v1882
      %v2091 = vpop.f32.mrb[0].mxu0
      %v2092 = vadd.f32 %v1806, %v2091
      %v2093 = vpop.f32.mrb[0].mxu0
      %2094 = vmatprep.mubr.f32.mxu0 0.0
      %2095 = vmatmul.mubr.f32.gmra.mrb[0].mxu0 %v1885
      %v2096 = vpop.f32.mrb[0].mxu0
      %v2097 = vadd.f32 %v1806, %v2096
      %v2098 = vpop.f32.mrb[0].mxu0
      %2099 = vmatprep.mubr.f32.mxu0 0.0
      %2100 = vmatmul.mubr.f32.gmra.mrb[0].mxu0 %v1888
      %v2101 = vpop.f32.mrb[0].mxu0
      %v2102 = vadd.f32 %v1806, %v2101
      %v2103 = vpop.f32.mrb[0].mxu0
      %2104 = vmatprep.mubr.f32.mxu0 0.0
      %2105 = vmatmul.mubr.f32.gmra.mrb[0].mxu0 %v1891
      %v2106 = vpop.f32.mrb[0].mxu0
      %v2107 = vadd.f32 %v1806, %v2106
      %v2108 = vpop.f32.mrb[0].mxu0
      %2109 = vmatprep.mubr.f32.mxu0 0.0
      %2110 = vmatmul.mubr.f32.gmra.mrb[0].mxu0 %v1894
      %v2111 = vpop.f32.mrb[0].mxu0
      %v2112 = vadd.f32 %v1806, %v2111
      %v2113 = vpop.f32.mrb[0].mxu0
      %2114 = vmatprep.mubr.f32.mxu0 0.0
      %2115 = vmatmul.mubr.f32.gmra.mrb[0].mxu0 %v1897
      %v2116 = vpop.f32.mrb[0].mxu0
      %v2117 = vadd.f32 %v1806, %v2116
      %v2118 = vpop.f32.mrb[0].mxu0
      %2119 = vmatprep.mubr.f32.mxu0 0.0
      %2120 = vmatmul.mubr.f32.gmra.mrb[0].mxu0 %v1900
      %v2121 = vpop.f32.mrb[0].mxu0
      %v2122 = vadd.f32 %v1806, %v2121
      %v2123 = vpop.f32.mrb[0].mxu0
      %2124 = vmatprep.mubr.f32.mxu0 0.0
      %2125 = vmatmul.mubr.f32.gmra.mrb[0].mxu0 %v1903
      %v2126 = vpop.f32.mrb[0].mxu0
      %v2127 = vadd.f32 %v1806, %v2126
      %v2128 = vpop.f32.mrb[0].mxu0
      %2129 = vdwg.mxu0
      %v2130 = vmax.f32 %v1972, 0.0
      %v2131 = vmax.f32 %v1977, 0.0
      %v2132 = vmax.f32 %v1982, 0.0
      %v2133 = vmax.f32 %v1987, 0.0
      %v2134 = vmax.f32 %v1992, 0.0
      %v2135 = vmax.f32 %v1997, 0.0
      %v2136 = vmax.f32 %v2002, 0.0
      %v2137 = vmax.f32 %v2007, 0.0
      %v2138 = vmax.f32 %v2012, 0.0
      %v2139 = vmax.f32 %v2017, 0.0
      %v2140 = vmax.f32 %v2022, 0.0
      %v2141 = vmax.f32 %v2027, 0.0
      %v2142 = vmax.f32 %v2032, 0.0
      %v2143 = vmax.f32 %v2037, 0.0
      %v2144 = vmax.f32 %v2042, 0.0
      %v2145 = vmax.f32 %v2047, 0.0
      %v2146 = vmax.f32 %v2052, 0.0
      %v2147 = vmax.f32 %v2057, 0.0
      %v2148 = vmax.f32 %v2062, 0.0
      %v2149 = vmax.f32 %v2067, 0.0
      %v2150 = vmax.f32 %v2072, 0.0
      %v2151 = vmax.f32 %v2077, 0.0
      %v2152 = vmax.f32 %v2082, 0.0
      %v2153 = vmax.f32 %v2087, 0.0
      %v2154 = vmax.f32 %v2092, 0.0
      %v2155 = vmax.f32 %v2097, 0.0
      %v2156 = vmax.f32 %v2102, 0.0
      %v2157 = vmax.f32 %v2107, 0.0
      %v2158 = vmax.f32 %v2112, 0.0
      %v2159 = vmax.f32 %v2117, 0.0
      %v2160 = vmax.f32 %v2122, 0.0
      %v2161 = vmax.f32 %v2127, 0.0
      %v2162 = vand.u32 2147483647, %v1972
      %v2163 = vand.u32 2147483647, %v1977
      %v2164 = vand.u32 2147483647, %v1982
      %v2165 = vand.u32 2147483647, %v1987
      %v2166 = vand.u32 2147483647, %v1992
      %v2167 = vand.u32 2147483647, %v1997
      %v2168 = vand.u32 2147483647, %v2002
      %v2169 = vand.u32 2147483647, %v2007
      %v2170 = vand.u32 2147483647, %v2012
      %v2171 = vand.u32 2147483647, %v2017
      %v2172 = vand.u32 2147483647, %v2022
      %v2173 = vand.u32 2147483647, %v2027
      %v2174 = vand.u32 2147483647, %v2032
      %v2175 = vand.u32 2147483647, %v2037
      %v2176 = vand.u32 2147483647, %v2042
      %v2177 = vand.u32 2147483647, %v2047
      %v2178 = vand.u32 2147483647, %v2052
      %v2179 = vand.u32 2147483647, %v2057
      %v2180 = vand.u32 2147483647, %v2062
      %v2181 = vand.u32 2147483647, %v2067
      %v2182 = vand.u32 2147483647, %v2072
      %v2183 = vand.u32 2147483647, %v2077
      %v2184 = vand.u32 2147483647, %v2082
      %v2185 = vand.u32 2147483647, %v2087
      %v2186 = vand.u32 2147483647, %v2092
      %v2187 = vand.u32 2147483647, %v2097
      %v2188 = vand.u32 2147483647, %v2102
      %v2189 = vand.u32 2147483647, %v2107
      %v2190 = vand.u32 2147483647, %v2112
      %v2191 = vand.u32 2147483647, %v2117
      %v2192 = vand.u32 2147483647, %v2122
      %v2193 = vand.u32 2147483647, %v2127
      %v2194 = vsub.f32 0.0, %v2162
      %v2195 = vsub.f32 0.0, %v2163
      %v2196 = vsub.f32 0.0, %v2164
      %v2197 = vsub.f32 0.0, %v2165
      %v2198 = vsub.f32 0.0, %v2166
      %v2199 = vsub.f32 0.0, %v2167
      %v2200 = vsub.f32 0.0, %v2168
      %v2201 = vsub.f32 0.0, %v2169
      %v2202 = vsub.f32 0.0, %v2170
      %v2203 = vsub.f32 0.0, %v2171
      %v2204 = vsub.f32 0.0, %v2172
      %v2205 = vsub.f32 0.0, %v2173
      %v2206 = vsub.f32 0.0, %v2174
      %v2207 = vsub.f32 0.0, %v2175
      %v2208 = vsub.f32 0.0, %v2176
      %v2209 = vsub.f32 0.0, %v2177
      %v2210 = vsub.f32 0.0, %v2178
      %v2211 = vsub.f32 0.0, %v2179
      %v2212 = vsub.f32 0.0, %v2180
      %v2213 = vsub.f32 0.0, %v2181
      %v2214 = vsub.f32 0.0, %v2182
      %v2215 = vsub.f32 0.0, %v2183
      %v2216 = vsub.f32 0.0, %v2184
      %v2217 = vsub.f32 0.0, %v2185
      %v2218 = vsub.f32 0.0, %v2186
      %v2219 = vsub.f32 0.0, %v2187
      %v2220 = vsub.f32 0.0, %v2188
      %v2221 = vsub.f32 0.0, %v2189
      %v2222 = vsub.f32 0.0, %v2190
      %v2223 = vsub.f32 0.0, %v2191
      %v2224 = vsub.f32 0.0, %v2192
      %v2225 = vsub.f32 0.0, %v2193
      %v2226 = vmul.f32 %v2194, 1.442695
      %v2227 = vpow.pop %v2226
      %v2228 = vmul.f32 %v2195, 1.442695
      %v2229 = vpow.pop %v2228
      %v2230 = vmul.f32 %v2196, 1.442695
      %v2231 = vpow.pop %v2230
      %v2232 = vmul.f32 %v2197, 1.442695
      %v2233 = vpow.pop %v2232
      %v2234 = vmul.f32 %v2198, 1.442695
      %v2235 = vpow.pop %v2234
      %v2236 = vmul.f32 %v2199, 1.442695
      %v2237 = vpow.pop %v2236
      %v2238 = vmul.f32 %v2200, 1.442695
      %v2239 = vpow.pop %v2238
      %v2240 = vmul.f32 %v2201, 1.442695
      %v2241 = vpow.pop %v2240
      %v2242 = vmul.f32 %v2202, 1.442695
      %v2243 = vpow.pop %v2242
      %v2244 = vmul.f32 %v2203, 1.442695
      %v2245 = vpow.pop %v2244
      %v2246 = vmul.f32 %v2204, 1.442695
      %v2247 = vpow.pop %v2246
      %v2248 = vmul.f32 %v2205, 1.442695
      %v2249 = vpow.pop %v2248
      %v2250 = vmul.f32 %v2206, 1.442695
      %v2251 = vpow.pop %v2250
      %v2252 = vmul.f32 %v2207, 1.442695
      %v2253 = vpow.pop %v2252
      %v2254 = vmul.f32 %v2208, 1.442695
      %v2255 = vpow.pop %v2254
      %v2256 = vmul.f32 %v2209, 1.442695
      %v2257 = vpow.pop %v2256
      %v2258 = vmul.f32 %v2210, 1.442695
      %v2259 = vpow.pop %v2258
      %v2260 = vmul.f32 %v2211, 1.442695
      %v2261 = vpow.pop %v2260
      %v2262 = vmul.f32 %v2212, 1.442695
      %v2263 = vpow.pop %v2262
      %v2264 = vmul.f32 %v2213, 1.442695
      %v2265 = vpow.pop %v2264
      %v2266 = vmul.f32 %v2214, 1.442695
      %v2267 = vpow.pop %v2266
      %v2268 = vmul.f32 %v2215, 1.442695
      %v2269 = vpow.pop %v2268
      %v2270 = vmul.f32 %v2216, 1.442695
      %v2271 = vpow.pop %v2270
      %v2272 = vmul.f32 %v2217, 1.442695
      %v2273 = vpow.pop %v2272
      %v2274 = vmul.f32 %v2218, 1.442695
      %v2275 = vpow.pop %v2274
      %v2276 = vmul.f32 %v2219, 1.442695
      %v2277 = vpow.pop %v2276
      %v2278 = vmul.f32 %v2220, 1.442695
      %v2279 = vpow.pop %v2278
      %v2280 = vmul.f32 %v2221, 1.442695
      %v2281 = vpow.pop %v2280
      %v2282 = vmul.f32 %v2222, 1.442695
      %v2283 = vpow.pop %v2282
      %v2284 = vmul.f32 %v2223, 1.442695
      %v2285 = vpow.pop %v2284
      %v2286 = vmul.f32 %v2224, 1.442695
      %v2287 = vpow.pop %v2286
      %v2288 = vmul.f32 %v2225, 1.442695
      %v2289 = vpow.pop %v2288
      %v2290 = vadd.f32 %v2227, 1.0
      %v2291 = vadd.f32 %v2229, 1.0
      %v2292 = vadd.f32 %v2231, 1.0
      %v2293 = vadd.f32 %v2233, 1.0
      %v2294 = vadd.f32 %v2235, 1.0
      %v2295 = vadd.f32 %v2237, 1.0
      %v2296 = vadd.f32 %v2239, 1.0
      %v2297 = vadd.f32 %v2241, 1.0
      %v2298 = vadd.f32 %v2243, 1.0
      %v2299 = vadd.f32 %v2245, 1.0
      %v2300 = vadd.f32 %v2247, 1.0
      %v2301 = vadd.f32 %v2249, 1.0
      %v2302 = vadd.f32 %v2251, 1.0
      %v2303 = vadd.f32 %v2253, 1.0
      %v2304 = vadd.f32 %v2255, 1.0
      %v2305 = vadd.f32 %v2257, 1.0
      %v2306 = vadd.f32 %v2259, 1.0
      %v2307 = vadd.f32 %v2261, 1.0
      %v2308 = vadd.f32 %v2263, 1.0
      %v2309 = vadd.f32 %v2265, 1.0
      %v2310 = vadd.f32 %v2267, 1.0
      %v2311 = vadd.f32 %v2269, 1.0
      %v2312 = vadd.f32 %v2271, 1.0
      %v2313 = vadd.f32 %v2273, 1.0
      %v2314 = vadd.f32 %v2275, 1.0
      %v2315 = vadd.f32 %v2277, 1.0
      %v2316 = vadd.f32 %v2279, 1.0
      %v2317 = vadd.f32 %v2281, 1.0
      %v2318 = vadd.f32 %v2283, 1.0
      %v2319 = vadd.f32 %v2285, 1.0
      %v2320 = vadd.f32 %v2287, 1.0
      %v2321 = vadd.f32 %v2289, 1.0
      %v2322 = vlog2.pop %v2290
      %v2323 = vmul.f32 %v2322, 0.6931472
      %v2324 = vlog2.pop %v2291
      %v2325 = vmul.f32 %v2324, 0.6931472
      %v2326 = vlog2.pop %v2292
      %v2327 = vmul.f32 %v2326, 0.6931472
      %v2328 = vlog2.pop %v2293
      %v2329 = vmul.f32 %v2328, 0.6931472
      %v2330 = vlog2.pop %v2294
      %v2331 = vmul.f32 %v2330, 0.6931472
      %v2332 = vlog2.pop %v2295
      %v2333 = vmul.f32 %v2332, 0.6931472
      %v2334 = vlog2.pop %v2296
      %v2335 = vmul.f32 %v2334, 0.6931472
      %v2336 = vlog2.pop %v2297
      %v2337 = vmul.f32 %v2336, 0.6931472
      %v2338 = vlog2.pop %v2298
      %v2339 = vmul.f32 %v2338, 0.6931472
      %v2340 = vlog2.pop %v2299
      %v2341 = vmul.f32 %v2340, 0.6931472
      %v2342 = vlog2.pop %v2300
      %v2343 = vmul.f32 %v2342, 0.6931472
      %v2344 = vlog2.pop %v2301
      %v2345 = vmul.f32 %v2344, 0.6931472
      %v2346 = vlog2.pop %v2302
      %v2347 = vmul.f32 %v2346, 0.6931472
      %v2348 = vlog2.pop %v2303
      %v2349 = vmul.f32 %v2348, 0.6931472
      %v2350 = vlog2.pop %v2304
      %v2351 = vmul.f32 %v2350, 0.6931472
      %v2352 = vlog2.pop %v2305
      %v2353 = vmul.f32 %v2352, 0.6931472
      %v2354 = vlog2.pop %v2306
      %v2355 = vmul.f32 %v2354, 0.6931472
      %v2356 = vlog2.pop %v2307
      %v2357 = vmul.f32 %v2356, 0.6931472
      %v2358 = vlog2.pop %v2308
      %v2359 = vmul.f32 %v2358, 0.6931472
      %v2360 = vlog2.pop %v2309
      %v2361 = vmul.f32 %v2360, 0.6931472
      %v2362 = vlog2.pop %v2310
      %v2363 = vmul.f32 %v2362, 0.6931472
      %v2364 = vlog2.pop %v2311
      %v2365 = vmul.f32 %v2364, 0.6931472
      %v2366 = vlog2.pop %v2312
      %v2367 = vmul.f32 %v2366, 0.6931472
      %v2368 = vlog2.pop %v2313
      %v2369 = vmul.f32 %v2368, 0.6931472
      %v2370 = vlog2.pop %v2314
      %v2371 = vmul.f32 %v2370, 0.6931472
      %v2372 = vlog2.pop %v2315
      %v2373 = vmul.f32 %v2372, 0.6931472
      %v2374 = vlog2.pop %v2316
      %v2375 = vmul.f32 %v2374, 0.6931472
      %v2376 = vlog2.pop %v2317
      %v2377 = vmul.f32 %v2376, 0.6931472
      %v2378 = vlog2.pop %v2318
      %v2379 = vmul.f32 %v2378, 0.6931472
      %v2380 = vlog2.pop %v2319
      %v2381 = vmul.f32 %v2380, 0.6931472
      %v2382 = vlog2.pop %v2320
      %v2383 = vmul.f32 %v2382, 0.6931472
      %v2384 = vlog2.pop %v2321
      %v2385 = vmul.f32 %v2384, 0.6931472
      %v2386 = vadd.f32 %v2130, %v2323
      %v2387 = vadd.f32 %v2131, %v2325
      %v2388 = vadd.f32 %v2132, %v2327
      %v2389 = vadd.f32 %v2133, %v2329
      %v2390 = vadd.f32 %v2134, %v2331
      %v2391 = vadd.f32 %v2135, %v2333
      %v2392 = vadd.f32 %v2136, %v2335
      %v2393 = vadd.f32 %v2137, %v2337
      %v2394 = vadd.f32 %v2138, %v2339
      %v2395 = vadd.f32 %v2139, %v2341
      %v2396 = vadd.f32 %v2140, %v2343
      %v2397 = vadd.f32 %v2141, %v2345
      %v2398 = vadd.f32 %v2142, %v2347
      %v2399 = vadd.f32 %v2143, %v2349
      %v2400 = vadd.f32 %v2144, %v2351
      %v2401 = vadd.f32 %v2145, %v2353
      %v2402 = vadd.f32 %v2146, %v2355
      %v2403 = vadd.f32 %v2147, %v2357
      %v2404 = vadd.f32 %v2148, %v2359
      %v2405 = vadd.f32 %v2149, %v2361
      %v2406 = vadd.f32 %v2150, %v2363
      %v2407 = vadd.f32 %v2151, %v2365
      %v2408 = vadd.f32 %v2152, %v2367
      %v2409 = vadd.f32 %v2153, %v2369
      %v2410 = vadd.f32 %v2154, %v2371
      %v2411 = vadd.f32 %v2155, %v2373
      %v2412 = vadd.f32 %v2156, %v2375
      %v2413 = vadd.f32 %v2157, %v2377
      %v2414 = vadd.f32 %v2158, %v2379
      %v2415 = vadd.f32 %v2159, %v2381
      %v2416 = vadd.f32 %v2160, %v2383
      %v2417 = vadd.f32 %v2161, %v2385
      %v2418 = vld [vmem:[%s526] sm:$0xff]
      %v2419 = vld [vmem:[%s526 + $0x8] sm:$0xff]
      %v2420 = vld [vmem:[%s526 + $0x10] sm:$0xff]
      %v2421 = vld [vmem:[%s526 + $0x18] sm:$0xff]
      %v2422 = vld [vmem:[%s526 + $0x20] sm:$0xff]
      %v2423 = vld [vmem:[%s526 + $0x28] sm:$0xff]
      %v2424 = vld [vmem:[%s526 + $0x30] sm:$0xff]
      %v2425 = vld [vmem:[%s526 + $0x38] sm:$0xff]
      %v2426 = vld [vmem:[%s526 + $0x40] sm:$0xff]
      %v2427 = vld [vmem:[%s526 + $0x48] sm:$0xff]
      %v2428 = vld [vmem:[%s526 + $0x50] sm:$0xff]
      %v2429 = vld [vmem:[%s526 + $0x58] sm:$0xff]
      %v2430 = vld [vmem:[%s526 + $0x60] sm:$0xff]
      %v2431 = vld [vmem:[%s526 + $0x68] sm:$0xff]
      %v2432 = vld [vmem:[%s526 + $0x70] sm:$0xff]
      %v2433 = vld [vmem:[%s526 + $0x78] sm:$0xff]
      %v2434 = vld [vmem:[%s529] sm:$0x1]
      %v2436 = vlaneseq
      %v2437 = vshrl.u32 %v2436, 7
      %v2438 = vsub.s32 0, %v2437
      %v2439 = vrot.slane %v2434, %v2438
      %2441 = vmatprep.subr.mxu0 0.0
      %2442 = vmatpush1.msra.mxu0 %v2418
      %2443 = vmatprep.subr.mxu0 0.0
      %2444 = vmatpush1.msra.mxu0 %v2419
      %2445 = vmatprep.subr.mxu0 0.0
      %2446 = vmatpush1.msra.mxu0 %v2420
      %2447 = vmatprep.subr.mxu0 0.0
      %2448 = vmatpush1.msra.mxu0 %v2421
      %2449 = vmatprep.subr.mxu0 0.0
      %2450 = vmatpush1.msra.mxu0 %v2422
      %2451 = vmatprep.subr.mxu0 0.0
      %2452 = vmatpush1.msra.mxu0 %v2423
      %2453 = vmatprep.subr.mxu0 0.0
      %2454 = vmatpush1.msra.mxu0 %v2424
      %2455 = vmatprep.subr.mxu0 0.0
      %2456 = vmatpush1.msra.mxu0 %v2425
      %2457 = vmatprep.subr.mxu0 0.0
      %2458 = vmatpush1.msra.mxu0 %v2426
      %2459 = vmatprep.subr.mxu0 0.0
      %2460 = vmatpush1.msra.mxu0 %v2427
      %2461 = vmatprep.subr.mxu0 0.0
      %2462 = vmatpush1.msra.mxu0 %v2428
      %2463 = vmatprep.subr.mxu0 0.0
      %2464 = vmatpush1.msra.mxu0 %v2429
      %2465 = vmatprep.subr.mxu0 0.0
      %2466 = vmatpush1.msra.mxu0 %v2430
      %2467 = vmatprep.subr.mxu0 0.0
      %2468 = vmatpush1.msra.mxu0 %v2431
      %2469 = vmatprep.subr.mxu0 0.0
      %2470 = vmatpush1.msra.mxu0 %v2432
      %2471 = vmatprep.subr.mxu0 0.0
      %2472 = vmatpush1.msra.mxu0 %v2433
      %2473 = vmatprep.subr.mxu0 0.0
      %2474 = vmatpush1.msra.mxu0 0.0
      %2475 = vmatprep.subr.mxu0 0.0
      %2476 = vmatpush1.msra.mxu0 0.0
      %2477 = vmatprep.subr.mxu0 0.0
      %2478 = vmatpush1.msra.mxu0 0.0
      %2479 = vmatprep.subr.mxu0 0.0
      %2480 = vmatpush1.msra.mxu0 0.0
      %2481 = vmatprep.subr.mxu0 0.0
      %2482 = vmatpush1.msra.mxu0 0.0
      %2483 = vmatprep.subr.mxu0 0.0
      %2484 = vmatpush1.msra.mxu0 0.0
      %2485 = vmatprep.subr.mxu0 0.0
      %2486 = vmatpush1.msra.mxu0 0.0
      %2487 = vmatprep.subr.mxu0 0.0
      %2488 = vmatpush1.msra.mxu0 0.0
      %2489 = vmatprep.subr.mxu0 0.0
      %2490 = vmatpush1.msra.mxu0 0.0
      %2491 = vmatprep.subr.mxu0 0.0
      %2492 = vmatpush1.msra.mxu0 0.0
      %2493 = vmatprep.subr.mxu0 0.0
      %2494 = vmatpush1.msra.mxu0 0.0
      %2495 = vmatprep.subr.mxu0 0.0
      %2496 = vmatpush1.msra.mxu0 0.0
      %2497 = vmatprep.subr.mxu0 0.0
      %2498 = vmatpush1.msra.mxu0 0.0
      %2499 = vmatprep.subr.mxu0 0.0
      %2500 = vmatpush1.msra.mxu0 0.0
      %2501 = vmatprep.subr.mxu0 0.0
      %2502 = vmatpush1.msra.mxu0 0.0
      %2503 = vmatprep.subr.mxu0 0.0
      %2504 = vmatpush1.msra.mxu0 0.0
      %2505 = vmatprep.mubr.f32.mxu0 0.0
      %2506 = vmatmul.mubr.f32.gmra.mrb[0].mxu0 %v2386
      %v2507 = vpop.f32.mrb[0].mxu0
      %v2508 = vadd.f32 %v2439, %v2507
      %v2509 = vpop.f32.mrb[0].mxu0
      %2510 = vmatprep.mubr.f32.mxu0 0.0
      %2511 = vmatmul.mubr.f32.gmra.mrb[0].mxu0 %v2387
      %v2512 = vpop.f32.mrb[0].mxu0
      %v2513 = vadd.f32 %v2439, %v2512
      %v2514 = vpop.f32.mrb[0].mxu0
      %2515 = vmatprep.mubr.f32.mxu0 0.0
      %2516 = vmatmul.mubr.f32.gmra.mrb[0].mxu0 %v2388
      %v2517 = vpop.f32.mrb[0].mxu0
      %v2518 = vadd.f32 %v2439, %v2517
      %v2519 = vpop.f32.mrb[0].mxu0
      %2520 = vmatprep.mubr.f32.mxu0 0.0
      %2521 = vmatmul.mubr.f32.gmra.mrb[0].mxu0 %v2389
      %v2522 = vpop.f32.mrb[0].mxu0
      %v2523 = vadd.f32 %v2439, %v2522
      %v2524 = vpop.f32.mrb[0].mxu0
      %2525 = vmatprep.mubr.f32.mxu0 0.0
      %2526 = vmatmul.mubr.f32.gmra.mrb[0].mxu0 %v2390
      %v2527 = vpop.f32.mrb[0].mxu0
      %v2528 = vadd.f32 %v2439, %v2527
      %v2529 = vpop.f32.mrb[0].mxu0
      %2530 = vmatprep.mubr.f32.mxu0 0.0
      %2531 = vmatmul.mubr.f32.gmra.mrb[0].mxu0 %v2391
      %v2532 = vpop.f32.mrb[0].mxu0
      %v2533 = vadd.f32 %v2439, %v2532
      %v2534 = vpop.f32.mrb[0].mxu0
      %2535 = vmatprep.mubr.f32.mxu0 0.0
      %2536 = vmatmul.mubr.f32.gmra.mrb[0].mxu0 %v2392
      %v2537 = vpop.f32.mrb[0].mxu0
      %v2538 = vadd.f32 %v2439, %v2537
      %v2539 = vpop.f32.mrb[0].mxu0
      %2540 = vmatprep.mubr.f32.mxu0 0.0
      %2541 = vmatmul.mubr.f32.gmra.mrb[0].mxu0 %v2393
      %v2542 = vpop.f32.mrb[0].mxu0
      %v2543 = vadd.f32 %v2439, %v2542
      %v2544 = vpop.f32.mrb[0].mxu0
      %2545 = vmatprep.mubr.f32.mxu0 0.0
      %2546 = vmatmul.mubr.f32.gmra.mrb[0].mxu0 %v2394
      %v2547 = vpop.f32.mrb[0].mxu0
      %v2548 = vadd.f32 %v2439, %v2547
      %v2549 = vpop.f32.mrb[0].mxu0
      %2550 = vmatprep.mubr.f32.mxu0 0.0
      %2551 = vmatmul.mubr.f32.gmra.mrb[0].mxu0 %v2395
      %v2552 = vpop.f32.mrb[0].mxu0
      %v2553 = vadd.f32 %v2439, %v2552
      %v2554 = vpop.f32.mrb[0].mxu0
      %2555 = vmatprep.mubr.f32.mxu0 0.0
      %2556 = vmatmul.mubr.f32.gmra.mrb[0].mxu0 %v2396
      %v2557 = vpop.f32.mrb[0].mxu0
      %v2558 = vadd.f32 %v2439, %v2557
      %v2559 = vpop.f32.mrb[0].mxu0
      %2560 = vmatprep.mubr.f32.mxu0 0.0
      %2561 = vmatmul.mubr.f32.gmra.mrb[0].mxu0 %v2397
      %v2562 = vpop.f32.mrb[0].mxu0
      %v2563 = vadd.f32 %v2439, %v2562
      %v2564 = vpop.f32.mrb[0].mxu0
      %2565 = vmatprep.mubr.f32.mxu0 0.0
      %2566 = vmatmul.mubr.f32.gmra.mrb[0].mxu0 %v2398
      %v2567 = vpop.f32.mrb[0].mxu0
      %v2568 = vadd.f32 %v2439, %v2567
      %v2569 = vpop.f32.mrb[0].mxu0
      %2570 = vmatprep.mubr.f32.mxu0 0.0
      %2571 = vmatmul.mubr.f32.gmra.mrb[0].mxu0 %v2399
      %v2572 = vpop.f32.mrb[0].mxu0
      %v2573 = vadd.f32 %v2439, %v2572
      %v2574 = vpop.f32.mrb[0].mxu0
      %2575 = vmatprep.mubr.f32.mxu0 0.0
      %2576 = vmatmul.mubr.f32.gmra.mrb[0].mxu0 %v2400
      %v2577 = vpop.f32.mrb[0].mxu0
      %v2578 = vadd.f32 %v2439, %v2577
      %v2579 = vpop.f32.mrb[0].mxu0
      %2580 = vmatprep.mubr.f32.mxu0 0.0
      %2581 = vmatmul.mubr.f32.gmra.mrb[0].mxu0 %v2401
      %v2582 = vpop.f32.mrb[0].mxu0
      %v2583 = vadd.f32 %v2439, %v2582
      %v2584 = vpop.f32.mrb[0].mxu0
      %2585 = vmatprep.mubr.f32.mxu0 0.0
      %2586 = vmatmul.mubr.f32.gmra.mrb[0].mxu0 %v2402
      %v2587 = vpop.f32.mrb[0].mxu0
      %v2588 = vadd.f32 %v2439, %v2587
      %v2589 = vpop.f32.mrb[0].mxu0
      %2590 = vmatprep.mubr.f32.mxu0 0.0
      %2591 = vmatmul.mubr.f32.gmra.mrb[0].mxu0 %v2403
      %v2592 = vpop.f32.mrb[0].mxu0
      %v2593 = vadd.f32 %v2439, %v2592
      %v2594 = vpop.f32.mrb[0].mxu0
      %2595 = vmatprep.mubr.f32.mxu0 0.0
      %2596 = vmatmul.mubr.f32.gmra.mrb[0].mxu0 %v2404
      %v2597 = vpop.f32.mrb[0].mxu0
      %v2598 = vadd.f32 %v2439, %v2597
      %v2599 = vpop.f32.mrb[0].mxu0
      %2600 = vmatprep.mubr.f32.mxu0 0.0
      %2601 = vmatmul.mubr.f32.gmra.mrb[0].mxu0 %v2405
      %v2602 = vpop.f32.mrb[0].mxu0
      %v2603 = vadd.f32 %v2439, %v2602
      %v2604 = vpop.f32.mrb[0].mxu0
      %2605 = vmatprep.mubr.f32.mxu0 0.0
      %2606 = vmatmul.mubr.f32.gmra.mrb[0].mxu0 %v2406
      %v2607 = vpop.f32.mrb[0].mxu0
      %v2608 = vadd.f32 %v2439, %v2607
      %v2609 = vpop.f32.mrb[0].mxu0
      %2610 = vmatprep.mubr.f32.mxu0 0.0
      %2611 = vmatmul.mubr.f32.gmra.mrb[0].mxu0 %v2407
      %v2612 = vpop.f32.mrb[0].mxu0
      %v2613 = vadd.f32 %v2439, %v2612
      %v2614 = vpop.f32.mrb[0].mxu0
      %2615 = vmatprep.mubr.f32.mxu0 0.0
      %2616 = vmatmul.mubr.f32.gmra.mrb[0].mxu0 %v2408
      %v2617 = vpop.f32.mrb[0].mxu0
      %v2618 = vadd.f32 %v2439, %v2617
      %v2619 = vpop.f32.mrb[0].mxu0
      %2620 = vmatprep.mubr.f32.mxu0 0.0
      %2621 = vmatmul.mubr.f32.gmra.mrb[0].mxu0 %v2409
      %v2622 = vpop.f32.mrb[0].mxu0
      %v2623 = vadd.f32 %v2439, %v2622
      %v2624 = vpop.f32.mrb[0].mxu0
      %2625 = vmatprep.mubr.f32.mxu0 0.0
      %2626 = vmatmul.mubr.f32.gmra.mrb[0].mxu0 %v2410
      %v2627 = vpop.f32.mrb[0].mxu0
      %v2628 = vadd.f32 %v2439, %v2627
      %v2629 = vpop.f32.mrb[0].mxu0
      %2630 = vmatprep.mubr.f32.mxu0 0.0
      %2631 = vmatmul.mubr.f32.gmra.mrb[0].mxu0 %v2411
      %v2632 = vpop.f32.mrb[0].mxu0
      %v2633 = vadd.f32 %v2439, %v2632
      %v2634 = vpop.f32.mrb[0].mxu0
      %2635 = vmatprep.mubr.f32.mxu0 0.0
      %2636 = vmatmul.mubr.f32.gmra.mrb[0].mxu0 %v2412
      %v2637 = vpop.f32.mrb[0].mxu0
      %v2638 = vadd.f32 %v2439, %v2637
      %v2639 = vpop.f32.mrb[0].mxu0
      %2640 = vmatprep.mubr.f32.mxu0 0.0
      %2641 = vmatmul.mubr.f32.gmra.mrb[0].mxu0 %v2413
      %v2642 = vpop.f32.mrb[0].mxu0
      %v2643 = vadd.f32 %v2439, %v2642
      %v2644 = vpop.f32.mrb[0].mxu0
      %2645 = vmatprep.mubr.f32.mxu0 0.0
      %2646 = vmatmul.mubr.f32.gmra.mrb[0].mxu0 %v2414
      %v2647 = vpop.f32.mrb[0].mxu0
      %v2648 = vadd.f32 %v2439, %v2647
      %v2649 = vpop.f32.mrb[0].mxu0
      %2650 = vmatprep.mubr.f32.mxu0 0.0
      %2651 = vmatmul.mubr.f32.gmra.mrb[0].mxu0 %v2415
      %v2652 = vpop.f32.mrb[0].mxu0
      %v2653 = vadd.f32 %v2439, %v2652
      %v2654 = vpop.f32.mrb[0].mxu0
      %2655 = vmatprep.mubr.f32.mxu0 0.0
      %2656 = vmatmul.mubr.f32.gmra.mrb[0].mxu0 %v2416
      %v2657 = vpop.f32.mrb[0].mxu0
      %v2658 = vadd.f32 %v2439, %v2657
      %v2659 = vpop.f32.mrb[0].mxu0
      %2660 = vmatprep.mubr.f32.mxu0 0.0
      %2661 = vmatmul.mubr.f32.gmra.mrb[0].mxu0 %v2417
      %v2662 = vpop.f32.mrb[0].mxu0
      %v2663 = vadd.f32 %v2439, %v2662
      %v2664 = vpop.f32.mrb[0].mxu0
      %2665 = vdwg.mxu0
      %2667 = vset.pattern.permute.xlu0 0
      %2668 = vperm.xlu0 %2667, %v1155
      %v2669 = vpop.permute.xlu0 %2668
      %2672 = vset.pattern.permute.xlu0 0
      %2673 = vperm.xlu0 %2672, %v1156
      %v2674 = vpop.permute.xlu0 %2673
      %2677 = vset.pattern.permute.xlu0 0
      %2678 = vperm.xlu0 %2677, %v1157
      %v2679 = vpop.permute.xlu0 %2678
      %2682 = vset.pattern.permute.xlu0 0
      %2683 = vperm.xlu0 %2682, %v1158
      %v2684 = vpop.permute.xlu0 %2683
      %2687 = vset.pattern.permute.xlu0 0
      %2688 = vperm.xlu0 %2687, %v1159
      %v2689 = vpop.permute.xlu0 %2688
      %2692 = vset.pattern.permute.xlu0 0
      %2693 = vperm.xlu0 %2692, %v1160
      %v2694 = vpop.permute.xlu0 %2693
      %2697 = vset.pattern.permute.xlu0 0
      %2698 = vperm.xlu0 %2697, %v1161
      %v2699 = vpop.permute.xlu0 %2698
      %2702 = vset.pattern.permute.xlu0 0
      %2703 = vperm.xlu0 %2702, %v1162
      %v2704 = vpop.permute.xlu0 %2703
      %2707 = vset.pattern.permute.xlu0 0
      %2708 = vperm.xlu0 %2707, %v1163
      %v2709 = vpop.permute.xlu0 %2708
      %2712 = vset.pattern.permute.xlu0 0
      %2713 = vperm.xlu0 %2712, %v1164
      %v2714 = vpop.permute.xlu0 %2713
      %2717 = vset.pattern.permute.xlu0 0
      %2718 = vperm.xlu0 %2717, %v1165
      %v2719 = vpop.permute.xlu0 %2718
      %2722 = vset.pattern.permute.xlu0 0
      %2723 = vperm.xlu0 %2722, %v1166
      %v2724 = vpop.permute.xlu0 %2723
      %2727 = vset.pattern.permute.xlu0 0
      %2728 = vperm.xlu0 %2727, %v1167
      %v2729 = vpop.permute.xlu0 %2728
      %2732 = vset.pattern.permute.xlu0 0
      %2733 = vperm.xlu0 %2732, %v1168
      %v2734 = vpop.permute.xlu0 %2733
      %2737 = vset.pattern.permute.xlu0 0
      %2738 = vperm.xlu0 %2737, %v1169
      %v2739 = vpop.permute.xlu0 %2738
      %2742 = vset.pattern.permute.xlu0 0
      %2743 = vperm.xlu0 %2742, %v1170
      %v2744 = vpop.permute.xlu0 %2743
      %2747 = vset.pattern.permute.xlu0 0
      %2748 = vperm.xlu0 %2747, %v1171
      %v2749 = vpop.permute.xlu0 %2748
      %2752 = vset.pattern.permute.xlu0 0
      %2753 = vperm.xlu0 %2752, %v1172
      %v2754 = vpop.permute.xlu0 %2753
      %2757 = vset.pattern.permute.xlu0 0
      %2758 = vperm.xlu0 %2757, %v1173
      %v2759 = vpop.permute.xlu0 %2758
      %2762 = vset.pattern.permute.xlu0 0
      %2763 = vperm.xlu0 %2762, %v1174
      %v2764 = vpop.permute.xlu0 %2763
      %2767 = vset.pattern.permute.xlu0 0
      %2768 = vperm.xlu0 %2767, %v1175
      %v2769 = vpop.permute.xlu0 %2768
      %2772 = vset.pattern.permute.xlu0 0
      %2773 = vperm.xlu0 %2772, %v1176
      %v2774 = vpop.permute.xlu0 %2773
      %2777 = vset.pattern.permute.xlu0 0
      %2778 = vperm.xlu0 %2777, %v1177
      %v2779 = vpop.permute.xlu0 %2778
      %2782 = vset.pattern.permute.xlu0 0
      %2783 = vperm.xlu0 %2782, %v1178
      %v2784 = vpop.permute.xlu0 %2783
      %2787 = vset.pattern.permute.xlu0 0
      %2788 = vperm.xlu0 %2787, %v1179
      %v2789 = vpop.permute.xlu0 %2788
      %2792 = vset.pattern.permute.xlu0 0
      %2793 = vperm.xlu0 %2792, %v1180
      %v2794 = vpop.permute.xlu0 %2793
      %2797 = vset.pattern.permute.xlu0 0
      %2798 = vperm.xlu0 %2797, %v1181
      %v2799 = vpop.permute.xlu0 %2798
      %2802 = vset.pattern.permute.xlu0 0
      %2803 = vperm.xlu0 %2802, %v1182
      %v2804 = vpop.permute.xlu0 %2803
      %2807 = vset.pattern.permute.xlu0 0
      %2808 = vperm.xlu0 %2807, %v1183
      %v2809 = vpop.permute.xlu0 %2808
      %2812 = vset.pattern.permute.xlu0 0
      %2813 = vperm.xlu0 %2812, %v1184
      %v2814 = vpop.permute.xlu0 %2813
      %2817 = vset.pattern.permute.xlu0 0
      %2818 = vperm.xlu0 %2817, %v1185
      %v2819 = vpop.permute.xlu0 %2818
      %2822 = vset.pattern.permute.xlu0 0
      %2823 = vperm.xlu0 %2822, %v1186
      %v2824 = vpop.permute.xlu0 %2823
      %v2826 = vmul.f32 %v2508, %v2669
      %v2827 = vmul.f32 %v2513, %v2674
      %v2828 = vmul.f32 %v2518, %v2679
      %v2829 = vmul.f32 %v2523, %v2684
      %v2830 = vmul.f32 %v2528, %v2689
      %v2831 = vmul.f32 %v2533, %v2694
      %v2832 = vmul.f32 %v2538, %v2699
      %v2833 = vmul.f32 %v2543, %v2704
      %v2834 = vmul.f32 %v2548, %v2709
      %v2835 = vmul.f32 %v2553, %v2714
      %v2836 = vmul.f32 %v2558, %v2719
      %v2837 = vmul.f32 %v2563, %v2724
      %v2838 = vmul.f32 %v2568, %v2729
      %v2839 = vmul.f32 %v2573, %v2734
      %v2840 = vmul.f32 %v2578, %v2739
      %v2841 = vmul.f32 %v2583, %v2744
      %v2842 = vmul.f32 %v2588, %v2749
      %v2843 = vmul.f32 %v2593, %v2754
      %v2844 = vmul.f32 %v2598, %v2759
      %v2845 = vmul.f32 %v2603, %v2764
      %v2846 = vmul.f32 %v2608, %v2769
      %v2847 = vmul.f32 %v2613, %v2774
      %v2848 = vmul.f32 %v2618, %v2779
      %v2849 = vmul.f32 %v2623, %v2784
      %v2850 = vmul.f32 %v2628, %v2789
      %v2851 = vmul.f32 %v2633, %v2794
      %v2852 = vmul.f32 %v2638, %v2799
      %v2853 = vmul.f32 %v2643, %v2804
      %v2854 = vmul.f32 %v2648, %v2809
      %v2855 = vmul.f32 %v2653, %v2814
      %v2856 = vmul.f32 %v2658, %v2819
      %v2857 = vmul.f32 %v2663, %v2824
      %2859 = vset.pattern.permute.xlu0 0
      %2860 = vperm.xlu0 %2859, %v1091
      %v2861 = vpop.permute.xlu0 %2860
      %2864 = vset.pattern.permute.xlu0 0
      %2865 = vperm.xlu0 %2864, %v1092
      %v2866 = vpop.permute.xlu0 %2865
      %2869 = vset.pattern.permute.xlu0 0
      %2870 = vperm.xlu0 %2869, %v1093
      %v2871 = vpop.permute.xlu0 %2870
      %2874 = vset.pattern.permute.xlu0 0
      %2875 = vperm.xlu0 %2874, %v1094
      %v2876 = vpop.permute.xlu0 %2875
      %2879 = vset.pattern.permute.xlu0 0
      %2880 = vperm.xlu0 %2879, %v1095
      %v2881 = vpop.permute.xlu0 %2880
      %2884 = vset.pattern.permute.xlu0 0
      %2885 = vperm.xlu0 %2884, %v1096
      %v2886 = vpop.permute.xlu0 %2885
      %2889 = vset.pattern.permute.xlu0 0
      %2890 = vperm.xlu0 %2889, %v1097
      %v2891 = vpop.permute.xlu0 %2890
      %2894 = vset.pattern.permute.xlu0 0
      %2895 = vperm.xlu0 %2894, %v1098
      %v2896 = vpop.permute.xlu0 %2895
      %2899 = vset.pattern.permute.xlu0 0
      %2900 = vperm.xlu0 %2899, %v1099
      %v2901 = vpop.permute.xlu0 %2900
      %2904 = vset.pattern.permute.xlu0 0
      %2905 = vperm.xlu0 %2904, %v1100
      %v2906 = vpop.permute.xlu0 %2905
      %2909 = vset.pattern.permute.xlu0 0
      %2910 = vperm.xlu0 %2909, %v1101
      %v2911 = vpop.permute.xlu0 %2910
      %2914 = vset.pattern.permute.xlu0 0
      %2915 = vperm.xlu0 %2914, %v1102
      %v2916 = vpop.permute.xlu0 %2915
      %2919 = vset.pattern.permute.xlu0 0
      %2920 = vperm.xlu0 %2919, %v1103
      %v2921 = vpop.permute.xlu0 %2920
      %2924 = vset.pattern.permute.xlu0 0
      %2925 = vperm.xlu0 %2924, %v1104
      %v2926 = vpop.permute.xlu0 %2925
      %2929 = vset.pattern.permute.xlu0 0
      %2930 = vperm.xlu0 %2929, %v1105
      %v2931 = vpop.permute.xlu0 %2930
      %2934 = vset.pattern.permute.xlu0 0
      %2935 = vperm.xlu0 %2934, %v1106
      %v2936 = vpop.permute.xlu0 %2935
      %2939 = vset.pattern.permute.xlu0 0
      %2940 = vperm.xlu0 %2939, %v1107
      %v2941 = vpop.permute.xlu0 %2940
      %2944 = vset.pattern.permute.xlu0 0
      %2945 = vperm.xlu0 %2944, %v1108
      %v2946 = vpop.permute.xlu0 %2945
      %2949 = vset.pattern.permute.xlu0 0
      %2950 = vperm.xlu0 %2949, %v1109
      %v2951 = vpop.permute.xlu0 %2950
      %2954 = vset.pattern.permute.xlu0 0
      %2955 = vperm.xlu0 %2954, %v1110
      %v2956 = vpop.permute.xlu0 %2955
      %2959 = vset.pattern.permute.xlu0 0
      %2960 = vperm.xlu0 %2959, %v1111
      %v2961 = vpop.permute.xlu0 %2960
      %2964 = vset.pattern.permute.xlu0 0
      %2965 = vperm.xlu0 %2964, %v1112
      %v2966 = vpop.permute.xlu0 %2965
      %2969 = vset.pattern.permute.xlu0 0
      %2970 = vperm.xlu0 %2969, %v1113
      %v2971 = vpop.permute.xlu0 %2970
      %2974 = vset.pattern.permute.xlu0 0
      %2975 = vperm.xlu0 %2974, %v1114
      %v2976 = vpop.permute.xlu0 %2975
      %2979 = vset.pattern.permute.xlu0 0
      %2980 = vperm.xlu0 %2979, %v1115
      %v2981 = vpop.permute.xlu0 %2980
      %2984 = vset.pattern.permute.xlu0 0
      %2985 = vperm.xlu0 %2984, %v1116
      %v2986 = vpop.permute.xlu0 %2985
      %2989 = vset.pattern.permute.xlu0 0
      %2990 = vperm.xlu0 %2989, %v1117
      %v2991 = vpop.permute.xlu0 %2990
      %2994 = vset.pattern.permute.xlu0 0
      %2995 = vperm.xlu0 %2994, %v1118
      %v2996 = vpop.permute.xlu0 %2995
      %2999 = vset.pattern.permute.xlu0 0
      %3000 = vperm.xlu0 %2999, %v1119
      %v3001 = vpop.permute.xlu0 %3000
      %3004 = vset.pattern.permute.xlu0 0
      %3005 = vperm.xlu0 %3004, %v1120
      %v3006 = vpop.permute.xlu0 %3005
      %3009 = vset.pattern.permute.xlu0 0
      %3010 = vperm.xlu0 %3009, %v1121
      %v3011 = vpop.permute.xlu0 %3010
      %3014 = vset.pattern.permute.xlu0 0
      %3015 = vperm.xlu0 %3014, %v1122
      %v3016 = vpop.permute.xlu0 %3015
      %v3018 = vmul.f32 %v2826, %v2861
      %v3019 = vmul.f32 %v2827, %v2866
      %v3020 = vmul.f32 %v2828, %v2871
      %v3021 = vmul.f32 %v2829, %v2876
      %v3022 = vmul.f32 %v2830, %v2881
      %v3023 = vmul.f32 %v2831, %v2886
      %v3024 = vmul.f32 %v2832, %v2891
      %v3025 = vmul.f32 %v2833, %v2896
      %v3026 = vmul.f32 %v2834, %v2901
      %v3027 = vmul.f32 %v2835, %v2906
      %v3028 = vmul.f32 %v2836, %v2911
      %v3029 = vmul.f32 %v2837, %v2916
      %v3030 = vmul.f32 %v2838, %v2921
      %v3031 = vmul.f32 %v2839, %v2926
      %v3032 = vmul.f32 %v2840, %v2931
      %v3033 = vmul.f32 %v2841, %v2936
      %v3034 = vmul.f32 %v2842, %v2941
      %v3035 = vmul.f32 %v2843, %v2946
      %v3036 = vmul.f32 %v2844, %v2951
      %v3037 = vmul.f32 %v2845, %v2956
      %v3038 = vmul.f32 %v2846, %v2961
      %v3039 = vmul.f32 %v2847, %v2966
      %v3040 = vmul.f32 %v2848, %v2971
      %v3041 = vmul.f32 %v2849, %v2976
      %v3042 = vmul.f32 %v2850, %v2981
      %v3043 = vmul.f32 %v2851, %v2986
      %v3044 = vmul.f32 %v2852, %v2991
      %v3045 = vmul.f32 %v2853, %v2996
      %v3046 = vmul.f32 %v2854, %v3001
      %v3047 = vmul.f32 %v2855, %v3006
      %v3048 = vmul.f32 %v2856, %v3011
      %v3049 = vmul.f32 %v2857, %v3016
      %3051 = vset.pattern.permute.xlu0 0
      %3052 = vperm.xlu0 %3051, %v1123
      %v3053 = vpop.permute.xlu0 %3052
      %3056 = vset.pattern.permute.xlu0 0
      %3057 = vperm.xlu0 %3056, %v1124
      %v3058 = vpop.permute.xlu0 %3057
      %3061 = vset.pattern.permute.xlu0 0
      %3062 = vperm.xlu0 %3061, %v1125
      %v3063 = vpop.permute.xlu0 %3062
      %3066 = vset.pattern.permute.xlu0 0
      %3067 = vperm.xlu0 %3066, %v1126
      %v3068 = vpop.permute.xlu0 %3067
      %3071 = vset.pattern.permute.xlu0 0
      %3072 = vperm.xlu0 %3071, %v1127
      %v3073 = vpop.permute.xlu0 %3072
      %3076 = vset.pattern.permute.xlu0 0
      %3077 = vperm.xlu0 %3076, %v1128
      %v3078 = vpop.permute.xlu0 %3077
      %3081 = vset.pattern.permute.xlu0 0
      %3082 = vperm.xlu0 %3081, %v1129
      %v3083 = vpop.permute.xlu0 %3082
      %3086 = vset.pattern.permute.xlu0 0
      %3087 = vperm.xlu0 %3086, %v1130
      %v3088 = vpop.permute.xlu0 %3087
      %3091 = vset.pattern.permute.xlu0 0
      %3092 = vperm.xlu0 %3091, %v1131
      %v3093 = vpop.permute.xlu0 %3092
      %3096 = vset.pattern.permute.xlu0 0
      %3097 = vperm.xlu0 %3096, %v1132
      %v3098 = vpop.permute.xlu0 %3097
      %3101 = vset.pattern.permute.xlu0 0
      %3102 = vperm.xlu0 %3101, %v1133
      %v3103 = vpop.permute.xlu0 %3102
      %3106 = vset.pattern.permute.xlu0 0
      %3107 = vperm.xlu0 %3106, %v1134
      %v3108 = vpop.permute.xlu0 %3107
      %3111 = vset.pattern.permute.xlu0 0
      %3112 = vperm.xlu0 %3111, %v1135
      %v3113 = vpop.permute.xlu0 %3112
      %3116 = vset.pattern.permute.xlu0 0
      %3117 = vperm.xlu0 %3116, %v1136
      %v3118 = vpop.permute.xlu0 %3117
      %3121 = vset.pattern.permute.xlu0 0
      %3122 = vperm.xlu0 %3121, %v1137
      %v3123 = vpop.permute.xlu0 %3122
      %3126 = vset.pattern.permute.xlu0 0
      %3127 = vperm.xlu0 %3126, %v1138
      %v3128 = vpop.permute.xlu0 %3127
      %3131 = vset.pattern.permute.xlu0 0
      %3132 = vperm.xlu0 %3131, %v1139
      %v3133 = vpop.permute.xlu0 %3132
      %3136 = vset.pattern.permute.xlu0 0
      %3137 = vperm.xlu0 %3136, %v1140
      %v3138 = vpop.permute.xlu0 %3137
      %3141 = vset.pattern.permute.xlu0 0
      %3142 = vperm.xlu0 %3141, %v1141
      %v3143 = vpop.permute.xlu0 %3142
      %3146 = vset.pattern.permute.xlu0 0
      %3147 = vperm.xlu0 %3146, %v1142
      %v3148 = vpop.permute.xlu0 %3147
      %3151 = vset.pattern.permute.xlu0 0
      %3152 = vperm.xlu0 %3151, %v1143
      %v3153 = vpop.permute.xlu0 %3152
      %3156 = vset.pattern.permute.xlu0 0
      %3157 = vperm.xlu0 %3156, %v1144
      %v3158 = vpop.permute.xlu0 %3157
      %3161 = vset.pattern.permute.xlu0 0
      %3162 = vperm.xlu0 %3161, %v1145
      %v3163 = vpop.permute.xlu0 %3162
      %3166 = vset.pattern.permute.xlu0 0
      %3167 = vperm.xlu0 %3166, %v1146
      %v3168 = vpop.permute.xlu0 %3167
      %3171 = vset.pattern.permute.xlu0 0
      %3172 = vperm.xlu0 %3171, %v1147
      %v3173 = vpop.permute.xlu0 %3172
      %3176 = vset.pattern.permute.xlu0 0
      %3177 = vperm.xlu0 %3176, %v1148
      %v3178 = vpop.permute.xlu0 %3177
      %3181 = vset.pattern.permute.xlu0 0
      %3182 = vperm.xlu0 %3181, %v1149
      %v3183 = vpop.permute.xlu0 %3182
      %3186 = vset.pattern.permute.xlu0 0
      %3187 = vperm.xlu0 %3186, %v1150
      %v3188 = vpop.permute.xlu0 %3187
      %3191 = vset.pattern.permute.xlu0 0
      %3192 = vperm.xlu0 %3191, %v1151
      %v3193 = vpop.permute.xlu0 %3192
      %3196 = vset.pattern.permute.xlu0 0
      %3197 = vperm.xlu0 %3196, %v1152
      %v3198 = vpop.permute.xlu0 %3197
      %3201 = vset.pattern.permute.xlu0 0
      %3202 = vperm.xlu0 %3201, %v1153
      %v3203 = vpop.permute.xlu0 %3202
      %3206 = vset.pattern.permute.xlu0 0
      %3207 = vperm.xlu0 %3206, %v1154
      %v3208 = vpop.permute.xlu0 %3207
      %v3210 = vmul.f32 %v2826, %v3053
      %v3211 = vmul.f32 %v2827, %v3058
      %v3212 = vmul.f32 %v2828, %v3063
      %v3213 = vmul.f32 %v2829, %v3068
      %v3214 = vmul.f32 %v2830, %v3073
      %v3215 = vmul.f32 %v2831, %v3078
      %v3216 = vmul.f32 %v2832, %v3083
      %v3217 = vmul.f32 %v2833, %v3088
      %v3218 = vmul.f32 %v2834, %v3093
      %v3219 = vmul.f32 %v2835, %v3098
      %v3220 = vmul.f32 %v2836, %v3103
      %v3221 = vmul.f32 %v2837, %v3108
      %v3222 = vmul.f32 %v2838, %v3113
      %v3223 = vmul.f32 %v2839, %v3118
      %v3224 = vmul.f32 %v2840, %v3123
      %v3225 = vmul.f32 %v2841, %v3128
      %v3226 = vmul.f32 %v2842, %v3133
      %v3227 = vmul.f32 %v2843, %v3138
      %v3228 = vmul.f32 %v2844, %v3143
      %v3229 = vmul.f32 %v2845, %v3148
      %v3230 = vmul.f32 %v2846, %v3153
      %v3231 = vmul.f32 %v2847, %v3158
      %v3232 = vmul.f32 %v2848, %v3163
      %v3233 = vmul.f32 %v2849, %v3168
      %v3234 = vmul.f32 %v2850, %v3173
      %v3235 = vmul.f32 %v2851, %v3178
      %v3236 = vmul.f32 %v2852, %v3183
      %v3237 = vmul.f32 %v2853, %v3188
      %v3238 = vmul.f32 %v2854, %v3193
      %v3239 = vmul.f32 %v2855, %v3198
      %v3240 = vmul.f32 %v2856, %v3203
      %v3241 = vmul.f32 %v2857, %v3208
      %v3242 = vld [vmem:[%s513] sm:$0xff]
      %v3243 = vld [vmem:[%s513 + $0x8] sm:$0xff]
      %v3244 = vld [vmem:[%s513 + $0x10] sm:$0xff]
      %v3245 = vld [vmem:[%s513 + $0x18] sm:$0xff]
      %v3246 = vld [vmem:[%s513 + $0x20] sm:$0xff]
      %v3247 = vld [vmem:[%s513 + $0x28] sm:$0xff]
      %v3248 = vld [vmem:[%s513 + $0x30] sm:$0xff]
      %v3249 = vld [vmem:[%s513 + $0x38] sm:$0xff]
      %v3250 = vld [vmem:[%s513 + $0x40] sm:$0xff]
      %v3251 = vld [vmem:[%s513 + $0x48] sm:$0xff]
      %v3252 = vld [vmem:[%s513 + $0x50] sm:$0xff]
      %v3253 = vld [vmem:[%s513 + $0x58] sm:$0xff]
      %v3254 = vld [vmem:[%s513 + $0x60] sm:$0xff]
      %v3255 = vld [vmem:[%s513 + $0x68] sm:$0xff]
      %v3256 = vld [vmem:[%s513 + $0x70] sm:$0xff]
      %v3257 = vld [vmem:[%s513 + $0x78] sm:$0xff]
      %v3258 = vld [vmem:[%s513 + $0x80] sm:$0xff]
      %v3259 = vld [vmem:[%s513 + $0x88] sm:$0xff]
      %v3260 = vld [vmem:[%s513 + $0x90] sm:$0xff]
      %v3261 = vld [vmem:[%s513 + $0x98] sm:$0xff]
      %v3262 = vld [vmem:[%s513 + $0xa0] sm:$0xff]
      %v3263 = vld [vmem:[%s513 + $0xa8] sm:$0xff]
      %v3264 = vld [vmem:[%s513 + $0xb0] sm:$0xff]
      %v3265 = vld [vmem:[%s513 + $0xb8] sm:$0xff]
      %vm3266 = vcmask 523264
      %v3268 = vsel %vm3266, %v737, 0
      %v3271 = vsel %vm3266, %v738, 0
      %v3274 = vsel %vm3266, %v739, 0
      %v3277 = vsel %vm3266, %v740, 0
      %v3280 = vsel %vm3266, %v741, 0
      %v3283 = vsel %vm3266, %v742, 0
      %v3286 = vsel %vm3266, %v743, 0
      %v3289 = vsel %vm3266, %v744, 0
      %v3292 = vsel %vm3266, %v745, 0
      %v3295 = vsel %vm3266, %v746, 0
      %v3298 = vsel %vm3266, %v747, 0
      %v3301 = vsel %vm3266, %v748, 0
      %v3304 = vsel %vm3266, %v749, 0
      %v3307 = vsel %vm3266, %v750, 0
      %v3310 = vsel %vm3266, %v751, 0
      %v3313 = vsel %vm3266, %v752, 0
      %v3316 = vsel %vm3266, %v753, 0
      %v3319 = vsel %vm3266, %v754, 0
      %v3322 = vsel %vm3266, %v755, 0
      %v3325 = vsel %vm3266, %v756, 0
      %v3328 = vsel %vm3266, %v757, 0
      %v3331 = vsel %vm3266, %v758, 0
      %v3334 = vsel %vm3266, %v759, 0
      %v3337 = vsel %vm3266, %v760, 0
      %v3340 = vsel %vm3266, %v761, 0
      %v3343 = vsel %vm3266, %v762, 0
      %v3346 = vsel %vm3266, %v763, 0
      %v3349 = vsel %vm3266, %v764, 0
      %v3352 = vsel %vm3266, %v765, 0
      %v3355 = vsel %vm3266, %v766, 0
      %v3358 = vsel %vm3266, %v767, 0
      %v3361 = vsel %vm3266, %v768, 0
      %3363 = vmatprep.subr.mxu0 %v3243
      %3364 = vmatpush1.msra.mxu0 %v3242
      %3365 = vmatprep.subr.mxu0 %v3246
      %3366 = vmatpush1.msra.mxu0 %v3245
      %3367 = vmatprep.subr.mxu0 %v3249
      %3368 = vmatpush1.msra.mxu0 %v3248
      %3369 = vmatprep.subr.mxu0 %v3252
      %3370 = vmatpush1.msra.mxu0 %v3251
      %3371 = vmatprep.subr.mxu0 %v3255
      %3372 = vmatpush1.msra.mxu0 %v3254
      %3373 = vmatprep.subr.mxu0 %v3258
      %3374 = vmatpush1.msra.mxu0 %v3257
      %3375 = vmatprep.subr.mxu0 %v3261
      %3376 = vmatpush1.msra.mxu0 %v3260
      %3377 = vmatprep.subr.mxu0 %v3264
      %3378 = vmatpush1.msra.mxu0 %v3263
      %3379 = vmatprep.subr.mxu0 0.0
      %3380 = vmatpush1.msra.mxu0 0.0
      %3381 = vmatprep.subr.mxu0 0.0
      %3382 = vmatpush1.msra.mxu0 0.0
      %3383 = vmatprep.subr.mxu0 0.0
      %3384 = vmatpush1.msra.mxu0 0.0
      %3385 = vmatprep.subr.mxu0 0.0
      %3386 = vmatpush1.msra.mxu0 0.0
      %3387 = vmatprep.subr.mxu0 0.0
      %3388 = vmatpush1.msra.mxu0 0.0
      %3389 = vmatprep.subr.mxu0 0.0
      %3390 = vmatpush1.msra.mxu0 0.0
      %3391 = vmatprep.subr.mxu0 0.0
      %3392 = vmatpush1.msra.mxu0 0.0
      %3393 = vmatprep.subr.mxu0 0.0
      %3394 = vmatpush1.msra.mxu0 0.0
      %3395 = vmatprep.subr.mxu0 0.0
      %3396 = vmatpush1.msra.mxu0 0.0
      %3397 = vmatprep.subr.mxu0 0.0
      %3398 = vmatpush1.msra.mxu0 0.0
      %3399 = vmatprep.subr.mxu0 0.0
      %3400 = vmatpush1.msra.mxu0 0.0
      %3401 = vmatprep.subr.mxu0 0.0
      %3402 = vmatpush1.msra.mxu0 0.0
      %3403 = vmatprep.subr.mxu0 0.0
      %3404 = vmatpush1.msra.mxu0 0.0
      %3405 = vmatprep.subr.mxu0 0.0
      %3406 = vmatpush1.msra.mxu0 0.0
      %3407 = vmatprep.subr.mxu0 0.0
      %3408 = vmatpush1.msra.mxu0 0.0
      %3409 = vmatprep.subr.mxu0 0.0
      %3410 = vmatpush1.msra.mxu0 0.0
      %3411 = vmatprep.subr.mxu0 0.0
      %3412 = vmatpush1.msra.mxu0 0.0
      %3413 = vmatprep.subr.mxu0 0.0
      %3414 = vmatpush1.msra.mxu0 0.0
      %3415 = vmatprep.subr.mxu0 0.0
      %3416 = vmatpush1.msra.mxu0 0.0
      %3417 = vmatprep.subr.mxu0 0.0
      %3418 = vmatpush1.msra.mxu0 0.0
      %3419 = vmatprep.subr.mxu0 0.0
      %3420 = vmatpush1.msra.mxu0 0.0
      %3421 = vmatprep.subr.mxu0 0.0
      %3422 = vmatpush1.msra.mxu0 0.0
      %3423 = vmatprep.subr.mxu0 0.0
      %3424 = vmatpush1.msra.mxu0 0.0
      %3425 = vmatprep.subr.mxu0 0.0
      %3426 = vmatpush1.msra.mxu0 0.0
      %3427 = vmatprep.mubr.f32.mxu0 0.0
      %3428 = vmatmul.mubr.f32.gmra.mrb[0].mxu0 %v3268
      %v3429 = vpop.f32.mrb[0].mxu0
      %v3430 = vadd.f32 0.0, %v3429
      %v3431 = vpop.f32.mrb[0].mxu0
      %v3432 = vadd.f32 0.0, %v3431
      %3433 = vmatprep.mubr.f32.mxu0 0.0
      %3434 = vmatmul.mubr.f32.gmra.mrb[0].mxu0 %v3271
      %v3435 = vpop.f32.mrb[0].mxu0
      %v3436 = vadd.f32 0.0, %v3435
      %v3437 = vpop.f32.mrb[0].mxu0
      %v3438 = vadd.f32 0.0, %v3437
      %3439 = vmatprep.mubr.f32.mxu0 0.0
      %3440 = vmatmul.mubr.f32.gmra.mrb[0].mxu0 %v3274
      %v3441 = vpop.f32.mrb[0].mxu0
      %v3442 = vadd.f32 0.0, %v3441
      %v3443 = vpop.f32.mrb[0].mxu0
      %v3444 = vadd.f32 0.0, %v3443
      %3445 = vmatprep.mubr.f32.mxu0 0.0
      %3446 = vmatmul.mubr.f32.gmra.mrb[0].mxu0 %v3277
      %v3447 = vpop.f32.mrb[0].mxu0
      %v3448 = vadd.f32 0.0, %v3447
      %v3449 = vpop.f32.mrb[0].mxu0
      %v3450 = vadd.f32 0.0, %v3449
      %3451 = vmatprep.mubr.f32.mxu0 0.0
      %3452 = vmatmul.mubr.f32.gmra.mrb[0].mxu0 %v3280
      %v3453 = vpop.f32.mrb[0].mxu0
      %v3454 = vadd.f32 0.0, %v3453
      %v3455 = vpop.f32.mrb[0].mxu0
      %v3456 = vadd.f32 0.0, %v3455
      %3457 = vmatprep.mubr.f32.mxu0 0.0
      %3458 = vmatmul.mubr.f32.gmra.mrb[0].mxu0 %v3283
      %v3459 = vpop.f32.mrb[0].mxu0
      %v3460 = vadd.f32 0.0, %v3459
      %v3461 = vpop.f32.mrb[0].mxu0
      %v3462 = vadd.f32 0.0, %v3461
      %3463 = vmatprep.mubr.f32.mxu0 0.0
      %3464 = vmatmul.mubr.f32.gmra.mrb[0].mxu0 %v3286
      %v3465 = vpop.f32.mrb[0].mxu0
      %v3466 = vadd.f32 0.0, %v3465
      %v3467 = vpop.f32.mrb[0].mxu0
      %v3468 = vadd.f32 0.0, %v3467
      %3469 = vmatprep.mubr.f32.mxu0 0.0
      %3470 = vmatmul.mubr.f32.gmra.mrb[0].mxu0 %v3289
      %v3471 = vpop.f32.mrb[0].mxu0
      %v3472 = vadd.f32 0.0, %v3471
      %v3473 = vpop.f32.mrb[0].mxu0
      %v3474 = vadd.f32 0.0, %v3473
      %3475 = vmatprep.mubr.f32.mxu0 0.0
      %3476 = vmatmul.mubr.f32.gmra.mrb[0].mxu0 %v3292
      %v3477 = vpop.f32.mrb[0].mxu0
      %v3478 = vadd.f32 0.0, %v3477
      %v3479 = vpop.f32.mrb[0].mxu0
      %v3480 = vadd.f32 0.0, %v3479
      %3481 = vmatprep.mubr.f32.mxu0 0.0
      %3482 = vmatmul.mubr.f32.gmra.mrb[0].mxu0 %v3295
      %v3483 = vpop.f32.mrb[0].mxu0
      %v3484 = vadd.f32 0.0, %v3483
      %v3485 = vpop.f32.mrb[0].mxu0
      %v3486 = vadd.f32 0.0, %v3485
      %3487 = vmatprep.mubr.f32.mxu0 0.0
      %3488 = vmatmul.mubr.f32.gmra.mrb[0].mxu0 %v3298
      %v3489 = vpop.f32.mrb[0].mxu0
      %v3490 = vadd.f32 0.0, %v3489
      %v3491 = vpop.f32.mrb[0].mxu0
      %v3492 = vadd.f32 0.0, %v3491
      %3493 = vmatprep.mubr.f32.mxu0 0.0
      %3494 = vmatmul.mubr.f32.gmra.mrb[0].mxu0 %v3301
      %v3495 = vpop.f32.mrb[0].mxu0
      %v3496 = vadd.f32 0.0, %v3495
      %v3497 = vpop.f32.mrb[0].mxu0
      %v3498 = vadd.f32 0.0, %v3497
      %3499 = vmatprep.mubr.f32.mxu0 0.0
      %3500 = vmatmul.mubr.f32.gmra.mrb[0].mxu0 %v3304
      %v3501 = vpop.f32.mrb[0].mxu0
      %v3502 = vadd.f32 0.0, %v3501
      %v3503 = vpop.f32.mrb[0].mxu0
      %v3504 = vadd.f32 0.0, %v3503
      %3505 = vmatprep.mubr.f32.mxu0 0.0
      %3506 = vmatmul.mubr.f32.gmra.mrb[0].mxu0 %v3307
      %v3507 = vpop.f32.mrb[0].mxu0
      %v3508 = vadd.f32 0.0, %v3507
      %v3509 = vpop.f32.mrb[0].mxu0
      %v3510 = vadd.f32 0.0, %v3509
      %3511 = vmatprep.mubr.f32.mxu0 0.0
      %3512 = vmatmul.mubr.f32.gmra.mrb[0].mxu0 %v3310
      %v3513 = vpop.f32.mrb[0].mxu0
      %v3514 = vadd.f32 0.0, %v3513
      %v3515 = vpop.f32.mrb[0].mxu0
      %v3516 = vadd.f32 0.0, %v3515
      %3517 = vmatprep.mubr.f32.mxu0 0.0
      %3518 = vmatmul.mubr.f32.gmra.mrb[0].mxu0 %v3313
      %v3519 = vpop.f32.mrb[0].mxu0
      %v3520 = vadd.f32 0.0, %v3519
      %v3521 = vpop.f32.mrb[0].mxu0
      %v3522 = vadd.f32 0.0, %v3521
      %3523 = vmatprep.mubr.f32.mxu0 0.0
      %3524 = vmatmul.mubr.f32.gmra.mrb[0].mxu0 %v3316
      %v3525 = vpop.f32.mrb[0].mxu0
      %v3526 = vadd.f32 0.0, %v3525
      %v3527 = vpop.f32.mrb[0].mxu0
      %v3528 = vadd.f32 0.0, %v3527
      %3529 = vmatprep.mubr.f32.mxu0 0.0
      %3530 = vmatmul.mubr.f32.gmra.mrb[0].mxu0 %v3319
      %v3531 = vpop.f32.mrb[0].mxu0
      %v3532 = vadd.f32 0.0, %v3531
      %v3533 = vpop.f32.mrb[0].mxu0
      %v3534 = vadd.f32 0.0, %v3533
      %3535 = vmatprep.mubr.f32.mxu0 0.0
      %3536 = vmatmul.mubr.f32.gmra.mrb[0].mxu0 %v3322
      %v3537 = vpop.f32.mrb[0].mxu0
      %v3538 = vadd.f32 0.0, %v3537
      %v3539 = vpop.f32.mrb[0].mxu0
      %v3540 = vadd.f32 0.0, %v3539
      %3541 = vmatprep.mubr.f32.mxu0 0.0
      %3542 = vmatmul.mubr.f32.gmra.mrb[0].mxu0 %v3325
      %v3543 = vpop.f32.mrb[0].mxu0
      %v3544 = vadd.f32 0.0, %v3543
      %v3545 = vpop.f32.mrb[0].mxu0
      %v3546 = vadd.f32 0.0, %v3545
      %3547 = vmatprep.mubr.f32.mxu0 0.0
      %3548 = vmatmul.mubr.f32.gmra.mrb[0].mxu0 %v3328
      %v3549 = vpop.f32.mrb[0].mxu0
      %v3550 = vadd.f32 0.0, %v3549
      %v3551 = vpop.f32.mrb[0].mxu0
      %v3552 = vadd.f32 0.0, %v3551
      %3553 = vmatprep.mubr.f32.mxu0 0.0
      %3554 = vmatmul.mubr.f32.gmra.mrb[0].mxu0 %v3331
      %v3555 = vpop.f32.mrb[0].mxu0
      %v3556 = vadd.f32 0.0, %v3555
      %v3557 = vpop.f32.mrb[0].mxu0
      %v3558 = vadd.f32 0.0, %v3557
      %3559 = vmatprep.mubr.f32.mxu0 0.0
      %3560 = vmatmul.mubr.f32.gmra.mrb[0].mxu0 %v3334
      %v3561 = vpop.f32.mrb[0].mxu0
      %v3562 = vadd.f32 0.0, %v3561
      %v3563 = vpop.f32.mrb[0].mxu0
      %v3564 = vadd.f32 0.0, %v3563
      %3565 = vmatprep.mubr.f32.mxu0 0.0
      %3566 = vmatmul.mubr.f32.gmra.mrb[0].mxu0 %v3337
      %v3567 = vpop.f32.mrb[0].mxu0
      %v3568 = vadd.f32 0.0, %v3567
      %v3569 = vpop.f32.mrb[0].mxu0
      %v3570 = vadd.f32 0.0, %v3569
      %3571 = vmatprep.mubr.f32.mxu0 0.0
      %3572 = vmatmul.mubr.f32.gmra.mrb[0].mxu0 %v3340
      %v3573 = vpop.f32.mrb[0].mxu0
      %v3574 = vadd.f32 0.0, %v3573
      %v3575 = vpop.f32.mrb[0].mxu0
      %v3576 = vadd.f32 0.0, %v3575
      %3577 = vmatprep.mubr.f32.mxu0 0.0
      %3578 = vmatmul.mubr.f32.gmra.mrb[0].mxu0 %v3343
      %v3579 = vpop.f32.mrb[0].mxu0
      %v3580 = vadd.f32 0.0, %v3579
      %v3581 = vpop.f32.mrb[0].mxu0
      %v3582 = vadd.f32 0.0, %v3581
      %3583 = vmatprep.mubr.f32.mxu0 0.0
      %3584 = vmatmul.mubr.f32.gmra.mrb[0].mxu0 %v3346
      %v3585 = vpop.f32.mrb[0].mxu0
      %v3586 = vadd.f32 0.0, %v3585
      %v3587 = vpop.f32.mrb[0].mxu0
      %v3588 = vadd.f32 0.0, %v3587
      %3589 = vmatprep.mubr.f32.mxu0 0.0
      %3590 = vmatmul.mubr.f32.gmra.mrb[0].mxu0 %v3349
      %v3591 = vpop.f32.mrb[0].mxu0
      %v3592 = vadd.f32 0.0, %v3591
      %v3593 = vpop.f32.mrb[0].mxu0
      %v3594 = vadd.f32 0.0, %v3593
      %3595 = vmatprep.mubr.f32.mxu0 0.0
      %3596 = vmatmul.mubr.f32.gmra.mrb[0].mxu0 %v3352
      %v3597 = vpop.f32.mrb[0].mxu0
      %v3598 = vadd.f32 0.0, %v3597
      %v3599 = vpop.f32.mrb[0].mxu0
      %v3600 = vadd.f32 0.0, %v3599
      %3601 = vmatprep.mubr.f32.mxu0 0.0
      %3602 = vmatmul.mubr.f32.gmra.mrb[0].mxu0 %v3355
      %v3603 = vpop.f32.mrb[0].mxu0
      %v3604 = vadd.f32 0.0, %v3603
      %v3605 = vpop.f32.mrb[0].mxu0
      %v3606 = vadd.f32 0.0, %v3605
      %3607 = vmatprep.mubr.f32.mxu0 0.0
      %3608 = vmatmul.mubr.f32.gmra.mrb[0].mxu0 %v3358
      %v3609 = vpop.f32.mrb[0].mxu0
      %v3610 = vadd.f32 0.0, %v3609
      %v3611 = vpop.f32.mrb[0].mxu0
      %v3612 = vadd.f32 0.0, %v3611
      %3613 = vmatprep.mubr.f32.mxu0 0.0
      %3614 = vmatmul.mubr.f32.gmra.mrb[0].mxu0 %v3361
      %v3615 = vpop.f32.mrb[0].mxu0
      %v3616 = vadd.f32 0.0, %v3615
      %v3617 = vpop.f32.mrb[0].mxu0
      %v3618 = vadd.f32 0.0, %v3617
      %3619 = vdwg.mxu0
      %3620 = vmatprep.subr.mxu0 0.0
      %3621 = vmatpush1.msra.mxu0 %v3244
      %3622 = vmatprep.subr.mxu0 0.0
      %3623 = vmatpush1.msra.mxu0 %v3247
      %3624 = vmatprep.subr.mxu0 0.0
      %3625 = vmatpush1.msra.mxu0 %v3250
      %3626 = vmatprep.subr.mxu0 0.0
      %3627 = vmatpush1.msra.mxu0 %v3253
      %3628 = vmatprep.subr.mxu0 0.0
      %3629 = vmatpush1.msra.mxu0 %v3256
      %3630 = vmatprep.subr.mxu0 0.0
      %3631 = vmatpush1.msra.mxu0 %v3259
      %3632 = vmatprep.subr.mxu0 0.0
      %3633 = vmatpush1.msra.mxu0 %v3262
      %3634 = vmatprep.subr.mxu0 0.0
      %3635 = vmatpush1.msra.mxu0 %v3265
      %3636 = vmatprep.subr.mxu0 0.0
      %3637 = vmatpush1.msra.mxu0 0.0
      %3638 = vmatprep.subr.mxu0 0.0
      %3639 = vmatpush1.msra.mxu0 0.0
      %3640 = vmatprep.subr.mxu0 0.0
      %3641 = vmatpush1.msra.mxu0 0.0
      %3642 = vmatprep.subr.mxu0 0.0
      %3643 = vmatpush1.msra.mxu0 0.0
      %3644 = vmatprep.subr.mxu0 0.0
      %3645 = vmatpush1.msra.mxu0 0.0
      %3646 = vmatprep.subr.mxu0 0.0
      %3647 = vmatpush1.msra.mxu0 0.0
      %3648 = vmatprep.subr.mxu0 0.0
      %3649 = vmatpush1.msra.mxu0 0.0
      %3650 = vmatprep.subr.mxu0 0.0
      %3651 = vmatpush1.msra.mxu0 0.0
      %3652 = vmatprep.subr.mxu0 0.0
      %3653 = vmatpush1.msra.mxu0 0.0
      %3654 = vmatprep.subr.mxu0 0.0
      %3655 = vmatpush1.msra.mxu0 0.0
      %3656 = vmatprep.subr.mxu0 0.0
      %3657 = vmatpush1.msra.mxu0 0.0
      %3658 = vmatprep.subr.mxu0 0.0
      %3659 = vmatpush1.msra.mxu0 0.0
      %3660 = vmatprep.subr.mxu0 0.0
      %3661 = vmatpush1.msra.mxu0 0.0
      %3662 = vmatprep.subr.mxu0 0.0
      %3663 = vmatpush1.msra.mxu0 0.0
      %3664 = vmatprep.subr.mxu0 0.0
      %3665 = vmatpush1.msra.mxu0 0.0
      %3666 = vmatprep.subr.mxu0 0.0
      %3667 = vmatpush1.msra.mxu0 0.0
      %3668 = vmatprep.subr.mxu0 0.0
      %3669 = vmatpush1.msra.mxu0 0.0
      %3670 = vmatprep.subr.mxu0 0.0
      %3671 = vmatpush1.msra.mxu0 0.0
      %3672 = vmatprep.subr.mxu0 0.0
      %3673 = vmatpush1.msra.mxu0 0.0
      %3674 = vmatprep.subr.mxu0 0.0
      %3675 = vmatpush1.msra.mxu0 0.0
      %3676 = vmatprep.subr.mxu0 0.0
      %3677 = vmatpush1.msra.mxu0 0.0
      %3678 = vmatprep.subr.mxu0 0.0
      %3679 = vmatpush1.msra.mxu0 0.0
      %3680 = vmatprep.subr.mxu0 0.0
      %3681 = vmatpush1.msra.mxu0 0.0
      %3682 = vmatprep.subr.mxu0 0.0
      %3683 = vmatpush1.msra.mxu0 0.0
      %3684 = vmatprep.mubr.f32.mxu0 0.0
      %3685 = vmatmul.mubr.f32.gmra.mrb[0].mxu0 %v3268
      %v3686 = vpop.f32.mrb[0].mxu0
      %v3687 = vadd.f32 0.0, %v3686
      %v3688 = vpop.f32.mrb[0].mxu0
      %3689 = vmatprep.mubr.f32.mxu0 0.0
      %3690 = vmatmul.mubr.f32.gmra.mrb[0].mxu0 %v3271
      %v3691 = vpop.f32.mrb[0].mxu0
      %v3692 = vadd.f32 0.0, %v3691
      %v3693 = vpop.f32.mrb[0].mxu0
      %3694 = vmatprep.mubr.f32.mxu0 0.0
      %3695 = vmatmul.mubr.f32.gmra.mrb[0].mxu0 %v3274
      %v3696 = vpop.f32.mrb[0].mxu0
      %v3697 = vadd.f32 0.0, %v3696
      %v3698 = vpop.f32.mrb[0].mxu0
      %3699 = vmatprep.mubr.f32.mxu0 0.0
      %3700 = vmatmul.mubr.f32.gmra.mrb[0].mxu0 %v3277
      %v3701 = vpop.f32.mrb[0].mxu0
      %v3702 = vadd.f32 0.0, %v3701
      %v3703 = vpop.f32.mrb[0].mxu0
      %3704 = vmatprep.mubr.f32.mxu0 0.0
      %3705 = vmatmul.mubr.f32.gmra.mrb[0].mxu0 %v3280
      %v3706 = vpop.f32.mrb[0].mxu0
      %v3707 = vadd.f32 0.0, %v3706
      %v3708 = vpop.f32.mrb[0].mxu0
      %3709 = vmatprep.mubr.f32.mxu0 0.0
      %3710 = vmatmul.mubr.f32.gmra.mrb[0].mxu0 %v3283
      %v3711 = vpop.f32.mrb[0].mxu0
      %v3712 = vadd.f32 0.0, %v3711
      %v3713 = vpop.f32.mrb[0].mxu0
      %3714 = vmatprep.mubr.f32.mxu0 0.0
      %3715 = vmatmul.mubr.f32.gmra.mrb[0].mxu0 %v3286
      %v3716 = vpop.f32.mrb[0].mxu0
      %v3717 = vadd.f32 0.0, %v3716
      %v3718 = vpop.f32.mrb[0].mxu0
      %3719 = vmatprep.mubr.f32.mxu0 0.0
      %3720 = vmatmul.mubr.f32.gmra.mrb[0].mxu0 %v3289
      %v3721 = vpop.f32.mrb[0].mxu0
      %v3722 = vadd.f32 0.0, %v3721
      %v3723 = vpop.f32.mrb[0].mxu0
      %3724 = vmatprep.mubr.f32.mxu0 0.0
      %3725 = vmatmul.mubr.f32.gmra.mrb[0].mxu0 %v3292
      %v3726 = vpop.f32.mrb[0].mxu0
      %v3727 = vadd.f32 0.0, %v3726
      %v3728 = vpop.f32.mrb[0].mxu0
      %3729 = vmatprep.mubr.f32.mxu0 0.0
      %3730 = vmatmul.mubr.f32.gmra.mrb[0].mxu0 %v3295
      %v3731 = vpop.f32.mrb[0].mxu0
      %v3732 = vadd.f32 0.0, %v3731
      %v3733 = vpop.f32.mrb[0].mxu0
      %3734 = vmatprep.mubr.f32.mxu0 0.0
      %3735 = vmatmul.mubr.f32.gmra.mrb[0].mxu0 %v3298
      %v3736 = vpop.f32.mrb[0].mxu0
      %v3737 = vadd.f32 0.0, %v3736
      %v3738 = vpop.f32.mrb[0].mxu0
      %3739 = vmatprep.mubr.f32.mxu0 0.0
      %3740 = vmatmul.mubr.f32.gmra.mrb[0].mxu0 %v3301
      %v3741 = vpop.f32.mrb[0].mxu0
      %v3742 = vadd.f32 0.0, %v3741
      %v3743 = vpop.f32.mrb[0].mxu0
      %3744 = vmatprep.mubr.f32.mxu0 0.0
      %3745 = vmatmul.mubr.f32.gmra.mrb[0].mxu0 %v3304
      %v3746 = vpop.f32.mrb[0].mxu0
      %v3747 = vadd.f32 0.0, %v3746
      %v3748 = vpop.f32.mrb[0].mxu0
      %3749 = vmatprep.mubr.f32.mxu0 0.0
      %3750 = vmatmul.mubr.f32.gmra.mrb[0].mxu0 %v3307
      %v3751 = vpop.f32.mrb[0].mxu0
      %v3752 = vadd.f32 0.0, %v3751
      %v3753 = vpop.f32.mrb[0].mxu0
      %3754 = vmatprep.mubr.f32.mxu0 0.0
      %3755 = vmatmul.mubr.f32.gmra.mrb[0].mxu0 %v3310
      %v3756 = vpop.f32.mrb[0].mxu0
      %v3757 = vadd.f32 0.0, %v3756
      %v3758 = vpop.f32.mrb[0].mxu0
      %3759 = vmatprep.mubr.f32.mxu0 0.0
      %3760 = vmatmul.mubr.f32.gmra.mrb[0].mxu0 %v3313
      %v3761 = vpop.f32.mrb[0].mxu0
      %v3762 = vadd.f32 0.0, %v3761
      %v3763 = vpop.f32.mrb[0].mxu0
      %3764 = vmatprep.mubr.f32.mxu0 0.0
      %3765 = vmatmul.mubr.f32.gmra.mrb[0].mxu0 %v3316
      %v3766 = vpop.f32.mrb[0].mxu0
      %v3767 = vadd.f32 0.0, %v3766
      %v3768 = vpop.f32.mrb[0].mxu0
      %3769 = vmatprep.mubr.f32.mxu0 0.0
      %3770 = vmatmul.mubr.f32.gmra.mrb[0].mxu0 %v3319
      %v3771 = vpop.f32.mrb[0].mxu0
      %v3772 = vadd.f32 0.0, %v3771
      %v3773 = vpop.f32.mrb[0].mxu0
      %3774 = vmatprep.mubr.f32.mxu0 0.0
      %3775 = vmatmul.mubr.f32.gmra.mrb[0].mxu0 %v3322
      %v3776 = vpop.f32.mrb[0].mxu0
      %v3777 = vadd.f32 0.0, %v3776
      %v3778 = vpop.f32.mrb[0].mxu0
      %3779 = vmatprep.mubr.f32.mxu0 0.0
      %3780 = vmatmul.mubr.f32.gmra.mrb[0].mxu0 %v3325
      %v3781 = vpop.f32.mrb[0].mxu0
      %v3782 = vadd.f32 0.0, %v3781
      %v3783 = vpop.f32.mrb[0].mxu0
      %3784 = vmatprep.mubr.f32.mxu0 0.0
      %3785 = vmatmul.mubr.f32.gmra.mrb[0].mxu0 %v3328
      %v3786 = vpop.f32.mrb[0].mxu0
      %v3787 = vadd.f32 0.0, %v3786
      %v3788 = vpop.f32.mrb[0].mxu0
      %3789 = vmatprep.mubr.f32.mxu0 0.0
      %3790 = vmatmul.mubr.f32.gmra.mrb[0].mxu0 %v3331
      %v3791 = vpop.f32.mrb[0].mxu0
      %v3792 = vadd.f32 0.0, %v3791
      %v3793 = vpop.f32.mrb[0].mxu0
      %3794 = vmatprep.mubr.f32.mxu0 0.0
      %3795 = vmatmul.mubr.f32.gmra.mrb[0].mxu0 %v3334
      %v3796 = vpop.f32.mrb[0].mxu0
      %v3797 = vadd.f32 0.0, %v3796
      %v3798 = vpop.f32.mrb[0].mxu0
      %3799 = vmatprep.mubr.f32.mxu0 0.0
      %3800 = vmatmul.mubr.f32.gmra.mrb[0].mxu0 %v3337
      %v3801 = vpop.f32.mrb[0].mxu0
      %v3802 = vadd.f32 0.0, %v3801
      %v3803 = vpop.f32.mrb[0].mxu0
      %3804 = vmatprep.mubr.f32.mxu0 0.0
      %3805 = vmatmul.mubr.f32.gmra.mrb[0].mxu0 %v3340
      %v3806 = vpop.f32.mrb[0].mxu0
      %v3807 = vadd.f32 0.0, %v3806
      %v3808 = vpop.f32.mrb[0].mxu0
      %3809 = vmatprep.mubr.f32.mxu0 0.0
      %3810 = vmatmul.mubr.f32.gmra.mrb[0].mxu0 %v3343
      %v3811 = vpop.f32.mrb[0].mxu0
      %v3812 = vadd.f32 0.0, %v3811
      %v3813 = vpop.f32.mrb[0].mxu0
      %3814 = vmatprep.mubr.f32.mxu0 0.0
      %3815 = vmatmul.mubr.f32.gmra.mrb[0].mxu0 %v3346
      %v3816 = vpop.f32.mrb[0].mxu0
      %v3817 = vadd.f32 0.0, %v3816
      %v3818 = vpop.f32.mrb[0].mxu0
      %3819 = vmatprep.mubr.f32.mxu0 0.0
      %3820 = vmatmul.mubr.f32.gmra.mrb[0].mxu0 %v3349
      %v3821 = vpop.f32.mrb[0].mxu0
      %v3822 = vadd.f32 0.0, %v3821
      %v3823 = vpop.f32.mrb[0].mxu0
      %3824 = vmatprep.mubr.f32.mxu0 0.0
      %3825 = vmatmul.mubr.f32.gmra.mrb[0].mxu0 %v3352
      %v3826 = vpop.f32.mrb[0].mxu0
      %v3827 = vadd.f32 0.0, %v3826
      %v3828 = vpop.f32.mrb[0].mxu0
      %3829 = vmatprep.mubr.f32.mxu0 0.0
      %3830 = vmatmul.mubr.f32.gmra.mrb[0].mxu0 %v3355
      %v3831 = vpop.f32.mrb[0].mxu0
      %v3832 = vadd.f32 0.0, %v3831
      %v3833 = vpop.f32.mrb[0].mxu0
      %3834 = vmatprep.mubr.f32.mxu0 0.0
      %3835 = vmatmul.mubr.f32.gmra.mrb[0].mxu0 %v3358
      %v3836 = vpop.f32.mrb[0].mxu0
      %v3837 = vadd.f32 0.0, %v3836
      %v3838 = vpop.f32.mrb[0].mxu0
      %3839 = vmatprep.mubr.f32.mxu0 0.0
      %3840 = vmatmul.mubr.f32.gmra.mrb[0].mxu0 %v3361
      %v3841 = vpop.f32.mrb[0].mxu0
      %v3842 = vadd.f32 0.0, %v3841
      %v3843 = vpop.f32.mrb[0].mxu0
      %3844 = vdwg.mxu0
      %v3845 = vmul.f32 %v1222, %v3430
      %v3846 = vmul.f32 %v1227, %v3436
      %v3847 = vmul.f32 %v1232, %v3442
      %v3848 = vmul.f32 %v1237, %v3448
      %v3849 = vmul.f32 %v1242, %v3454
      %v3850 = vmul.f32 %v1247, %v3460
      %v3851 = vmul.f32 %v1252, %v3466
      %v3852 = vmul.f32 %v1257, %v3472
      %v3853 = vmul.f32 %v1262, %v3478
      %v3854 = vmul.f32 %v1267, %v3484
      %v3855 = vmul.f32 %v1272, %v3490
      %v3856 = vmul.f32 %v1277, %v3496
      %v3857 = vmul.f32 %v1282, %v3502
      %v3858 = vmul.f32 %v1287, %v3508
      %v3859 = vmul.f32 %v1292, %v3514
      %v3860 = vmul.f32 %v1297, %v3520
      %v3861 = vmul.f32 %v1302, %v3526
      %v3862 = vmul.f32 %v1307, %v3532
      %v3863 = vmul.f32 %v1312, %v3538
      %v3864 = vmul.f32 %v1317, %v3544
      %v3865 = vmul.f32 %v1322, %v3550
      %v3866 = vmul.f32 %v1327, %v3556
      %v3867 = vmul.f32 %v1332, %v3562
      %v3868 = vmul.f32 %v1337, %v3568
      %v3869 = vmul.f32 %v1342, %v3574
      %v3870 = vmul.f32 %v1347, %v3580
      %v3871 = vmul.f32 %v1352, %v3586
      %v3872 = vmul.f32 %v1357, %v3592
      %v3873 = vmul.f32 %v1362, %v3598
      %v3874 = vmul.f32 %v1367, %v3604
      %v3875 = vmul.f32 %v1372, %v3610
      %v3876 = vmul.f32 %v1377, %v3616
      %v3877 = vmul.f32 %v1415, %v3432
      %v3878 = vmul.f32 %v1420, %v3438
      %v3879 = vmul.f32 %v1425, %v3444
      %v3880 = vmul.f32 %v1430, %v3450
      %v3881 = vmul.f32 %v1435, %v3456
      %v3882 = vmul.f32 %v1440, %v3462
      %v3883 = vmul.f32 %v1445, %v3468
      %v3884 = vmul.f32 %v1450, %v3474
      %v3885 = vmul.f32 %v1455, %v3480
      %v3886 = vmul.f32 %v1460, %v3486
      %v3887 = vmul.f32 %v1465, %v3492
      %v3888 = vmul.f32 %v1470, %v3498
      %v3889 = vmul.f32 %v1475, %v3504
      %v3890 = vmul.f32 %v1480, %v3510
      %v3891 = vmul.f32 %v1485, %v3516
      %v3892 = vmul.f32 %v1490, %v3522
      %v3893 = vmul.f32 %v1495, %v3528
      %v3894 = vmul.f32 %v1500, %v3534
      %v3895 = vmul.f32 %v1505, %v3540
      %v3896 = vmul.f32 %v1510, %v3546
      %v3897 = vmul.f32 %v1515, %v3552
      %v3898 = vmul.f32 %v1520, %v3558
      %v3899 = vmul.f32 %v1525, %v3564
      %v3900 = vmul.f32 %v1530, %v3570
      %v3901 = vmul.f32 %v1535, %v3576
      %v3902 = vmul.f32 %v1540, %v3582
      %v3903 = vmul.f32 %v1545, %v3588
      %v3904 = vmul.f32 %v1550, %v3594
      %v3905 = vmul.f32 %v1555, %v3600
      %v3906 = vmul.f32 %v1560, %v3606
      %v3907 = vmul.f32 %v1565, %v3612
      %v3908 = vmul.f32 %v1570, %v3618
      %v3909 = vadd.f32 %v3845, %v3877
      %v3910 = vadd.f32 %v3846, %v3878
      %v3911 = vadd.f32 %v3847, %v3879
      %v3912 = vadd.f32 %v3848, %v3880
      %v3913 = vadd.f32 %v3849, %v3881
      %v3914 = vadd.f32 %v3850, %v3882
      %v3915 = vadd.f32 %v3851, %v3883
      %v3916 = vadd.f32 %v3852, %v3884
      %v3917 = vadd.f32 %v3853, %v3885
      %v3918 = vadd.f32 %v3854, %v3886
      %v3919 = vadd.f32 %v3855, %v3887
      %v3920 = vadd.f32 %v3856, %v3888
      %v3921 = vadd.f32 %v3857, %v3889
      %v3922 = vadd.f32 %v3858, %v3890
      %v3923 = vadd.f32 %v3859, %v3891
      %v3924 = vadd.f32 %v3860, %v3892
      %v3925 = vadd.f32 %v3861, %v3893
      %v3926 = vadd.f32 %v3862, %v3894
      %v3927 = vadd.f32 %v3863, %v3895
      %v3928 = vadd.f32 %v3864, %v3896
      %v3929 = vadd.f32 %v3865, %v3897
      %v3930 = vadd.f32 %v3866, %v3898
      %v3931 = vadd.f32 %v3867, %v3899
      %v3932 = vadd.f32 %v3868, %v3900
      %v3933 = vadd.f32 %v3869, %v3901
      %v3934 = vadd.f32 %v3870, %v3902
      %v3935 = vadd.f32 %v3871, %v3903
      %v3936 = vadd.f32 %v3872, %v3904
      %v3937 = vadd.f32 %v3873, %v3905
      %v3938 = vadd.f32 %v3874, %v3906
      %v3939 = vadd.f32 %v3875, %v3907
      %v3940 = vadd.f32 %v3876, %v3908
      %v3941 = vmul.f32 %v1608, %v3687
      %v3942 = vmul.f32 %v1613, %v3692
      %v3943 = vmul.f32 %v1618, %v3697
      %v3944 = vmul.f32 %v1623, %v3702
      %v3945 = vmul.f32 %v1628, %v3707
      %v3946 = vmul.f32 %v1633, %v3712
      %v3947 = vmul.f32 %v1638, %v3717
      %v3948 = vmul.f32 %v1643, %v3722
      %v3949 = vmul.f32 %v1648, %v3727
      %v3950 = vmul.f32 %v1653, %v3732
      %v3951 = vmul.f32 %v1658, %v3737
      %v3952 = vmul.f32 %v1663, %v3742
      %v3953 = vmul.f32 %v1668, %v3747
      %v3954 = vmul.f32 %v1673, %v3752
      %v3955 = vmul.f32 %v1678, %v3757
      %v3956 = vmul.f32 %v1683, %v3762
      %v3957 = vmul.f32 %v1688, %v3767
      %v3958 = vmul.f32 %v1693, %v3772
      %v3959 = vmul.f32 %v1698, %v3777
      %v3960 = vmul.f32 %v1703, %v3782
      %v3961 = vmul.f32 %v1708, %v3787
      %v3962 = vmul.f32 %v1713, %v3792
      %v3963 = vmul.f32 %v1718, %v3797
      %v3964 = vmul.f32 %v1723, %v3802
      %v3965 = vmul.f32 %v1728, %v3807
      %v3966 = vmul.f32 %v1733, %v3812
      %v3967 = vmul.f32 %v1738, %v3817
      %v3968 = vmul.f32 %v1743, %v3822
      %v3969 = vmul.f32 %v1748, %v3827
      %v3970 = vmul.f32 %v1753, %v3832
      %v3971 = vmul.f32 %v1758, %v3837
      %v3972 = vmul.f32 %v1763, %v3842
      %v3973 = vadd.f32 %v3909, %v3941
      %v3974 = vadd.f32 %v3910, %v3942
      %v3975 = vadd.f32 %v3911, %v3943
      %v3976 = vadd.f32 %v3912, %v3944
      %v3977 = vadd.f32 %v3913, %v3945
      %v3978 = vadd.f32 %v3914, %v3946
      %v3979 = vadd.f32 %v3915, %v3947
      %v3980 = vadd.f32 %v3916, %v3948
      %v3981 = vadd.f32 %v3917, %v3949
      %v3982 = vadd.f32 %v3918, %v3950
      %v3983 = vadd.f32 %v3919, %v3951
      %v3984 = vadd.f32 %v3920, %v3952
      %v3985 = vadd.f32 %v3921, %v3953
      %v3986 = vadd.f32 %v3922, %v3954
      %v3987 = vadd.f32 %v3923, %v3955
      %v3988 = vadd.f32 %v3924, %v3956
      %v3989 = vadd.f32 %v3925, %v3957
      %v3990 = vadd.f32 %v3926, %v3958
      %v3991 = vadd.f32 %v3927, %v3959
      %v3992 = vadd.f32 %v3928, %v3960
      %v3993 = vadd.f32 %v3929, %v3961
      %v3994 = vadd.f32 %v3930, %v3962
      %v3995 = vadd.f32 %v3931, %v3963
      %v3996 = vadd.f32 %v3932, %v3964
      %v3997 = vadd.f32 %v3933, %v3965
      %v3998 = vadd.f32 %v3934, %v3966
      %v3999 = vadd.f32 %v3935, %v3967
      %v4000 = vadd.f32 %v3936, %v3968
      %v4001 = vadd.f32 %v3937, %v3969
      %v4002 = vadd.f32 %v3938, %v3970
      %v4003 = vadd.f32 %v3939, %v3971
      %v4004 = vadd.f32 %v3940, %v3972
      %v4005 = vmul.f32 %v3973, %v3210
      %v4006 = vmul.f32 %v3974, %v3211
      %v4007 = vmul.f32 %v3975, %v3212
      %v4008 = vmul.f32 %v3976, %v3213
      %v4009 = vmul.f32 %v3977, %v3214
      %v4010 = vmul.f32 %v3978, %v3215
      %v4011 = vmul.f32 %v3979, %v3216
      %v4012 = vmul.f32 %v3980, %v3217
      %v4013 = vmul.f32 %v3981, %v3218
      %v4014 = vmul.f32 %v3982, %v3219
      %v4015 = vmul.f32 %v3983, %v3220
      %v4016 = vmul.f32 %v3984, %v3221
      %v4017 = vmul.f32 %v3985, %v3222
      %v4018 = vmul.f32 %v3986, %v3223
      %v4019 = vmul.f32 %v3987, %v3224
      %v4020 = vmul.f32 %v3988, %v3225
      %v4021 = vmul.f32 %v3989, %v3226
      %v4022 = vmul.f32 %v3990, %v3227
      %v4023 = vmul.f32 %v3991, %v3228
      %v4024 = vmul.f32 %v3992, %v3229
      %v4025 = vmul.f32 %v3993, %v3230
      %v4026 = vmul.f32 %v3994, %v3231
      %v4027 = vmul.f32 %v3995, %v3232
      %v4028 = vmul.f32 %v3996, %v3233
      %v4029 = vmul.f32 %v3997, %v3234
      %v4030 = vmul.f32 %v3998, %v3235
      %v4031 = vmul.f32 %v3999, %v3236
      %v4032 = vmul.f32 %v4000, %v3237
      %v4033 = vmul.f32 %v4001, %v3238
      %v4034 = vmul.f32 %v4002, %v3239
      %v4035 = vmul.f32 %v4003, %v3240
      %v4036 = vmul.f32 %v4004, %v3241
      %v4037 = vmul.f32 %v3430, %v3018
      %v4038 = vmul.f32 %v3436, %v3019
      %v4039 = vmul.f32 %v3442, %v3020
      %v4040 = vmul.f32 %v3448, %v3021
      %v4041 = vmul.f32 %v3454, %v3022
      %v4042 = vmul.f32 %v3460, %v3023
      %v4043 = vmul.f32 %v3466, %v3024
      %v4044 = vmul.f32 %v3472, %v3025
      %v4045 = vmul.f32 %v3478, %v3026
      %v4046 = vmul.f32 %v3484, %v3027
      %v4047 = vmul.f32 %v3490, %v3028
      %v4048 = vmul.f32 %v3496, %v3029
      %v4049 = vmul.f32 %v3502, %v3030
      %v4050 = vmul.f32 %v3508, %v3031
      %v4051 = vmul.f32 %v3514, %v3032
      %v4052 = vmul.f32 %v3520, %v3033
      %v4053 = vmul.f32 %v3526, %v3034
      %v4054 = vmul.f32 %v3532, %v3035
      %v4055 = vmul.f32 %v3538, %v3036
      %v4056 = vmul.f32 %v3544, %v3037
      %v4057 = vmul.f32 %v3550, %v3038
      %v4058 = vmul.f32 %v3556, %v3039
      %v4059 = vmul.f32 %v3562, %v3040
      %v4060 = vmul.f32 %v3568, %v3041
      %v4061 = vmul.f32 %v3574, %v3042
      %v4062 = vmul.f32 %v3580, %v3043
      %v4063 = vmul.f32 %v3586, %v3044
      %v4064 = vmul.f32 %v3592, %v3045
      %v4065 = vmul.f32 %v3598, %v3046
      %v4066 = vmul.f32 %v3604, %v3047
      %v4067 = vmul.f32 %v3610, %v3048
      %v4068 = vmul.f32 %v3616, %v3049
      %v4069 = vmul.f32 %v1222, %v4005
      %v4070 = vmul.f32 %v1227, %v4006
      %v4071 = vmul.f32 %v1232, %v4007
      %v4072 = vmul.f32 %v1237, %v4008
      %v4073 = vmul.f32 %v1242, %v4009
      %v4074 = vmul.f32 %v1247, %v4010
      %v4075 = vmul.f32 %v1252, %v4011
      %v4076 = vmul.f32 %v1257, %v4012
      %v4077 = vmul.f32 %v1262, %v4013
      %v4078 = vmul.f32 %v1267, %v4014
      %v4079 = vmul.f32 %v1272, %v4015
      %v4080 = vmul.f32 %v1277, %v4016
      %v4081 = vmul.f32 %v1282, %v4017
      %v4082 = vmul.f32 %v1287, %v4018
      %v4083 = vmul.f32 %v1292, %v4019
      %v4084 = vmul.f32 %v1297, %v4020
      %v4085 = vmul.f32 %v1302, %v4021
      %v4086 = vmul.f32 %v1307, %v4022
      %v4087 = vmul.f32 %v1312, %v4023
      %v4088 = vmul.f32 %v1317, %v4024
      %v4089 = vmul.f32 %v1322, %v4025
      %v4090 = vmul.f32 %v1327, %v4026
      %v4091 = vmul.f32 %v1332, %v4027
      %v4092 = vmul.f32 %v1337, %v4028
      %v4093 = vmul.f32 %v1342, %v4029
      %v4094 = vmul.f32 %v1347, %v4030
      %v4095 = vmul.f32 %v1352, %v4031
      %v4096 = vmul.f32 %v1357, %v4032
      %v4097 = vmul.f32 %v1362, %v4033
      %v4098 = vmul.f32 %v1367, %v4034
      %v4099 = vmul.f32 %v1372, %v4035
      %v4100 = vmul.f32 %v1377, %v4036
      %v4101 = vsub.f32 %v4037, %v4069
      %v4102 = vsub.f32 %v4038, %v4070
      %v4103 = vsub.f32 %v4039, %v4071
      %v4104 = vsub.f32 %v4040, %v4072
      %v4105 = vsub.f32 %v4041, %v4073
      %v4106 = vsub.f32 %v4042, %v4074
      %v4107 = vsub.f32 %v4043, %v4075
      %v4108 = vsub.f32 %v4044, %v4076
      %v4109 = vsub.f32 %v4045, %v4077
      %v4110 = vsub.f32 %v4046, %v4078
      %v4111 = vsub.f32 %v4047, %v4079
      %v4112 = vsub.f32 %v4048, %v4080
      %v4113 = vsub.f32 %v4049, %v4081
      %v4114 = vsub.f32 %v4050, %v4082
      %v4115 = vsub.f32 %v4051, %v4083
      %v4116 = vsub.f32 %v4052, %v4084
      %v4117 = vsub.f32 %v4053, %v4085
      %v4118 = vsub.f32 %v4054, %v4086
      %v4119 = vsub.f32 %v4055, %v4087
      %v4120 = vsub.f32 %v4056, %v4088
      %v4121 = vsub.f32 %v4057, %v4089
      %v4122 = vsub.f32 %v4058, %v4090
      %v4123 = vsub.f32 %v4059, %v4091
      %v4124 = vsub.f32 %v4060, %v4092
      %v4125 = vsub.f32 %v4061, %v4093
      %v4126 = vsub.f32 %v4062, %v4094
      %v4127 = vsub.f32 %v4063, %v4095
      %v4128 = vsub.f32 %v4064, %v4096
      %v4129 = vsub.f32 %v4065, %v4097
      %v4130 = vsub.f32 %v4066, %v4098
      %v4131 = vsub.f32 %v4067, %v4099
      %v4132 = vsub.f32 %v4068, %v4100
      %v4133 = vmul.f32 %v3432, %v3018
      %v4134 = vmul.f32 %v3438, %v3019
      %v4135 = vmul.f32 %v3444, %v3020
      %v4136 = vmul.f32 %v3450, %v3021
      %v4137 = vmul.f32 %v3456, %v3022
      %v4138 = vmul.f32 %v3462, %v3023
      %v4139 = vmul.f32 %v3468, %v3024
      %v4140 = vmul.f32 %v3474, %v3025
      %v4141 = vmul.f32 %v3480, %v3026
      %v4142 = vmul.f32 %v3486, %v3027
      %v4143 = vmul.f32 %v3492, %v3028
      %v4144 = vmul.f32 %v3498, %v3029
      %v4145 = vmul.f32 %v3504, %v3030
      %v4146 = vmul.f32 %v3510, %v3031
      %v4147 = vmul.f32 %v3516, %v3032
      %v4148 = vmul.f32 %v3522, %v3033
      %v4149 = vmul.f32 %v3528, %v3034
      %v4150 = vmul.f32 %v3534, %v3035
      %v4151 = vmul.f32 %v3540, %v3036
      %v4152 = vmul.f32 %v3546, %v3037
      %v4153 = vmul.f32 %v3552, %v3038
      %v4154 = vmul.f32 %v3558, %v3039
      %v4155 = vmul.f32 %v3564, %v3040
      %v4156 = vmul.f32 %v3570, %v3041
      %v4157 = vmul.f32 %v3576, %v3042
      %v4158 = vmul.f32 %v3582, %v3043
      %v4159 = vmul.f32 %v3588, %v3044
      %v4160 = vmul.f32 %v3594, %v3045
      %v4161 = vmul.f32 %v3600, %v3046
      %v4162 = vmul.f32 %v3606, %v3047
      %v4163 = vmul.f32 %v3612, %v3048
      %v4164 = vmul.f32 %v3618, %v3049
      %v4165 = vmul.f32 %v1415, %v4005
      %v4166 = vmul.f32 %v1420, %v4006
      %v4167 = vmul.f32 %v1425, %v4007
      %v4168 = vmul.f32 %v1430, %v4008
      %v4169 = vmul.f32 %v1435, %v4009
      %v4170 = vmul.f32 %v1440, %v4010
      %v4171 = vmul.f32 %v1445, %v4011
      %v4172 = vmul.f32 %v1450, %v4012
      %v4173 = vmul.f32 %v1455, %v4013
      %v4174 = vmul.f32 %v1460, %v4014
      %v4175 = vmul.f32 %v1465, %v4015
      %v4176 = vmul.f32 %v1470, %v4016
      %v4177 = vmul.f32 %v1475, %v4017
      %v4178 = vmul.f32 %v1480, %v4018
      %v4179 = vmul.f32 %v1485, %v4019
      %v4180 = vmul.f32 %v1490, %v4020
      %v4181 = vmul.f32 %v1495, %v4021
      %v4182 = vmul.f32 %v1500, %v4022
      %v4183 = vmul.f32 %v1505, %v4023
      %v4184 = vmul.f32 %v1510, %v4024
      %v4185 = vmul.f32 %v1515, %v4025
      %v4186 = vmul.f32 %v1520, %v4026
      %v4187 = vmul.f32 %v1525, %v4027
      %v4188 = vmul.f32 %v1530, %v4028
      %v4189 = vmul.f32 %v1535, %v4029
      %v4190 = vmul.f32 %v1540, %v4030
      %v4191 = vmul.f32 %v1545, %v4031
      %v4192 = vmul.f32 %v1550, %v4032
      %v4193 = vmul.f32 %v1555, %v4033
      %v4194 = vmul.f32 %v1560, %v4034
      %v4195 = vmul.f32 %v1565, %v4035
      %v4196 = vmul.f32 %v1570, %v4036
      %v4197 = vsub.f32 %v4133, %v4165
      %v4198 = vsub.f32 %v4134, %v4166
      %v4199 = vsub.f32 %v4135, %v4167
      %v4200 = vsub.f32 %v4136, %v4168
      %v4201 = vsub.f32 %v4137, %v4169
      %v4202 = vsub.f32 %v4138, %v4170
      %v4203 = vsub.f32 %v4139, %v4171
      %v4204 = vsub.f32 %v4140, %v4172
      %v4205 = vsub.f32 %v4141, %v4173
      %v4206 = vsub.f32 %v4142, %v4174
      %v4207 = vsub.f32 %v4143, %v4175
      %v4208 = vsub.f32 %v4144, %v4176
      %v4209 = vsub.f32 %v4145, %v4177
      %v4210 = vsub.f32 %v4146, %v4178
      %v4211 = vsub.f32 %v4147, %v4179
      %v4212 = vsub.f32 %v4148, %v4180
      %v4213 = vsub.f32 %v4149, %v4181
      %v4214 = vsub.f32 %v4150, %v4182
      %v4215 = vsub.f32 %v4151, %v4183
      %v4216 = vsub.f32 %v4152, %v4184
      %v4217 = vsub.f32 %v4153, %v4185
      %v4218 = vsub.f32 %v4154, %v4186
      %v4219 = vsub.f32 %v4155, %v4187
      %v4220 = vsub.f32 %v4156, %v4188
      %v4221 = vsub.f32 %v4157, %v4189
      %v4222 = vsub.f32 %v4158, %v4190
      %v4223 = vsub.f32 %v4159, %v4191
      %v4224 = vsub.f32 %v4160, %v4192
      %v4225 = vsub.f32 %v4161, %v4193
      %v4226 = vsub.f32 %v4162, %v4194
      %v4227 = vsub.f32 %v4163, %v4195
      %v4228 = vsub.f32 %v4164, %v4196
      %v4229 = vmul.f32 %v3687, %v3018
      %v4230 = vmul.f32 %v3692, %v3019
      %v4231 = vmul.f32 %v3697, %v3020
      %v4232 = vmul.f32 %v3702, %v3021
      %v4233 = vmul.f32 %v3707, %v3022
      %v4234 = vmul.f32 %v3712, %v3023
      %v4235 = vmul.f32 %v3717, %v3024
      %v4236 = vmul.f32 %v3722, %v3025
      %v4237 = vmul.f32 %v3727, %v3026
      %v4238 = vmul.f32 %v3732, %v3027
      %v4239 = vmul.f32 %v3737, %v3028
      %v4240 = vmul.f32 %v3742, %v3029
      %v4241 = vmul.f32 %v3747, %v3030
      %v4242 = vmul.f32 %v3752, %v3031
      %v4243 = vmul.f32 %v3757, %v3032
      %v4244 = vmul.f32 %v3762, %v3033
      %v4245 = vmul.f32 %v3767, %v3034
      %v4246 = vmul.f32 %v3772, %v3035
      %v4247 = vmul.f32 %v3777, %v3036
      %v4248 = vmul.f32 %v3782, %v3037
      %v4249 = vmul.f32 %v3787, %v3038
      %v4250 = vmul.f32 %v3792, %v3039
      %v4251 = vmul.f32 %v3797, %v3040
      %v4252 = vmul.f32 %v3802, %v3041
      %v4253 = vmul.f32 %v3807, %v3042
      %v4254 = vmul.f32 %v3812, %v3043
      %v4255 = vmul.f32 %v3817, %v3044
      %v4256 = vmul.f32 %v3822, %v3045
      %v4257 = vmul.f32 %v3827, %v3046
      %v4258 = vmul.f32 %v3832, %v3047
      %v4259 = vmul.f32 %v3837, %v3048
      %v4260 = vmul.f32 %v3842, %v3049
      %v4261 = vmul.f32 %v1608, %v4005
      %v4262 = vmul.f32 %v1613, %v4006
      %v4263 = vmul.f32 %v1618, %v4007
      %v4264 = vmul.f32 %v1623, %v4008
      %v4265 = vmul.f32 %v1628, %v4009
      %v4266 = vmul.f32 %v1633, %v4010
      %v4267 = vmul.f32 %v1638, %v4011
      %v4268 = vmul.f32 %v1643, %v4012
      %v4269 = vmul.f32 %v1648, %v4013
      %v4270 = vmul.f32 %v1653, %v4014
      %v4271 = vmul.f32 %v1658, %v4015
      %v4272 = vmul.f32 %v1663, %v4016
      %v4273 = vmul.f32 %v1668, %v4017
      %v4274 = vmul.f32 %v1673, %v4018
      %v4275 = vmul.f32 %v1678, %v4019
      %v4276 = vmul.f32 %v1683, %v4020
      %v4277 = vmul.f32 %v1688, %v4021
      %v4278 = vmul.f32 %v1693, %v4022
      %v4279 = vmul.f32 %v1698, %v4023
      %v4280 = vmul.f32 %v1703, %v4024
      %v4281 = vmul.f32 %v1708, %v4025
      %v4282 = vmul.f32 %v1713, %v4026
      %v4283 = vmul.f32 %v1718, %v4027
      %v4284 = vmul.f32 %v1723, %v4028
      %v4285 = vmul.f32 %v1728, %v4029
      %v4286 = vmul.f32 %v1733, %v4030
      %v4287 = vmul.f32 %v1738, %v4031
      %v4288 = vmul.f32 %v1743, %v4032
      %v4289 = vmul.f32 %v1748, %v4033
      %v4290 = vmul.f32 %v1753, %v4034
      %v4291 = vmul.f32 %v1758, %v4035
      %v4292 = vmul.f32 %v1763, %v4036
      %v4293 = vsub.f32 %v4229, %v4261
      %v4294 = vsub.f32 %v4230, %v4262
      %v4295 = vsub.f32 %v4231, %v4263
      %v4296 = vsub.f32 %v4232, %v4264
      %v4297 = vsub.f32 %v4233, %v4265
      %v4298 = vsub.f32 %v4234, %v4266
      %v4299 = vsub.f32 %v4235, %v4267
      %v4300 = vsub.f32 %v4236, %v4268
      %v4301 = vsub.f32 %v4237, %v4269
      %v4302 = vsub.f32 %v4238, %v4270
      %v4303 = vsub.f32 %v4239, %v4271
      %v4304 = vsub.f32 %v4240, %v4272
      %v4305 = vsub.f32 %v4241, %v4273
      %v4306 = vsub.f32 %v4242, %v4274
      %v4307 = vsub.f32 %v4243, %v4275
      %v4308 = vsub.f32 %v4244, %v4276
      %v4309 = vsub.f32 %v4245, %v4277
      %v4310 = vsub.f32 %v4246, %v4278
      %v4311 = vsub.f32 %v4247, %v4279
      %v4312 = vsub.f32 %v4248, %v4280
      %v4313 = vsub.f32 %v4249, %v4281
      %v4314 = vsub.f32 %v4250, %v4282
      %v4315 = vsub.f32 %v4251, %v4283
      %v4316 = vsub.f32 %v4252, %v4284
      %v4317 = vsub.f32 %v4253, %v4285
      %v4318 = vsub.f32 %v4254, %v4286
      %v4319 = vsub.f32 %v4255, %v4287
      %v4320 = vsub.f32 %v4256, %v4288
      %v4321 = vsub.f32 %v4257, %v4289
      %v4322 = vsub.f32 %v4258, %v4290
      %v4323 = vsub.f32 %v4259, %v4291
      %v4324 = vsub.f32 %v4260, %v4292
      %4325 = vmatprep.subr.mxu0 %v4197
      %4326 = vmatpush1.msra.mxu0 %v4101
      %4327 = vmatprep.subr.mxu0 %v4198
      %4328 = vmatpush1.msra.mxu0 %v4102
      %4329 = vmatprep.subr.mxu0 %v4199
      %4330 = vmatpush1.msra.mxu0 %v4103
      %4331 = vmatprep.subr.mxu0 %v4200
      %4332 = vmatpush1.msra.mxu0 %v4104
      %4333 = vmatprep.subr.mxu0 %v4201
      %4334 = vmatpush1.msra.mxu0 %v4105
      %4335 = vmatprep.subr.mxu0 %v4202
      %4336 = vmatpush1.msra.mxu0 %v4106
      %4337 = vmatprep.subr.mxu0 %v4203
      %4338 = vmatpush1.msra.mxu0 %v4107
      %4339 = vmatprep.subr.mxu0 %v4204
      %4340 = vmatpush1.msra.mxu0 %v4108
      %4341 = vmatprep.subr.mxu0 %v4205
      %4342 = vmatpush1.msra.mxu0 %v4109
      %4343 = vmatprep.subr.mxu0 %v4206
      %4344 = vmatpush1.msra.mxu0 %v4110
      %4345 = vmatprep.subr.mxu0 %v4207
      %4346 = vmatpush1.msra.mxu0 %v4111
      %4347 = vmatprep.subr.mxu0 %v4208
      %4348 = vmatpush1.msra.mxu0 %v4112
      %4349 = vmatprep.subr.mxu0 %v4209
      %4350 = vmatpush1.msra.mxu0 %v4113
      %4351 = vmatprep.subr.mxu0 %v4210
      %4352 = vmatpush1.msra.mxu0 %v4114
      %4353 = vmatprep.subr.mxu0 %v4211
      %4354 = vmatpush1.msra.mxu0 %v4115
      %4355 = vmatprep.subr.mxu0 %v4212
      %4356 = vmatpush1.msra.mxu0 %v4116
      %4357 = vmatprep.subr.mxu0 %v4213
      %4358 = vmatpush1.msra.mxu0 %v4117
      %4359 = vmatprep.subr.mxu0 %v4214
      %4360 = vmatpush1.msra.mxu0 %v4118
      %4361 = vmatprep.subr.mxu0 %v4215
      %4362 = vmatpush1.msra.mxu0 %v4119
      %4363 = vmatprep.subr.mxu0 %v4216
      %4364 = vmatpush1.msra.mxu0 %v4120
      %4365 = vmatprep.subr.mxu0 %v4217
      %4366 = vmatpush1.msra.mxu0 %v4121
      %4367 = vmatprep.subr.mxu0 %v4218
      %4368 = vmatpush1.msra.mxu0 %v4122
      %4369 = vmatprep.subr.mxu0 %v4219
      %4370 = vmatpush1.msra.mxu0 %v4123
      %4371 = vmatprep.subr.mxu0 %v4220
      %4372 = vmatpush1.msra.mxu0 %v4124
      %4373 = vmatprep.subr.mxu0 %v4221
      %4374 = vmatpush1.msra.mxu0 %v4125
      %4375 = vmatprep.subr.mxu0 %v4222
      %4376 = vmatpush1.msra.mxu0 %v4126
      %4377 = vmatprep.subr.mxu0 %v4223
      %4378 = vmatpush1.msra.mxu0 %v4127
      %4379 = vmatprep.subr.mxu0 %v4224
      %4380 = vmatpush1.msra.mxu0 %v4128
      %4381 = vmatprep.subr.mxu0 %v4225
      %4382 = vmatpush1.msra.mxu0 %v4129
      %4383 = vmatprep.subr.mxu0 %v4226
      %4384 = vmatpush1.msra.mxu0 %v4130
      %4385 = vmatprep.subr.mxu0 %v4227
      %4386 = vmatpush1.msra.mxu0 %v4131
      %4387 = vmatprep.subr.mxu0 %v4228
      %4388 = vmatpush1.msra.mxu0 %v4132
      %4389 = vmatprep.mubr.f32.mxu0 %v820
      %4390 = vmatmul.mubr.f32.gmra.mrb[0].mxu0 %v819
      %v4391 = vpop.f32.mrb[0].mxu0
      %v4392 = vadd.f32 0.0, %v4391
      %v4393 = vpop.f32.mrb[0].mxu0
      %v4394 = vadd.f32 0.0, %v4393
      %4395 = vmatprep.mubr.f32.mxu0 %v822
      %4396 = vmatmul.mubr.f32.gmra.mrb[0].mxu0 %v821
      %v4397 = vpop.f32.mrb[0].mxu0
      %v4398 = vadd.f32 0.0, %v4397
      %v4399 = vpop.f32.mrb[0].mxu0
      %v4400 = vadd.f32 0.0, %v4399
      %4401 = vmatprep.mubr.f32.mxu0 %v824
      %4402 = vmatmul.mubr.f32.gmra.mrb[0].mxu0 %v823
      %v4403 = vpop.f32.mrb[0].mxu0
      %v4404 = vadd.f32 0.0, %v4403
      %v4405 = vpop.f32.mrb[0].mxu0
      %v4406 = vadd.f32 0.0, %v4405
      %4407 = vmatprep.mubr.f32.mxu0 %v826
      %4408 = vmatmul.mubr.f32.gmra.mrb[0].mxu0 %v825
      %v4409 = vpop.f32.mrb[0].mxu0
      %v4410 = vadd.f32 0.0, %v4409
      %v4411 = vpop.f32.mrb[0].mxu0
      %v4412 = vadd.f32 0.0, %v4411
      %4413 = vmatprep.mubr.f32.mxu0 %v828
      %4414 = vmatmul.mubr.f32.gmra.mrb[0].mxu0 %v827
      %v4415 = vpop.f32.mrb[0].mxu0
      %v4416 = vadd.f32 0.0, %v4415
      %v4417 = vpop.f32.mrb[0].mxu0
      %v4418 = vadd.f32 0.0, %v4417
      %4419 = vmatprep.mubr.f32.mxu0 %v830
      %4420 = vmatmul.mubr.f32.gmra.mrb[0].mxu0 %v829
      %v4421 = vpop.f32.mrb[0].mxu0
      %v4422 = vadd.f32 0.0, %v4421
      %v4423 = vpop.f32.mrb[0].mxu0
      %v4424 = vadd.f32 0.0, %v4423
      %4425 = vmatprep.mubr.f32.mxu0 %v832
      %4426 = vmatmul.mubr.f32.gmra.mrb[0].mxu0 %v831
      %v4427 = vpop.f32.mrb[0].mxu0
      %v4428 = vadd.f32 0.0, %v4427
      %v4429 = vpop.f32.mrb[0].mxu0
      %v4430 = vadd.f32 0.0, %v4429
      %4431 = vmatprep.mubr.f32.mxu0 %v834
      %4432 = vmatmul.mubr.f32.gmra.mrb[0].mxu0 %v833
      %v4433 = vpop.f32.mrb[0].mxu0
      %v4434 = vadd.f32 0.0, %v4433
      %v4435 = vpop.f32.mrb[0].mxu0
      %v4436 = vadd.f32 0.0, %v4435
      %4437 = vdwg.mxu0
      %4438 = vmatprep.subr.mxu0 0.0
      %4439 = vmatpush1.msra.mxu0 %v4293
      %4440 = vmatprep.subr.mxu0 0.0
      %4441 = vmatpush1.msra.mxu0 %v4294
      %4442 = vmatprep.subr.mxu0 0.0
      %4443 = vmatpush1.msra.mxu0 %v4295
      %4444 = vmatprep.subr.mxu0 0.0
      %4445 = vmatpush1.msra.mxu0 %v4296
      %4446 = vmatprep.subr.mxu0 0.0
      %4447 = vmatpush1.msra.mxu0 %v4297
      %4448 = vmatprep.subr.mxu0 0.0
      %4449 = vmatpush1.msra.mxu0 %v4298
      %4450 = vmatprep.subr.mxu0 0.0
      %4451 = vmatpush1.msra.mxu0 %v4299
      %4452 = vmatprep.subr.mxu0 0.0
      %4453 = vmatpush1.msra.mxu0 %v4300
      %4454 = vmatprep.subr.mxu0 0.0
      %4455 = vmatpush1.msra.mxu0 %v4301
      %4456 = vmatprep.subr.mxu0 0.0
      %4457 = vmatpush1.msra.mxu0 %v4302
      %4458 = vmatprep.subr.mxu0 0.0
      %4459 = vmatpush1.msra.mxu0 %v4303
      %4460 = vmatprep.subr.mxu0 0.0
      %4461 = vmatpush1.msra.mxu0 %v4304
      %4462 = vmatprep.subr.mxu0 0.0
      %4463 = vmatpush1.msra.mxu0 %v4305
      %4464 = vmatprep.subr.mxu0 0.0
      %4465 = vmatpush1.msra.mxu0 %v4306
      %4466 = vmatprep.subr.mxu0 0.0
      %4467 = vmatpush1.msra.mxu0 %v4307
      %4468 = vmatprep.subr.mxu0 0.0
      %4469 = vmatpush1.msra.mxu0 %v4308
      %4470 = vmatprep.subr.mxu0 0.0
      %4471 = vmatpush1.msra.mxu0 %v4309
      %4472 = vmatprep.subr.mxu0 0.0
      %4473 = vmatpush1.msra.mxu0 %v4310
      %4474 = vmatprep.subr.mxu0 0.0
      %4475 = vmatpush1.msra.mxu0 %v4311
      %4476 = vmatprep.subr.mxu0 0.0
      %4477 = vmatpush1.msra.mxu0 %v4312
      %4478 = vmatprep.subr.mxu0 0.0
      %4479 = vmatpush1.msra.mxu0 %v4313
      %4480 = vmatprep.subr.mxu0 0.0
      %4481 = vmatpush1.msra.mxu0 %v4314
      %4482 = vmatprep.subr.mxu0 0.0
      %4483 = vmatpush1.msra.mxu0 %v4315
      %4484 = vmatprep.subr.mxu0 0.0
      %4485 = vmatpush1.msra.mxu0 %v4316
      %4486 = vmatprep.subr.mxu0 0.0
      %4487 = vmatpush1.msra.mxu0 %v4317
      %4488 = vmatprep.subr.mxu0 0.0
      %4489 = vmatpush1.msra.mxu0 %v4318
      %4490 = vmatprep.subr.mxu0 0.0
      %4491 = vmatpush1.msra.mxu0 %v4319
      %4492 = vmatprep.subr.mxu0 0.0
      %4493 = vmatpush1.msra.mxu0 %v4320
      %4494 = vmatprep.subr.mxu0 0.0
      %4495 = vmatpush1.msra.mxu0 %v4321
      %4496 = vmatprep.subr.mxu0 0.0
      %4497 = vmatpush1.msra.mxu0 %v4322
      %4498 = vmatprep.subr.mxu0 0.0
      %4499 = vmatpush1.msra.mxu0 %v4323
      %4500 = vmatprep.subr.mxu0 0.0
      %4501 = vmatpush1.msra.mxu0 %v4324
      %4502 = vmatprep.mubr.f32.mxu0 %v820
      %4503 = vmatmul.mubr.f32.gmra.mrb[0].mxu0 %v819
      %v4504 = vpop.f32.mrb[0].mxu0
      %v4505 = vadd.f32 0.0, %v4504
      %v4506 = vpop.f32.mrb[0].mxu0
      %4507 = vmatprep.mubr.f32.mxu0 %v822
      %4508 = vmatmul.mubr.f32.gmra.mrb[0].mxu0 %v821
      %v4509 = vpop.f32.mrb[0].mxu0
      %v4510 = vadd.f32 0.0, %v4509
      %v4511 = vpop.f32.mrb[0].mxu0
      %4512 = vmatprep.mubr.f32.mxu0 %v824
      %4513 = vmatmul.mubr.f32.gmra.mrb[0].mxu0 %v823
      %v4514 = vpop.f32.mrb[0].mxu0
      %v4515 = vadd.f32 0.0, %v4514
      %v4516 = vpop.f32.mrb[0].mxu0
      %4517 = vmatprep.mubr.f32.mxu0 %v826
      %4518 = vmatmul.mubr.f32.gmra.mrb[0].mxu0 %v825
      %v4519 = vpop.f32.mrb[0].mxu0
      %v4520 = vadd.f32 0.0, %v4519
      %v4521 = vpop.f32.mrb[0].mxu0
      %4522 = vmatprep.mubr.f32.mxu0 %v828
      %4523 = vmatmul.mubr.f32.gmra.mrb[0].mxu0 %v827
      %v4524 = vpop.f32.mrb[0].mxu0
      %v4525 = vadd.f32 0.0, %v4524
      %v4526 = vpop.f32.mrb[0].mxu0
      %4527 = vmatprep.mubr.f32.mxu0 %v830
      %4528 = vmatmul.mubr.f32.gmra.mrb[0].mxu0 %v829
      %v4529 = vpop.f32.mrb[0].mxu0
      %v4530 = vadd.f32 0.0, %v4529
      %v4531 = vpop.f32.mrb[0].mxu0
      %4532 = vmatprep.mubr.f32.mxu0 %v832
      %4533 = vmatmul.mubr.f32.gmra.mrb[0].mxu0 %v831
      %v4534 = vpop.f32.mrb[0].mxu0
      %v4535 = vadd.f32 0.0, %v4534
      %v4536 = vpop.f32.mrb[0].mxu0
      %4537 = vmatprep.mubr.f32.mxu0 %v834
      %4538 = vmatmul.mubr.f32.gmra.mrb[0].mxu0 %v833
      %v4539 = vpop.f32.mrb[0].mxu0
      %v4540 = vadd.f32 0.0, %v4539
      %v4541 = vpop.f32.mrb[0].mxu0
      %4542 = vdwg.mxu0
      %v4543 = vmul.f32 %v3242, %v4392
      %v4544 = vmul.f32 %v3245, %v4398
      %v4545 = vmul.f32 %v3248, %v4404
      %v4546 = vmul.f32 %v3251, %v4410
      %v4547 = vmul.f32 %v3254, %v4416
      %v4548 = vmul.f32 %v3257, %v4422
      %v4549 = vmul.f32 %v3260, %v4428
      %v4550 = vmul.f32 %v3263, %v4434
      %v4551 = vmul.f32 %v3243, %v4394
      %v4552 = vmul.f32 %v3246, %v4400
      %v4553 = vmul.f32 %v3249, %v4406
      %v4554 = vmul.f32 %v3252, %v4412
      %v4555 = vmul.f32 %v3255, %v4418
      %v4556 = vmul.f32 %v3258, %v4424
      %v4557 = vmul.f32 %v3261, %v4430
      %v4558 = vmul.f32 %v3264, %v4436
      %v4559 = vadd.f32 %v4543, %v4551
      %v4560 = vadd.f32 %v4544, %v4552
      %v4561 = vadd.f32 %v4545, %v4553
      %v4562 = vadd.f32 %v4546, %v4554
      %v4563 = vadd.f32 %v4547, %v4555
      %v4564 = vadd.f32 %v4548, %v4556
      %v4565 = vadd.f32 %v4549, %v4557
      %v4566 = vadd.f32 %v4550, %v4558
      %v4567 = vmul.f32 %v3244, %v4505
      %v4568 = vmul.f32 %v3247, %v4510
      %v4569 = vmul.f32 %v3250, %v4515
      %v4570 = vmul.f32 %v3253, %v4520
      %v4571 = vmul.f32 %v3256, %v4525
      %v4572 = vmul.f32 %v3259, %v4530
      %v4573 = vmul.f32 %v3262, %v4535
      %v4574 = vmul.f32 %v3265, %v4540
      %v4575 = vadd.f32 %v4559, %v4567
      %v4576 = vadd.f32 %v4560, %v4568
      %v4577 = vadd.f32 %v4561, %v4569
      %v4578 = vadd.f32 %v4562, %v4570
      %v4579 = vadd.f32 %v4563, %v4571
      %v4580 = vadd.f32 %v4564, %v4572
      %v4581 = vadd.f32 %v4565, %v4573
      %v4582 = vadd.f32 %v4566, %v4574
      %v4583 = vld [vmem:[%s534] sm:$0xff]
      %v4584 = vld [vmem:[%s534 + $0x8] sm:$0xff]
      %v4585 = vld [vmem:[%s534 + $0x10] sm:$0xff]
      %v4586 = vld [vmem:[%s534 + $0x18] sm:$0xff]
      %v4587 = vld [vmem:[%s534 + $0x20] sm:$0xff]
      %v4588 = vld [vmem:[%s534 + $0x28] sm:$0xff]
      %v4589 = vld [vmem:[%s534 + $0x30] sm:$0xff]
      %v4590 = vld [vmem:[%s534 + $0x38] sm:$0xff]
      %v4591 = vld [vmem:[%s534 + $0x40] sm:$0xff]
      %v4592 = vld [vmem:[%s534 + $0x48] sm:$0xff]
      %v4593 = vld [vmem:[%s534 + $0x50] sm:$0xff]
      %v4594 = vld [vmem:[%s534 + $0x58] sm:$0xff]
      %v4595 = vld [vmem:[%s534 + $0x60] sm:$0xff]
      %v4596 = vld [vmem:[%s534 + $0x68] sm:$0xff]
      %v4597 = vld [vmem:[%s534 + $0x70] sm:$0xff]
      %v4598 = vld [vmem:[%s534 + $0x78] sm:$0xff]
      %v4599 = vld [vmem:[%s537] sm:$0x1]
      %v4601 = vlaneseq
      %v4602 = vshrl.u32 %v4601, 7
      %v4603 = vsub.s32 0, %v4602
      %v4604 = vrot.slane %v4599, %v4603
      %4606 = vmatprep.subr.mxu0 0.0
      %4607 = vmatpush1.msra.mxu0 %v4583
      %4608 = vmatprep.subr.mxu0 0.0
      %4609 = vmatpush1.msra.mxu0 %v4584
      %4610 = vmatprep.subr.mxu0 0.0
      %4611 = vmatpush1.msra.mxu0 %v4585
      %4612 = vmatprep.subr.mxu0 0.0
      %4613 = vmatpush1.msra.mxu0 %v4586
      %4614 = vmatprep.subr.mxu0 0.0
      %4615 = vmatpush1.msra.mxu0 %v4587
      %4616 = vmatprep.subr.mxu0 0.0
      %4617 = vmatpush1.msra.mxu0 %v4588
      %4618 = vmatprep.subr.mxu0 0.0
      %4619 = vmatpush1.msra.mxu0 %v4589
      %4620 = vmatprep.subr.mxu0 0.0
      %4621 = vmatpush1.msra.mxu0 %v4590
      %4622 = vmatprep.subr.mxu0 0.0
      %4623 = vmatpush1.msra.mxu0 %v4591
      %4624 = vmatprep.subr.mxu0 0.0
      %4625 = vmatpush1.msra.mxu0 %v4592
      %4626 = vmatprep.subr.mxu0 0.0
      %4627 = vmatpush1.msra.mxu0 %v4593
      %4628 = vmatprep.subr.mxu0 0.0
      %4629 = vmatpush1.msra.mxu0 %v4594
      %4630 = vmatprep.subr.mxu0 0.0
      %4631 = vmatpush1.msra.mxu0 %v4595
      %4632 = vmatprep.subr.mxu0 0.0
      %4633 = vmatpush1.msra.mxu0 %v4596
      %4634 = vmatprep.subr.mxu0 0.0
      %4635 = vmatpush1.msra.mxu0 %v4597
      %4636 = vmatprep.subr.mxu0 0.0
      %4637 = vmatpush1.msra.mxu0 %v4598
      %4638 = vmatprep.subr.mxu0 0.0
      %4639 = vmatpush1.msra.mxu0 0.0
      %4640 = vmatprep.subr.mxu0 0.0
      %4641 = vmatpush1.msra.mxu0 0.0
      %4642 = vmatprep.subr.mxu0 0.0
      %4643 = vmatpush1.msra.mxu0 0.0
      %4644 = vmatprep.subr.mxu0 0.0
      %4645 = vmatpush1.msra.mxu0 0.0
      %4646 = vmatprep.subr.mxu0 0.0
      %4647 = vmatpush1.msra.mxu0 0.0
      %4648 = vmatprep.subr.mxu0 0.0
      %4649 = vmatpush1.msra.mxu0 0.0
      %4650 = vmatprep.subr.mxu0 0.0
      %4651 = vmatpush1.msra.mxu0 0.0
      %4652 = vmatprep.subr.mxu0 0.0
      %4653 = vmatpush1.msra.mxu0 0.0
      %4654 = vmatprep.subr.mxu0 0.0
      %4655 = vmatpush1.msra.mxu0 0.0
      %4656 = vmatprep.subr.mxu0 0.0
      %4657 = vmatpush1.msra.mxu0 0.0
      %4658 = vmatprep.subr.mxu0 0.0
      %4659 = vmatpush1.msra.mxu0 0.0
      %4660 = vmatprep.subr.mxu0 0.0
      %4661 = vmatpush1.msra.mxu0 0.0
      %4662 = vmatprep.subr.mxu0 0.0
      %4663 = vmatpush1.msra.mxu0 0.0
      %4664 = vmatprep.subr.mxu0 0.0
      %4665 = vmatpush1.msra.mxu0 0.0
      %4666 = vmatprep.subr.mxu0 0.0
      %4667 = vmatpush1.msra.mxu0 0.0
      %4668 = vmatprep.subr.mxu0 0.0
      %4669 = vmatpush1.msra.mxu0 0.0
      %4670 = vmatprep.mubr.f32.mxu0 0.0
      %4671 = vmatmul.mubr.f32.gmra.mrb[0].mxu0 %v4575
      %v4672 = vpop.f32.mrb[0].mxu0
      %v4673 = vadd.f32 %v4604, %v4672
      %v4674 = vpop.f32.mrb[0].mxu0
      %4675 = vmatprep.mubr.f32.mxu0 0.0
      %4676 = vmatmul.mubr.f32.gmra.mrb[0].mxu0 %v4576
      %v4677 = vpop.f32.mrb[0].mxu0
      %v4678 = vadd.f32 %v4604, %v4677
      %v4679 = vpop.f32.mrb[0].mxu0
      %4680 = vmatprep.mubr.f32.mxu0 0.0
      %4681 = vmatmul.mubr.f32.gmra.mrb[0].mxu0 %v4577
      %v4682 = vpop.f32.mrb[0].mxu0
      %v4683 = vadd.f32 %v4604, %v4682
      %v4684 = vpop.f32.mrb[0].mxu0
      %4685 = vmatprep.mubr.f32.mxu0 0.0
      %4686 = vmatmul.mubr.f32.gmra.mrb[0].mxu0 %v4578
      %v4687 = vpop.f32.mrb[0].mxu0
      %v4688 = vadd.f32 %v4604, %v4687
      %v4689 = vpop.f32.mrb[0].mxu0
      %4690 = vmatprep.mubr.f32.mxu0 0.0
      %4691 = vmatmul.mubr.f32.gmra.mrb[0].mxu0 %v4579
      %v4692 = vpop.f32.mrb[0].mxu0
      %v4693 = vadd.f32 %v4604, %v4692
      %v4694 = vpop.f32.mrb[0].mxu0
      %4695 = vmatprep.mubr.f32.mxu0 0.0
      %4696 = vmatmul.mubr.f32.gmra.mrb[0].mxu0 %v4580
      %v4697 = vpop.f32.mrb[0].mxu0
      %v4698 = vadd.f32 %v4604, %v4697
      %v4699 = vpop.f32.mrb[0].mxu0
      %4700 = vmatprep.mubr.f32.mxu0 0.0
      %4701 = vmatmul.mubr.f32.gmra.mrb[0].mxu0 %v4581
      %v4702 = vpop.f32.mrb[0].mxu0
      %v4703 = vadd.f32 %v4604, %v4702
      %v4704 = vpop.f32.mrb[0].mxu0
      %4705 = vmatprep.mubr.f32.mxu0 0.0
      %4706 = vmatmul.mubr.f32.gmra.mrb[0].mxu0 %v4582
      %v4707 = vpop.f32.mrb[0].mxu0
      %v4708 = vadd.f32 %v4604, %v4707
      %v4709 = vpop.f32.mrb[0].mxu0
      %4710 = vdwg.mxu0
      %v4711 = vmax.f32 %v4673, 0.0
      %v4712 = vmax.f32 %v4678, 0.0
      %v4713 = vmax.f32 %v4683, 0.0
      %v4714 = vmax.f32 %v4688, 0.0
      %v4715 = vmax.f32 %v4693, 0.0
      %v4716 = vmax.f32 %v4698, 0.0
      %v4717 = vmax.f32 %v4703, 0.0
      %v4718 = vmax.f32 %v4708, 0.0
      %v4719 = vand.u32 2147483647, %v4673
      %v4720 = vand.u32 2147483647, %v4678
      %v4721 = vand.u32 2147483647, %v4683
      %v4722 = vand.u32 2147483647, %v4688
      %v4723 = vand.u32 2147483647, %v4693
      %v4724 = vand.u32 2147483647, %v4698
      %v4725 = vand.u32 2147483647, %v4703
      %v4726 = vand.u32 2147483647, %v4708
      %v4727 = vsub.f32 0.0, %v4719
      %v4728 = vsub.f32 0.0, %v4720
      %v4729 = vsub.f32 0.0, %v4721
      %v4730 = vsub.f32 0.0, %v4722
      %v4731 = vsub.f32 0.0, %v4723
      %v4732 = vsub.f32 0.0, %v4724
      %v4733 = vsub.f32 0.0, %v4725
      %v4734 = vsub.f32 0.0, %v4726
      %v4735 = vmul.f32 %v4727, 1.442695
      %v4736 = vpow.pop %v4735
      %v4737 = vmul.f32 %v4728, 1.442695
      %v4738 = vpow.pop %v4737
      %v4739 = vmul.f32 %v4729, 1.442695
      %v4740 = vpow.pop %v4739
      %v4741 = vmul.f32 %v4730, 1.442695
      %v4742 = vpow.pop %v4741
      %v4743 = vmul.f32 %v4731, 1.442695
      %v4744 = vpow.pop %v4743
      %v4745 = vmul.f32 %v4732, 1.442695
      %v4746 = vpow.pop %v4745
      %v4747 = vmul.f32 %v4733, 1.442695
      %v4748 = vpow.pop %v4747
      %v4749 = vmul.f32 %v4734, 1.442695
      %v4750 = vpow.pop %v4749
      %v4751 = vadd.f32 %v4736, 1.0
      %v4752 = vadd.f32 %v4738, 1.0
      %v4753 = vadd.f32 %v4740, 1.0
      %v4754 = vadd.f32 %v4742, 1.0
      %v4755 = vadd.f32 %v4744, 1.0
      %v4756 = vadd.f32 %v4746, 1.0
      %v4757 = vadd.f32 %v4748, 1.0
      %v4758 = vadd.f32 %v4750, 1.0
      %v4759 = vlog2.pop %v4751
      %v4760 = vmul.f32 %v4759, 0.6931472
      %v4761 = vlog2.pop %v4752
      %v4762 = vmul.f32 %v4761, 0.6931472
      %v4763 = vlog2.pop %v4753
      %v4764 = vmul.f32 %v4763, 0.6931472
      %v4765 = vlog2.pop %v4754
      %v4766 = vmul.f32 %v4765, 0.6931472
      %v4767 = vlog2.pop %v4755
      %v4768 = vmul.f32 %v4767, 0.6931472
      %v4769 = vlog2.pop %v4756
      %v4770 = vmul.f32 %v4769, 0.6931472
      %v4771 = vlog2.pop %v4757
      %v4772 = vmul.f32 %v4771, 0.6931472
      %v4773 = vlog2.pop %v4758
      %v4774 = vmul.f32 %v4773, 0.6931472
      %v4775 = vadd.f32 %v4711, %v4760
      %v4776 = vadd.f32 %v4712, %v4762
      %v4777 = vadd.f32 %v4713, %v4764
      %v4778 = vadd.f32 %v4714, %v4766
      %v4779 = vadd.f32 %v4715, %v4768
      %v4780 = vadd.f32 %v4716, %v4770
      %v4781 = vadd.f32 %v4717, %v4772
      %v4782 = vadd.f32 %v4718, %v4774
      %v4783 = vsub.f32 %v4775, 0.6931472
      %v4784 = vsub.f32 %v4776, 0.6931472
      %v4785 = vsub.f32 %v4777, 0.6931472
      %v4786 = vsub.f32 %v4778, 0.6931472
      %v4787 = vsub.f32 %v4779, 0.6931472
      %v4788 = vsub.f32 %v4780, 0.6931472
      %v4789 = vsub.f32 %v4781, 0.6931472
      %v4790 = vsub.f32 %v4782, 0.6931472
      %4791 = vst [vmem:[%s542] sm:$0xff] %v4783
      %4792 = vst [vmem:[%s542 + $0x8] sm:$0xff] %v4784
      %4793 = vst [vmem:[%s542 + $0x10] sm:$0xff] %v4785
      %4794 = vst [vmem:[%s542 + $0x18] sm:$0xff] %v4786
      %4795 = vst [vmem:[%s542 + $0x20] sm:$0xff] %v4787
      %4796 = vst [vmem:[%s542 + $0x28] sm:$0xff] %v4788
      %4797 = vst [vmem:[%s542 + $0x30] sm:$0xff] %v4789
      %4798 = vst [vmem:[%s542 + $0x38] sm:$0xff] %v4790
      %p4799 = scmp.lt.s32.totalorder %s24, 1
      %s4800 = scalar_select %p4799, %s24, 1
      %s4801 = smul.addr %s4800, 8
      %s4802 = smul.addr %s4801, 8
      %s4803 = scalar_lea.vmem %s13, %s4802
      // Predicated region
      $region73: #{dipole_interaction.1} parent=71 // pred_check
        %p4804 = pneg %p350
      $region74: #{dipole_interaction.1} parent=71 // pred_check_branch
        %4806 = sbr.rel (%p4804) target = $region76
      $region75: #{dipole_interaction.1} parent=71 // pred_region
        _
      $region76: #{dipole_interaction.1} parent=71 // pred_fallthru
        _
    $region72: #{dipole_interaction.1} parent=5 // pred_fallthru
      _
    %p4807 = scmp.le.s32.totalorder 2, %s19
    // Predicated region
    $region77: #{dipole_interaction.1} parent=5 // pred_check
      %p4808 = pneg %p4807
    $region78: #{dipole_interaction.1} parent=5 // pred_check_branch
      %4810 = sbr.rel (%p4808) target = $region80
    $region79: #{dipole_interaction.1} parent=5 // pred_region
      %s4811 = ssub.s32 %s19, 2
      // Predicated region
      $region81: #{dipole_interaction.1} parent=79 // pred_check
        %p4812 = pneg %p356
      $region82: #{dipole_interaction.1} parent=79 // pred_check_branch
        %4814 = sbr.rel (%p4812) target = $region84
      $region83: #{dipole_interaction.1} parent=79 // pred_region
        %p4815 = scmp.lt.s32.totalorder %s25, 1
        %s4816 = scalar_select %p4815, %s25, 1
        %s4817 = smul.addr %s4816, 8
        %s4818 = smul.addr %s4817, 8
        %s4819 = scalar_lea.vmem %s13, %s4818
      $region84: #{dipole_interaction.1} parent=79 // pred_fallthru
        _
    $region80: #{dipole_interaction.1} parent=5 // pred_fallthru
      _
  $region6: #{dipole_interaction.1} parent=0 // loop_footer
    %s23 = sadd.s32 1, %s19
  $region7: #{dipole_interaction.1} parent=0 // loop_footer_branch
    %18 = sbr.rel target = $region3
  $region8: #{dipole_interaction.1} parent=0 // loop_exit
    _

</llo_original>
